<compile_context>
chip_gen: v6e
topology: v6e:2x2x1
jax: 0.10.0
libtpu: 0.0.40
codegen_flags: <defaults>
</compile_context>

<pallas_src>
import functools

import jax
import jax.numpy as jnp
from jax import lax
from jax.experimental import pallas as pl
from jax.experimental.pallas import tpu as pltpu


def _vmem_spec():
    return pl.BlockSpec(memory_space=pltpu.MemorySpace.VMEM)


# ------------------- fused attentional-block kernel (kernel A) ------------------

def _fused_block_kernel(x_ref, wqkv_ref, wp1_ref, wp2_ref, wp3_ref,
                        pool_ref, gamma_ref, beta_ref, out_ref,
                        *, n_heads, inter_dim, n_rec):
    """Whole recurrent attentional block, fully VMEM resident.

    x_ref     : (N, C)       channels-last features, N = batch * sizeX * sizeY
    wqkv_ref  : (C, 3*H*I)   [Q_0..Q_{H-1} | K_0.. | V_0..]; 1/I folded into V
    wp1_ref   : (H*I, U)     finalParallelLayer weights (no biases)
    wp2_ref   : (U, U)
    wp3_ref   : (U, C)
    pool_ref  : (N, N)       block-averaging matrix: 1/F within a batch, 0 across
    gamma_ref : (N, 1)       LayerNorm(F) gamma tiled per row (depends on f only)
    beta_ref  : (N, 1)
    out_ref   : (N, C)
    """
    y = x_ref[...]
    wqkv = wqkv_ref[...]
    wp1 = wp1_ref[...]
    wp2 = wp2_ref[...]
    wp3 = wp3_ref[...]
    pool = pool_ref[...]
    gamma = gamma_ref[...]
    beta = beta_ref[...]
    hi = n_heads * inter_dim

    for _ in range(n_rec):  # nbrRecurrentSharedLayers (static, =1 here)
        # One lane-dense projection for all heads and all of Q/K/V.
        qkv = jnp.dot(y, wqkv, preferred_element_type=jnp.float32)      # (N, 3*H*I)

        # Per-head attention, fed straight into the first MLP matmul:
        # sum_h att_h @ Wp1[h*I:(h+1)*I]  ==  concat_over_heads @ Wp1.
        h1 = None
        for h in range(n_heads):
            q = qkv[:, h * inter_dim:(h + 1) * inter_dim]               # (N, I)
            k = qkv[:, hi + h * inter_dim: hi + (h + 1) * inter_dim]    # (N, I)
            v = qkv[:, 2 * hi + h * inter_dim: 2 * hi + (h + 1) * inter_dim]
            # scores over ALL batch*feature rows jointly, softmax over dim=1,
            # no 1/sqrt(d) scaling (as in applyMHDPA_batched).
            s = lax.dot_general(q, k, (((1,), (1,)), ((), ())),
                                preferred_element_type=jnp.float32)     # (N, N)
            s = s - jnp.max(s, axis=1, keepdims=True)
            e = jnp.exp(s)
            w = e * pl.reciprocal(jnp.sum(e, axis=1, keepdims=True), approx=True)
            att = jnp.dot(w, v, preferred_element_type=jnp.float32)     # (N, I)
            part = jnp.dot(att, wp1[h * inter_dim:(h + 1) * inter_dim, :],
                           preferred_element_type=jnp.float32)          # (N, U)
            h1 = part if h1 is None else h1 + part

        # finalParallelLayer: Linear -> ReLU -> Linear -> ReLU -> Linear (no bias)
        h1 = jnp.maximum(h1, 0.0)
        h2 = jnp.maximum(jnp.dot(h1, wp2, preferred_element_type=jnp.float32), 0.0)
        upd = jnp.dot(h2, wp3, preferred_element_type=jnp.float32)      # (N, C)

        # residual + LayerNorm over the spatial axis F (per batch & channel),
        # done with block-averaging matmuls -> no in-kernel reshape/transpose.
        r = upd + y
        mean = jnp.dot(pool, r, preferred_element_type=jnp.float32)     # (N, C)
        diff = r - mean
        var = jnp.dot(pool, diff * diff, preferred_element_type=jnp.float32)
        y = diff * lax.rsqrt(var + 1e-5) * gamma + beta

    out_ref[...] = y


def fused_attention_block(x_flat, wqkv, wp1, wp2, wp3, pool, gamma_rows, beta_rows,
                          *, n_heads, inter_dim, n_rec):
    N, C = x_flat.shape
    kern = functools.partial(_fused_block_kernel, n_heads=n_heads,
                             inter_dim=inter_dim, n_rec=n_rec)
    return pl.pallas_call(
        kern,
        out_shape=jax.ShapeDtypeStruct((N, C), jnp.float32),
        in_specs=[_vmem_spec() for _ in range(8)],
        out_specs=_vmem_spec(),
    )(x_flat, wqkv, wp1, wp2, wp3, pool, gamma_rows, beta_rows)


# ---------------------------- finalLayer (kernel B) ----------------------------

def _final_layer_kernel(x_ref, w1_ref, w2_ref, out_ref):
    # finalLayer: Linear -> ReLU -> Linear (no biases)
    h = jnp.maximum(jnp.dot(x_ref[...], w1_ref[...],
                            preferred_element_type=jnp.float32), 0.0)
    out_ref[...] = jnp.dot(h, w2_ref[...], preferred_element_type=jnp.float32)


def final_layer(x, w1, w2):
    B = x.shape[0]
    O = w2.shape[1]
    return pl.pallas_call(
        _final_layer_kernel,
        out_shape=jax.ShapeDtypeStruct((B, O), jnp.float32),
        in_specs=[_vmem_spec(), _vmem_spec(), _vmem_spec()],
        out_specs=_vmem_spec(),
    )(x, w1, w2)


# ------------------------------- glue (JAX) ------------------------------------

def mhdpa_relation_network_forward(fused, x, qst, cfg):
    B, D, X, Y = x.shape
    F = X * Y
    Q = qst.shape[1]

    # addXYfeatures + question broadcast, built directly channels-last (N, C).
    xs = -1.0 + (jnp.arange(X, dtype=jnp.float32) + 0.5) * (2.0 / X)
    ys = -1.0 + (jnp.arange(Y, dtype=jnp.float32) + 0.5) * (2.0 / Y)
    cx = jnp.broadcast_to(xs[:, None], (X, Y)).reshape(F)   # varies along X
    cy = jnp.broadcast_to(ys[None, :], (X, Y)).reshape(F)   # varies along Y
    coords = jnp.stack([cx, cy], axis=-1)                   # (F, 2)
    feat = jnp.transpose(x, (0, 2, 3, 1)).reshape(B, F, D)  # (B, F, D)
    x_flat = jnp.concatenate(
        [feat,
         jnp.broadcast_to(coords[None], (B, F, 2)),
         jnp.broadcast_to(qst[:, None, :], (B, F, Q))],
        axis=-1).reshape(B * F, D + 2 + Q)                  # (N, C)
    N, C = x_flat.shape

    # Block-averaging matrix for LayerNorm over F, plus per-row affine params.
    row_b = jnp.arange(N, dtype=jnp.int32) // F
    pool = (row_b[:, None] == row_b[None, :]).astype(jnp.float32) / float(F)
    gamma_rows = jnp.tile(fused["ln_gamma"], (B,))[:, None]  # (N, 1)
    beta_rows = jnp.tile(fused["ln_beta"], (B,))[:, None]    # (N, 1)

    y = fused_attention_block(
        x_flat, fused["Wqkv"], fused["Wp1"], fused["Wp2"], fused["Wp3"],
        pool, gamma_rows, beta_rows,
        n_heads=cfg["nbrModule"], inter_dim=cfg["interactions_dim"],
        n_rec=cfg["nbrRecurrentSharedLayers"])               # (N, C)

    # withMaxPool=False path.  torch flattens (B, C, F) -> (B, C*F); we use the
    # natural row-major (B, F*C) flatten of the (N, C) activation together with
    # the matching one-time permutation of Wf1 (identical contraction).
    inter = y.reshape(B, F * C)
    # dropout_prob == 0.0 -> no dropout applied
    return final_layer(inter, fused["Wf1_perm"], fused["Wf2"])


# -------------------------- parameters (torch layout) ---------------------------

def init_params(key, cfg):
    D, Q = cfg["depth_dim"], cfg["qst_dim"]
    C = D + 2 + Q
    H = cfg["nbrModule"]
    I = cfg["interactions_dim"]
    U = cfg["units_per_MLP_layer"]
    F = cfg["spatialDim"] * cfg["spatialDim"]
    O = cfg["output_dim"]
    ks = jax.random.split(key, 8)
    s = 0.1
    return {
        # per-head Q/K/V projections (Linear without bias), stacked over heads
        "Wq": jax.random.normal(ks[0], (H, C, I), jnp.float32) * s,
        "Wk": jax.random.normal(ks[1], (H, C, I), jnp.float32) * s,
        "Wv": jax.random.normal(ks[2], (H, C, I), jnp.float32) * s,
        # finalParallelLayer
        "Wp1": jax.random.normal(ks[3], (H * I, U), jnp.float32) * s,
        "Wp2": jax.random.normal(ks[4], (U, U), jnp.float32) * s,
        "Wp3": jax.random.normal(ks[5], (U, C), jnp.float32) * s,
        # AttentionalBlockFinalLayer = LayerNorm(F): gamma=1, beta=0
        "ln_gamma": jnp.ones((F,), jnp.float32),
        "ln_beta": jnp.zeros((F,), jnp.float32),
        # finalLayer (row index = c*F + f, matching torch's (B, C*F) flatten)
        "Wf1": jax.random.normal(ks[6], (C * F, U), jnp.float32) * s,
        "Wf2": jax.random.normal(ks[7], (U, O), jnp.float32) * s,
    }


def fuse_params(params, cfg):
    """One-time weight transform for the fused kernels."""
    H, C, I = params["Wq"].shape
    F = cfg["spatialDim"] * cfg["spatialDim"]
    Uf = params["Wf1"].shape[1]
    wq = jnp.transpose(params["Wq"], (1, 0, 2)).reshape(C, H * I)
    wk = jnp.transpose(params["Wk"], (1, 0, 2)).reshape(C, H * I)
    wv = jnp.transpose(params["Wv"], (1, 0, 2)).reshape(C, H * I) * (1.0 / I)
    # Wf1_perm[f*C + c, :] = Wf1[c*F + f, :]
    wf1_perm = jnp.transpose(params["Wf1"].reshape(C, F, Uf), (1, 0, 2)).reshape(F * C, Uf)
    return {
        "Wqkv": jnp.concatenate([wq, wk, wv], axis=1),   # (C, 3*H*I)
        "Wp1": params["Wp1"], "Wp2": params["Wp2"], "Wp3": params["Wp3"],
        "ln_gamma": params["ln_gamma"], "ln_beta": params["ln_beta"],
        "Wf1_perm": wf1_perm, "Wf2": params["Wf2"],
    }


# ------------------------ pure-JAX reference (torch order) ----------------------

def reference_forward(params, x, qst, cfg):
    B, D, X, Y = x.shape
    F = X * Y
    I = cfg["interactions_dim"]
    xs = -1.0 + (jnp.arange(X, dtype=jnp.float32) + 0.5) * (2.0 / X)
    ys = -1.0 + (jnp.arange(Y, dtype=jnp.float32) + 0.5) * (2.0 / Y)
    fxy = jnp.broadcast_to(xs[:, None], (X, Y))
    fyx = jnp.broadcast_to(ys[None, :], (X, Y))
    coords = jnp.broadcast_to(jnp.stack([fxy, fyx], 0)[None], (B, 2, X, Y))
    augx = jnp.concatenate([x, coords], axis=1).reshape(B, D + 2, F)
    qst_rep = jnp.broadcast_to(qst[:, :, None], (B, qst.shape[1], F))
    out = jnp.concatenate([augx, qst_rep], axis=1)           # (B, C, F)
    C = out.shape[1]
    for _ in range(cfg["nbrRecurrentSharedLayers"]):
        flat = jnp.transpose(out, (0, 2, 1)).reshape(B * F, C)
        heads = []
        for h in range(cfg["nbrModule"]):
            q = flat @ params["Wq"][h]
            k = flat @ params["Wk"][h]
            v = flat @ params["Wv"][h]
            w = jax.nn.softmax(q @ k.T, axis=1)
            heads.append((w @ v) / I)
        conc = jnp.concatenate(heads, axis=1)                # (N, H*I)
        h1 = jax.nn.relu(conc @ params["Wp1"])
        h2 = jax.nn.relu(h1 @ params["Wp2"])
        upd = jnp.transpose((h2 @ params["Wp3"]).reshape(B, F, C), (0, 2, 1))
        y = upd + out
        mean = jnp.mean(y, axis=-1, keepdims=True)
        var = jnp.mean((y - mean) ** 2, axis=-1, keepdims=True)
        out = ((y - mean) / jnp.sqrt(var + 1e-5)
               * params["ln_gamma"][None, None, :] + params["ln_beta"][None, None, :])
    inter = out.reshape(B, C * F)
    return jax.nn.relu(inter @ params["Wf1"]) @ params["Wf2"]


if __name__ == "__main__":
    cfg = dict(
        output_dim=32,
        depth_dim=24,
        qst_dim=11,
        nbrModule=3,
        nbrRecurrentSharedLayers=1,
        spatialDim=7,
        interactions_dim=32,        # kwargs['interactions_dim']
        units_per_MLP_layer=64,     # kwargs['units_per_MLP_layer']
    )
    key = jax.random.PRNGKey(0)
    kx, kq, kp = jax.random.split(key, 3)

    B = 2
    x = jax.random.normal(
        kx, (B, cfg["depth_dim"], cfg["spatialDim"], cfg["spatialDim"]), jnp.float32)
    qst = jax.random.normal(kq, (B, cfg["qst_dim"]), jnp.float32)

    params = init_params(kp, cfg)
    fused = fuse_params(params, cfg)

    fwd = jax.jit(functools.partial(mhdpa_relation_network_forward, cfg=cfg))
    out = jax.block_until_ready(fwd(fused, x, qst))
    assert out.shape == (B, cfg["output_dim"]), out.shape

    # sanity-check the fused Pallas path against a straightforward pure-JAX ref
    ref = reference_forward(params, x, qst, cfg)
    rel_err = float(jnp.max(jnp.abs(out - ref)) / (jnp.max(jnp.abs(ref)) + 1e-6))
    assert rel_err < 1e-1, rel_err

    print("KERNEL_OK")
</pallas_src>

<mosaic_0001>
module attributes {stable_mosaic.version = 11 : i64} {
  func.func @_fused_block_kernel(%arg0: memref<98x37xf32, #tpu.memory_space<vmem>>, %arg1: memref<37x288xf32, #tpu.memory_space<vmem>>, %arg2: memref<96x64xf32, #tpu.memory_space<vmem>>, %arg3: memref<64x64xf32, #tpu.memory_space<vmem>>, %arg4: memref<64x37xf32, #tpu.memory_space<vmem>>, %arg5: memref<98x98xf32, #tpu.memory_space<vmem>>, %arg6: memref<98x1xf32, #tpu.memory_space<vmem>>, %arg7: memref<98x1xf32, #tpu.memory_space<vmem>>, %arg8: memref<98x37xf32, #tpu.memory_space<vmem>>) attributes {dimension_semantics = [], scalar_prefetch = 0 : i64, scratch_operands = 0 : i64, tpu.core_type = #tpu.core_type<tc>} {
    %c0 = arith.constant 0 : index
    %c0_0 = arith.constant 0 : index
    %0 = vector.load %arg0[%c0, %c0_0] : memref<98x37xf32, #tpu.memory_space<vmem>>, vector<98x37xf32>
    %c0_1 = arith.constant 0 : index
    %c0_2 = arith.constant 0 : index
    %1 = vector.load %arg1[%c0_1, %c0_2] : memref<37x288xf32, #tpu.memory_space<vmem>>, vector<37x288xf32>
    %c0_3 = arith.constant 0 : index
    %c0_4 = arith.constant 0 : index
    %2 = vector.load %arg2[%c0_3, %c0_4] : memref<96x64xf32, #tpu.memory_space<vmem>>, vector<96x64xf32>
    %c0_5 = arith.constant 0 : index
    %c0_6 = arith.constant 0 : index
    %3 = vector.load %arg3[%c0_5, %c0_6] : memref<64x64xf32, #tpu.memory_space<vmem>>, vector<64x64xf32>
    %c0_7 = arith.constant 0 : index
    %c0_8 = arith.constant 0 : index
    %4 = vector.load %arg4[%c0_7, %c0_8] : memref<64x37xf32, #tpu.memory_space<vmem>>, vector<64x37xf32>
    %c0_9 = arith.constant 0 : index
    %c0_10 = arith.constant 0 : index
    %5 = vector.load %arg5[%c0_9, %c0_10] : memref<98x98xf32, #tpu.memory_space<vmem>>, vector<98x98xf32>
    %c0_11 = arith.constant 0 : index
    %c0_12 = arith.constant 0 : index
    %6 = vector.load %arg6[%c0_11, %c0_12] : memref<98x1xf32, #tpu.memory_space<vmem>>, vector<98x1xf32>
    %c0_13 = arith.constant 0 : index
    %c0_14 = arith.constant 0 : index
    %7 = vector.load %arg7[%c0_13, %c0_14] : memref<98x1xf32, #tpu.memory_space<vmem>>, vector<98x1xf32>
    %cst = arith.constant dense<0.000000e+00> : vector<98x288xf32>
    %8 = tpu.matmul %0, %1, %cst {dimension_numbers = #tpu.dot_dimension_numbers<[1], [0], [0], [1], [0, 0, 1, 1], [], []>} : vector<98x37xf32>, vector<37x288xf32>, vector<98x288xf32> -> vector<98x288xf32>
    %9 = vector.extract_strided_slice %8 {offsets = [0, 0], sizes = [98, 32], strides = [1, 1]} : vector<98x288xf32> to vector<98x32xf32>
    %10 = vector.extract_strided_slice %8 {offsets = [0, 96], sizes = [98, 32], strides = [1, 1]} : vector<98x288xf32> to vector<98x32xf32>
    %11 = vector.extract_strided_slice %8 {offsets = [0, 192], sizes = [98, 32], strides = [1, 1]} : vector<98x288xf32> to vector<98x32xf32>
    %cst_15 = arith.constant dense<0.000000e+00> : vector<98x98xf32>
    %12 = tpu.matmul %9, %10, %cst_15 {dimension_numbers = #tpu.dot_dimension_numbers<[1], [1], [0], [0], [0, 0, 1, 0], [], []>} : vector<98x32xf32>, vector<98x32xf32>, vector<98x98xf32> -> vector<98x98xf32>
    %cst_16 = arith.constant dense<0xFF800000> : vector<98xf32>
    %13 = vector.multi_reduction <maximumf>, %12, %cst_16 [1] : vector<98x98xf32> to vector<98xf32>
    %14 = vector.shape_cast %13 : vector<98xf32> to vector<98x1xf32>
    %15 = vector.broadcast %14 : vector<98x1xf32> to vector<98x98xf32>
    %16 = arith.subf %12, %15 : vector<98x98xf32>
    %17 = math.exp %16 : vector<98x98xf32>
    %cst_17 = arith.constant dense<0.000000e+00> : vector<98xf32>
    %18 = vector.multi_reduction <add>, %17, %cst_17 [1] : vector<98x98xf32> to vector<98xf32>
    %19 = vector.shape_cast %18 : vector<98xf32> to vector<98x1xf32>
    %20 = tpu.reciprocal %19 {approx = true} : vector<98x1xf32> -> vector<98x1xf32>
    %21 = vector.broadcast %20 : vector<98x1xf32> to vector<98x98xf32>
    %22 = arith.mulf %17, %21 : vector<98x98xf32>
    %cst_18 = arith.constant dense<0.000000e+00> : vector<98x32xf32>
    %23 = tpu.matmul %22, %11, %cst_18 {dimension_numbers = #tpu.dot_dimension_numbers<[1], [0], [0], [1], [0, 0, 1, 1], [], []>} : vector<98x98xf32>, vector<98x32xf32>, vector<98x32xf32> -> vector<98x32xf32>
    %24 = vector.extract_strided_slice %2 {offsets = [0, 0], sizes = [32, 64], strides = [1, 1]} : vector<96x64xf32> to vector<32x64xf32>
    %cst_19 = arith.constant dense<0.000000e+00> : vector<98x64xf32>
    %25 = tpu.matmul %23, %24, %cst_19 {dimension_numbers = #tpu.dot_dimension_numbers<[1], [0], [0], [1], [0, 0, 1, 1], [], []>} : vector<98x32xf32>, vector<32x64xf32>, vector<98x64xf32> -> vector<98x64xf32>
    %26 = vector.extract_strided_slice %8 {offsets = [0, 32], sizes = [98, 32], strides = [1, 1]} : vector<98x288xf32> to vector<98x32xf32>
    %27 = vector.extract_strided_slice %8 {offsets = [0, 128], sizes = [98, 32], strides = [1, 1]} : vector<98x288xf32> to vector<98x32xf32>
    %28 = vector.extract_strided_slice %8 {offsets = [0, 224], sizes = [98, 32], strides = [1, 1]} : vector<98x288xf32> to vector<98x32xf32>
    %cst_20 = arith.constant dense<0.000000e+00> : vector<98x98xf32>
    %29 = tpu.matmul %26, %27, %cst_20 {dimension_numbers = #tpu.dot_dimension_numbers<[1], [1], [0], [0], [0, 0, 1, 0], [], []>} : vector<98x32xf32>, vector<98x32xf32>, vector<98x98xf32> -> vector<98x98xf32>
    %cst_21 = arith.constant dense<0xFF800000> : vector<98xf32>
    %30 = vector.multi_reduction <maximumf>, %29, %cst_21 [1] : vector<98x98xf32> to vector<98xf32>
    %31 = vector.shape_cast %30 : vector<98xf32> to vector<98x1xf32>
    %32 = vector.broadcast %31 : vector<98x1xf32> to vector<98x98xf32>
    %33 = arith.subf %29, %32 : vector<98x98xf32>
    %34 = math.exp %33 : vector<98x98xf32>
    %cst_22 = arith.constant dense<0.000000e+00> : vector<98xf32>
    %35 = vector.multi_reduction <add>, %34, %cst_22 [1] : vector<98x98xf32> to vector<98xf32>
    %36 = vector.shape_cast %35 : vector<98xf32> to vector<98x1xf32>
    %37 = tpu.reciprocal %36 {approx = true} : vector<98x1xf32> -> vector<98x1xf32>
    %38 = vector.broadcast %37 : vector<98x1xf32> to vector<98x98xf32>
    %39 = arith.mulf %34, %38 : vector<98x98xf32>
    %cst_23 = arith.constant dense<0.000000e+00> : vector<98x32xf32>
    %40 = tpu.matmul %39, %28, %cst_23 {dimension_numbers = #tpu.dot_dimension_numbers<[1], [0], [0], [1], [0, 0, 1, 1], [], []>} : vector<98x98xf32>, vector<98x32xf32>, vector<98x32xf32> -> vector<98x32xf32>
    %41 = vector.extract_strided_slice %2 {offsets = [32, 0], sizes = [32, 64], strides = [1, 1]} : vector<96x64xf32> to vector<32x64xf32>
    %cst_24 = arith.constant dense<0.000000e+00> : vector<98x64xf32>
    %42 = tpu.matmul %40, %41, %cst_24 {dimension_numbers = #tpu.dot_dimension_numbers<[1], [0], [0], [1], [0, 0, 1, 1], [], []>} : vector<98x32xf32>, vector<32x64xf32>, vector<98x64xf32> -> vector<98x64xf32>
    %43 = arith.addf %25, %42 : vector<98x64xf32>
    %44 = vector.extract_strided_slice %8 {offsets = [0, 64], sizes = [98, 32], strides = [1, 1]} : vector<98x288xf32> to vector<98x32xf32>
    %45 = vector.extract_strided_slice %8 {offsets = [0, 160], sizes = [98, 32], strides = [1, 1]} : vector<98x288xf32> to vector<98x32xf32>
    %46 = vector.extract_strided_slice %8 {offsets = [0, 256], sizes = [98, 32], strides = [1, 1]} : vector<98x288xf32> to vector<98x32xf32>
    %cst_25 = arith.constant dense<0.000000e+00> : vector<98x98xf32>
    %47 = tpu.matmul %44, %45, %cst_25 {dimension_numbers = #tpu.dot_dimension_numbers<[1], [1], [0], [0], [0, 0, 1, 0], [], []>} : vector<98x32xf32>, vector<98x32xf32>, vector<98x98xf32> -> vector<98x98xf32>
    %cst_26 = arith.constant dense<0xFF800000> : vector<98xf32>
    %48 = vector.multi_reduction <maximumf>, %47, %cst_26 [1] : vector<98x98xf32> to vector<98xf32>
    %49 = vector.shape_cast %48 : vector<98xf32> to vector<98x1xf32>
    %50 = vector.broadcast %49 : vector<98x1xf32> to vector<98x98xf32>
    %51 = arith.subf %47, %50 : vector<98x98xf32>
    %52 = math.exp %51 : vector<98x98xf32>
    %cst_27 = arith.constant dense<0.000000e+00> : vector<98xf32>
    %53 = vector.multi_reduction <add>, %52, %cst_27 [1] : vector<98x98xf32> to vector<98xf32>
    %54 = vector.shape_cast %53 : vector<98xf32> to vector<98x1xf32>
    %55 = tpu.reciprocal %54 {approx = true} : vector<98x1xf32> -> vector<98x1xf32>
    %56 = vector.broadcast %55 : vector<98x1xf32> to vector<98x98xf32>
    %57 = arith.mulf %52, %56 : vector<98x98xf32>
    %cst_28 = arith.constant dense<0.000000e+00> : vector<98x32xf32>
    %58 = tpu.matmul %57, %46, %cst_28 {dimension_numbers = #tpu.dot_dimension_numbers<[1], [0], [0], [1], [0, 0, 1, 1], [], []>} : vector<98x98xf32>, vector<98x32xf32>, vector<98x32xf32> -> vector<98x32xf32>
    %59 = vector.extract_strided_slice %2 {offsets = [64, 0], sizes = [32, 64], strides = [1, 1]} : vector<96x64xf32> to vector<32x64xf32>
    %cst_29 = arith.constant dense<0.000000e+00> : vector<98x64xf32>
    %60 = tpu.matmul %58, %59, %cst_29 {dimension_numbers = #tpu.dot_dimension_numbers<[1], [0], [0], [1], [0, 0, 1, 1], [], []>} : vector<98x32xf32>, vector<32x64xf32>, vector<98x64xf32> -> vector<98x64xf32>
    %61 = arith.addf %43, %60 : vector<98x64xf32>
    %cst_30 = arith.constant 0.000000e+00 : f32
    %62 = vector.broadcast %cst_30 : f32 to vector<98x64xf32>
    %63 = arith.maximumf %61, %62 : vector<98x64xf32>
    %cst_31 = arith.constant dense<0.000000e+00> : vector<98x64xf32>
    %64 = tpu.matmul %63, %3, %cst_31 {dimension_numbers = #tpu.dot_dimension_numbers<[1], [0], [0], [1], [0, 0, 1, 1], [], []>} : vector<98x64xf32>, vector<64x64xf32>, vector<98x64xf32> -> vector<98x64xf32>
    %cst_32 = arith.constant 0.000000e+00 : f32
    %65 = vector.broadcast %cst_32 : f32 to vector<98x64xf32>
    %66 = arith.maximumf %64, %65 : vector<98x64xf32>
    %cst_33 = arith.constant dense<0.000000e+00> : vector<98x37xf32>
    %67 = tpu.matmul %66, %4, %cst_33 {dimension_numbers = #tpu.dot_dimension_numbers<[1], [0], [0], [1], [0, 0, 1, 1], [], []>} : vector<98x64xf32>, vector<64x37xf32>, vector<98x37xf32> -> vector<98x37xf32>
    %68 = arith.addf %67, %0 : vector<98x37xf32>
    %cst_34 = arith.constant dense<0.000000e+00> : vector<98x37xf32>
    %69 = tpu.matmul %5, %68, %cst_34 {dimension_numbers = #tpu.dot_dimension_numbers<[1], [0], [0], [1], [0, 0, 1, 1], [], []>} : vector<98x98xf32>, vector<98x37xf32>, vector<98x37xf32> -> vector<98x37xf32>
    %70 = arith.subf %68, %69 : vector<98x37xf32>
    %71 = arith.mulf %70, %70 : vector<98x37xf32>
    %cst_35 = arith.constant dense<0.000000e+00> : vector<98x37xf32>
    %72 = tpu.matmul %5, %71, %cst_35 {dimension_numbers = #tpu.dot_dimension_numbers<[1], [0], [0], [1], [0, 0, 1, 1], [], []>} : vector<98x98xf32>, vector<98x37xf32>, vector<98x37xf32> -> vector<98x37xf32>
    %cst_36 = arith.constant 9.99999974E-6 : f32
    %73 = vector.broadcast %cst_36 : f32 to vector<98x37xf32>
    %74 = arith.addf %72, %73 : vector<98x37xf32>
    %75 = math.rsqrt %74 : vector<98x37xf32>
    %76 = arith.mulf %70, %75 : vector<98x37xf32>
    %77 = vector.broadcast %6 : vector<98x1xf32> to vector<98x37xf32>
    %78 = arith.mulf %76, %77 : vector<98x37xf32>
    %79 = vector.broadcast %7 : vector<98x1xf32> to vector<98x37xf32>
    %80 = arith.addf %78, %79 : vector<98x37xf32>
    %c0_37 = arith.constant 0 : index
    %c0_38 = arith.constant 0 : index
    %81 = vector.load %arg8[%c0_37, %c0_38] : memref<98x37xf32, #tpu.memory_space<vmem>>, vector<98x37xf32>
    tpu.vector_store %arg8[%c0_37, %c0_38], %80 {strides = array<i32>} : memref<98x37xf32, #tpu.memory_space<vmem>>, vector<98x37xf32>,
    return
  }
}

module attributes {stable_mosaic.version = 11 : i64} {
  func.func @_final_layer_kernel(%arg0: memref<2x1813xf32, #tpu.memory_space<vmem>>, %arg1: memref<1813x64xf32, #tpu.memory_space<vmem>>, %arg2: memref<64x32xf32, #tpu.memory_space<vmem>>, %arg3: memref<2x32xf32, #tpu.memory_space<vmem>>) attributes {dimension_semantics = [], scalar_prefetch = 0 : i64, scratch_operands = 0 : i64, tpu.core_type = #tpu.core_type<tc>} {
    %c0 = arith.constant 0 : index
    %c0_0 = arith.constant 0 : index
    %0 = vector.load %arg0[%c0, %c0_0] : memref<2x1813xf32, #tpu.memory_space<vmem>>, vector<2x1813xf32>
    %c0_1 = arith.constant 0 : index
    %c0_2 = arith.constant 0 : index
    %1 = vector.load %arg1[%c0_1, %c0_2] : memref<1813x64xf32, #tpu.memory_space<vmem>>, vector<1813x64xf32>
    %cst = arith.constant dense<0.000000e+00> : vector<2x64xf32>
    %2 = tpu.matmul %0, %1, %cst {dimension_numbers = #tpu.dot_dimension_numbers<[1], [0], [0], [1], [0, 0, 1, 1], [], []>} : vector<2x1813xf32>, vector<1813x64xf32>, vector<2x64xf32> -> vector<2x64xf32>
    %cst_3 = arith.constant 0.000000e+00 : f32
    %3 = vector.broadcast %cst_3 : f32 to vector<2x64xf32>
    %4 = arith.maximumf %2, %3 : vector<2x64xf32>
    %c0_4 = arith.constant 0 : index
    %c0_5 = arith.constant 0 : index
    %5 = vector.load %arg2[%c0_4, %c0_5] : memref<64x32xf32, #tpu.memory_space<vmem>>, vector<64x32xf32>
    %cst_6 = arith.constant dense<0.000000e+00> : vector<2x32xf32>
    %6 = tpu.matmul %4, %5, %cst_6 {dimension_numbers = #tpu.dot_dimension_numbers<[1], [0], [0], [1], [0, 0, 1, 1], [], []>} : vector<2x64xf32>, vector<64x32xf32>, vector<2x32xf32> -> vector<2x32xf32>
    %c0_7 = arith.constant 0 : index
    %c0_8 = arith.constant 0 : index
    %7 = vector.load %arg3[%c0_7, %c0_8] : memref<2x32xf32, #tpu.memory_space<vmem>>, vector<2x32xf32>
    tpu.vector_store %arg3[%c0_7, %c0_8], %6 {strides = array<i32>} : memref<2x32xf32, #tpu.memory_space<vmem>>, vector<2x32xf32>,
    return
  }
}

</mosaic_0001>

<llo_original>
// kernel: tile.18
$region0: #{tile.18}
  #allocation0 [shape = 's32[1]{0}', space=sflag, size = 0x4, scoped, tag = 'scoped memory for tile.18']
  %s0 = inlined_call_operand.vmem [shape: f32[49], index: 0, kind: input, shape index: {}]
  %s1 = inlined_call_operand.vmem [shape: f32[2,49], index: 1, kind: output, shape index: {}]
  // Predicated region
  $region2: #{tile.18} parent=0 // pred_check
    _
  $region3: #{tile.18} parent=0 // pred_check_branch
    %3 = sbr.rel (0) target = $region5
  $region4: #{tile.18} parent=0 // pred_region
    _
  $region5: #{tile.18} parent=0 // pred_fallthru
    _
  %v4 = vld [vmem:[%s0] ss:$0 sm:$0xff]
  %5 = vst [vmem:[%s1] sm:$0x3] %v4

// kernel: tile.0
$region0: #{tile.0}
  %s0 = inlined_call_operand.vmem [shape: f32[2,49], index: 0, kind: input, shape index: {}]
  %s1 = inlined_call_operand.vmem [shape: f32[98,1], index: 1, kind: output, shape index: {}]
  $region1: #{tile.0} parent=0
    #allocation0 [shape = 'u8[4096]{0}', space=vmem, size = 0x1000, scoped, tag = 'scoped mem for input reshape']
    %s3 = sshll.u32 1, 2
    %s4 = ssub.s32 %s3, 1
    %v5 = vld [vmem:[%s0] sm:%s4]
    %6 = vst [vmem:[#allocation0] sm:%s4] %v5
    %v7 = vld [vmem:[#allocation0] sm:$0x3]
    %vm8 = vcmask 7168
    %9 = vst.msk [vmem:[%s1] ss:$49 sm:$0x3] %vm8, %v7
    %v10 = vld [vmem:[#allocation0] sm:$0x3]
    %11 = vrot.lane.b32.xlu0 %v10, 127
    %v12 = vpop.permute.xlu0 %11
    %vm13 = vcmask 7168
    %s14 = scalar_lea.vmem %s1, 1
    %15 = vst.msk [vmem:[%s14] ss:$49 sm:$0x3] %vm13, %v12
    %v16 = vld [vmem:[#allocation0] sm:$0x3]
    %17 = vrot.lane.b32.xlu0 %v16, 126
    %v18 = vpop.permute.xlu0 %17
    %vm19 = vcmask 7168
    %s20 = scalar_lea.vmem %s1, 2
    %21 = vst.msk [vmem:[%s20] ss:$49 sm:$0x3] %vm19, %v18
    %v22 = vld [vmem:[#allocation0] sm:$0x3]
    %23 = vrot.lane.b32.xlu0 %v22, 125
    %v24 = vpop.permute.xlu0 %23
    %vm25 = vcmask 7168
    %s26 = scalar_lea.vmem %s1, 3
    %27 = vst.msk [vmem:[%s26] ss:$49 sm:$0x3] %vm25, %v24
    %v28 = vld [vmem:[#allocation0] sm:$0x3]
    %29 = vrot.lane.b32.xlu0 %v28, 124
    %v30 = vpop.permute.xlu0 %29
    %vm31 = vcmask 7168
    %s32 = scalar_lea.vmem %s1, 4
    %33 = vst.msk [vmem:[%s32] ss:$49 sm:$0x3] %vm31, %v30
    %v34 = vld [vmem:[#allocation0] sm:$0x3]
    %35 = vrot.lane.b32.xlu0 %v34, 123
    %v36 = vpop.permute.xlu0 %35
    %vm37 = vcmask 7168
    %s38 = scalar_lea.vmem %s1, 5
    %39 = vst.msk [vmem:[%s38] ss:$49 sm:$0x3] %vm37, %v36
    %v40 = vld [vmem:[#allocation0] sm:$0x3]
    %41 = vrot.lane.b32.xlu0 %v40, 122
    %v42 = vpop.permute.xlu0 %41
    %vm43 = vcmask 7168
    %s44 = scalar_lea.vmem %s1, 6
    %45 = vst.msk [vmem:[%s44] ss:$49 sm:$0x3] %vm43, %v42
    %v46 = vld [vmem:[#allocation0] sm:$0x3]
    %47 = vrot.lane.b32.xlu0 %v46, 121
    %v48 = vpop.permute.xlu0 %47
    %vm49 = vcmask 7168
    %s50 = scalar_lea.vmem %s1, 7
    %51 = vst.msk [vmem:[%s50] ss:$49 sm:$0x3] %vm49, %v48
    %v52 = vld [vmem:[#allocation0] sm:$0x3]
    %53 = vrot.lane.b32.xlu0 %v52, 120
    %v54 = vpop.permute.xlu0 %53
    %vm55 = vcmask 7168
    %s56 = scalar_lea.vmem %s1, 8
    %57 = vst.msk [vmem:[%s56] ss:$49 sm:$0x3] %vm55, %v54
    %v58 = vld [vmem:[#allocation0] sm:$0x3]
    %59 = vrot.lane.b32.xlu0 %v58, 119
    %v60 = vpop.permute.xlu0 %59
    %vm61 = vcmask 7168
    %s62 = scalar_lea.vmem %s1, 9
    %63 = vst.msk [vmem:[%s62] ss:$49 sm:$0x3] %vm61, %v60
    %v64 = vld [vmem:[#allocation0] sm:$0x3]
    %65 = vrot.lane.b32.xlu0 %v64, 118
    %v66 = vpop.permute.xlu0 %65
    %vm67 = vcmask 7168
    %s68 = scalar_lea.vmem %s1, 10
    %69 = vst.msk [vmem:[%s68] ss:$49 sm:$0x3] %vm67, %v66
    %v70 = vld [vmem:[#allocation0] sm:$0x3]
    %71 = vrot.lane.b32.xlu0 %v70, 117
    %v72 = vpop.permute.xlu0 %71
    %vm73 = vcmask 7168
    %s74 = scalar_lea.vmem %s1, 11
    %75 = vst.msk [vmem:[%s74] ss:$49 sm:$0x3] %vm73, %v72
    %v76 = vld [vmem:[#allocation0] sm:$0x3]
    %77 = vrot.lane.b32.xlu0 %v76, 116
    %v78 = vpop.permute.xlu0 %77
    %vm79 = vcmask 7168
    %s80 = scalar_lea.vmem %s1, 12
    %81 = vst.msk [vmem:[%s80] ss:$49 sm:$0x3] %vm79, %v78
    %v82 = vld [vmem:[#allocation0] sm:$0x3]
    %83 = vrot.lane.b32.xlu0 %v82, 115
    %v84 = vpop.permute.xlu0 %83
    %vm85 = vcmask 7168
    %s86 = scalar_lea.vmem %s1, 13
    %87 = vst.msk [vmem:[%s86] ss:$49 sm:$0x3] %vm85, %v84
    %v88 = vld [vmem:[#allocation0] sm:$0x3]
    %89 = vrot.lane.b32.xlu0 %v88, 114
    %v90 = vpop.permute.xlu0 %89
    %vm91 = vcmask 7168
    %s92 = scalar_lea.vmem %s1, 14
    %93 = vst.msk [vmem:[%s92] ss:$49 sm:$0x3] %vm91, %v90
    %s94 = scalar_lea.vmem [#allocation0], 1
    %s95 = smov 3
    %v96 = vld [vmem:[%s94] ss:$-1 sm:%s95]
    %97 = vrot.lane.b32.xlu0 %v96, 113
    %v98 = vpop.permute.xlu0 %97
    %vm99 = vcmask 7168
    %s100 = scalar_lea.vmem %s1, 64
    %101 = vst.msk [vmem:[%s100] ss:$-49 sm:$0x3] %vm99, %v98
    %s102 = scalar_lea.vmem [#allocation0], 1
    %s103 = smov 3
    %v104 = vld [vmem:[%s102] ss:$-1 sm:%s103]
    %105 = vrot.lane.b32.xlu0 %v104, 112
    %v106 = vpop.permute.xlu0 %105
    %vm107 = vcmask 7168
    %s108 = scalar_lea.vmem %s1, 65
    %109 = vst.msk [vmem:[%s108] ss:$-49 sm:$0x3] %vm107, %v106
    %s110 = scalar_lea.vmem [#allocation0], 1
    %s111 = smov 3
    %v112 = vld [vmem:[%s110] ss:$-1 sm:%s111]
    %113 = vrot.lane.b32.xlu0 %v112, 111
    %v114 = vpop.permute.xlu0 %113
    %vm115 = vcmask 7168
    %s116 = scalar_lea.vmem %s1, 66
    %117 = vst.msk [vmem:[%s116] ss:$-49 sm:$0x3] %vm115, %v114
    %s118 = scalar_lea.vmem [#allocation0], 1
    %s119 = smov 3
    %v120 = vld [vmem:[%s118] ss:$-1 sm:%s119]
    %121 = vrot.lane.b32.xlu0 %v120, 110
    %v122 = vpop.permute.xlu0 %121
    %vm123 = vcmask 7168
    %s124 = scalar_lea.vmem %s1, 67
    %125 = vst.msk [vmem:[%s124] ss:$-49 sm:$0x3] %vm123, %v122
    %s126 = scalar_lea.vmem [#allocation0], 1
    %s127 = smov 3
    %v128 = vld [vmem:[%s126] ss:$-1 sm:%s127]
    %129 = vrot.lane.b32.xlu0 %v128, 109
    %v130 = vpop.permute.xlu0 %129
    %vm131 = vcmask 7168
    %s132 = scalar_lea.vmem %s1, 68
    %133 = vst.msk [vmem:[%s132] ss:$-49 sm:$0x3] %vm131, %v130
    %s134 = scalar_lea.vmem [#allocation0], 1
    %s135 = smov 3
    %v136 = vld [vmem:[%s134] ss:$-1 sm:%s135]
    %137 = vrot.lane.b32.xlu0 %v136, 108
    %v138 = vpop.permute.xlu0 %137
    %vm139 = vcmask 7168
    %s140 = scalar_lea.vmem %s1, 69
    %141 = vst.msk [vmem:[%s140] ss:$-49 sm:$0x3] %vm139, %v138
    %s142 = scalar_lea.vmem [#allocation0], 1
    %s143 = smov 3
    %v144 = vld [vmem:[%s142] ss:$-1 sm:%s143]
    %145 = vrot.lane.b32.xlu0 %v144, 107
    %v146 = vpop.permute.xlu0 %145
    %vm147 = vcmask 7168
    %s148 = scalar_lea.vmem %s1, 70
    %149 = vst.msk [vmem:[%s148] ss:$-49 sm:$0x3] %vm147, %v146
    %s150 = scalar_lea.vmem [#allocation0], 1
    %s151 = smov 3
    %v152 = vld [vmem:[%s150] ss:$-1 sm:%s151]
    %153 = vrot.lane.b32.xlu0 %v152, 106
    %v154 = vpop.permute.xlu0 %153
    %vm155 = vcmask 7168
    %s156 = scalar_lea.vmem %s1, 71
    %157 = vst.msk [vmem:[%s156] ss:$-49 sm:$0x3] %vm155, %v154
    %s158 = scalar_lea.vmem [#allocation0], 1
    %s159 = smov 3
    %v160 = vld [vmem:[%s158] ss:$-1 sm:%s159]
    %161 = vrot.lane.b32.xlu0 %v160, 105
    %v162 = vpop.permute.xlu0 %161
    %vm163 = vcmask 7168
    %s164 = scalar_lea.vmem %s1, 72
    %165 = vst.msk [vmem:[%s164] ss:$-49 sm:$0x3] %vm163, %v162
    %s166 = scalar_lea.vmem [#allocation0], 1
    %s167 = smov 3
    %v168 = vld [vmem:[%s166] ss:$-1 sm:%s167]
    %169 = vrot.lane.b32.xlu0 %v168, 104
    %v170 = vpop.permute.xlu0 %169
    %vm171 = vcmask 7168
    %s172 = scalar_lea.vmem %s1, 73
    %173 = vst.msk [vmem:[%s172] ss:$-49 sm:$0x3] %vm171, %v170
    %s174 = scalar_lea.vmem [#allocation0], 1
    %s175 = smov 3
    %v176 = vld [vmem:[%s174] ss:$-1 sm:%s175]
    %177 = vrot.lane.b32.xlu0 %v176, 103
    %v178 = vpop.permute.xlu0 %177
    %vm179 = vcmask 7168
    %s180 = scalar_lea.vmem %s1, 74
    %181 = vst.msk [vmem:[%s180] ss:$-49 sm:$0x3] %vm179, %v178
    %s182 = scalar_lea.vmem [#allocation0], 1
    %s183 = smov 3
    %v184 = vld [vmem:[%s182] ss:$-1 sm:%s183]
    %185 = vrot.lane.b32.xlu0 %v184, 102
    %v186 = vpop.permute.xlu0 %185
    %vm187 = vcmask 7168
    %s188 = scalar_lea.vmem %s1, 75
    %189 = vst.msk [vmem:[%s188] ss:$-49 sm:$0x3] %vm187, %v186
    %s190 = scalar_lea.vmem [#allocation0], 1
    %s191 = smov 3
    %v192 = vld [vmem:[%s190] ss:$-1 sm:%s191]
    %193 = vrot.lane.b32.xlu0 %v192, 101
    %v194 = vpop.permute.xlu0 %193
    %vm195 = vcmask 7168
    %s196 = scalar_lea.vmem %s1, 76
    %197 = vst.msk [vmem:[%s196] ss:$-49 sm:$0x3] %vm195, %v194
    %s198 = scalar_lea.vmem [#allocation0], 1
    %s199 = smov 3
    %v200 = vld [vmem:[%s198] ss:$-1 sm:%s199]
    %201 = vrot.lane.b32.xlu0 %v200, 100
    %v202 = vpop.permute.xlu0 %201
    %vm203 = vcmask 7168
    %s204 = scalar_lea.vmem %s1, 77
    %205 = vst.msk [vmem:[%s204] ss:$-49 sm:$0x3] %vm203, %v202
    %s206 = scalar_lea.vmem [#allocation0], 1
    %s207 = smov 3
    %v208 = vld [vmem:[%s206] ss:$-1 sm:%s207]
    %209 = vrot.lane.b32.xlu0 %v208, 99
    %v210 = vpop.permute.xlu0 %209
    %vm211 = vcmask 7168
    %s212 = scalar_lea.vmem %s1, 78
    %213 = vst.msk [vmem:[%s212] ss:$-49 sm:$0x3] %vm211, %v210
    %s214 = scalar_lea.vmem [#allocation0], 1
    %s215 = smov 3
    %v216 = vld [vmem:[%s214] ss:$-1 sm:%s215]
    %217 = vrot.lane.b32.xlu0 %v216, 98
    %v218 = vpop.permute.xlu0 %217
    %vm219 = vcmask 7168
    %s220 = scalar_lea.vmem %s1, 79
    %221 = vst.msk [vmem:[%s220] ss:$-49 sm:$0x3] %vm219, %v218
    %s222 = scalar_lea.vmem [#allocation0], 1
    %s223 = smov 3
    %v224 = vld [vmem:[%s222] ss:$-1 sm:%s223]
    %225 = vrot.lane.b32.xlu0 %v224, 97
    %v226 = vpop.permute.xlu0 %225
    %vm227 = vcmask 7168
    %s228 = scalar_lea.vmem %s1, 80
    %229 = vst.msk [vmem:[%s228] ss:$-49 sm:$0x3] %vm227, %v226
    %v230 = vld [vmem:[#allocation0] sm:$0x3]
    %231 = vrot.lane.b32.xlu0 %v230, 96
    %v232 = vpop.permute.xlu0 %231
    %vm233 = vcmask 7168
    %s234 = scalar_lea.vmem %s1, 32
    %235 = vst.msk [vmem:[%s234] ss:$49 sm:$0x3] %vm233, %v232
    %v236 = vld [vmem:[#allocation0] sm:$0x3]
    %237 = vrot.lane.b32.xlu0 %v236, 95
    %v238 = vpop.permute.xlu0 %237
    %vm239 = vcmask 7168
    %s240 = scalar_lea.vmem %s1, 33
    %241 = vst.msk [vmem:[%s240] ss:$49 sm:$0x3] %vm239, %v238
    %v242 = vld [vmem:[#allocation0] sm:$0x3]
    %243 = vrot.lane.b32.xlu0 %v242, 94
    %v244 = vpop.permute.xlu0 %243
    %vm245 = vcmask 7168
    %s246 = scalar_lea.vmem %s1, 34
    %247 = vst.msk [vmem:[%s246] ss:$49 sm:$0x3] %vm245, %v244
    %v248 = vld [vmem:[#allocation0] sm:$0x3]
    %249 = vrot.lane.b32.xlu0 %v248, 93
    %v250 = vpop.permute.xlu0 %249
    %vm251 = vcmask 7168
    %s252 = scalar_lea.vmem %s1, 35
    %253 = vst.msk [vmem:[%s252] ss:$49 sm:$0x3] %vm251, %v250
    %v254 = vld [vmem:[#allocation0] sm:$0x3]
    %255 = vrot.lane.b32.xlu0 %v254, 92
    %v256 = vpop.permute.xlu0 %255
    %vm257 = vcmask 7168
    %s258 = scalar_lea.vmem %s1, 36
    %259 = vst.msk [vmem:[%s258] ss:$49 sm:$0x3] %vm257, %v256
    %v260 = vld [vmem:[#allocation0] sm:$0x3]
    %261 = vrot.lane.b32.xlu0 %v260, 91
    %v262 = vpop.permute.xlu0 %261
    %vm263 = vcmask 7168
    %s264 = scalar_lea.vmem %s1, 37
    %265 = vst.msk [vmem:[%s264] ss:$49 sm:$0x3] %vm263, %v262
    %v266 = vld [vmem:[#allocation0] sm:$0x3]
    %267 = vrot.lane.b32.xlu0 %v266, 90
    %v268 = vpop.permute.xlu0 %267
    %vm269 = vcmask 7168
    %s270 = scalar_lea.vmem %s1, 38
    %271 = vst.msk [vmem:[%s270] ss:$49 sm:$0x3] %vm269, %v268
    %v272 = vld [vmem:[#allocation0] sm:$0x3]
    %273 = vrot.lane.b32.xlu0 %v272, 89
    %v274 = vpop.permute.xlu0 %273
    %vm275 = vcmask 7168
    %s276 = scalar_lea.vmem %s1, 39
    %277 = vst.msk [vmem:[%s276] ss:$49 sm:$0x3] %vm275, %v274
    %v278 = vld [vmem:[#allocation0] sm:$0x3]
    %279 = vrot.lane.b32.xlu0 %v278, 88
    %v280 = vpop.permute.xlu0 %279
    %vm281 = vcmask 7168
    %s282 = scalar_lea.vmem %s1, 40
    %283 = vst.msk [vmem:[%s282] ss:$49 sm:$0x3] %vm281, %v280
    %v284 = vld [vmem:[#allocation0] sm:$0x3]
    %285 = vrot.lane.b32.xlu0 %v284, 87
    %v286 = vpop.permute.xlu0 %285
    %vm287 = vcmask 7168
    %s288 = scalar_lea.vmem %s1, 41
    %289 = vst.msk [vmem:[%s288] ss:$49 sm:$0x3] %vm287, %v286
    %v290 = vld [vmem:[#allocation0] sm:$0x3]
    %291 = vrot.lane.b32.xlu0 %v290, 86
    %v292 = vpop.permute.xlu0 %291
    %vm293 = vcmask 7168
    %s294 = scalar_lea.vmem %s1, 42
    %295 = vst.msk [vmem:[%s294] ss:$49 sm:$0x3] %vm293, %v292
    %v296 = vld [vmem:[#allocation0] sm:$0x3]
    %297 = vrot.lane.b32.xlu0 %v296, 85
    %v298 = vpop.permute.xlu0 %297
    %vm299 = vcmask 7168
    %s300 = scalar_lea.vmem %s1, 43
    %301 = vst.msk [vmem:[%s300] ss:$49 sm:$0x3] %vm299, %v298
    %v302 = vld [vmem:[#allocation0] sm:$0x3]
    %303 = vrot.lane.b32.xlu0 %v302, 84
    %v304 = vpop.permute.xlu0 %303
    %vm305 = vcmask 7168
    %s306 = scalar_lea.vmem %s1, 44
    %307 = vst.msk [vmem:[%s306] ss:$49 sm:$0x3] %vm305, %v304
    %v308 = vld [vmem:[#allocation0] sm:$0x3]
    %309 = vrot.lane.b32.xlu0 %v308, 83
    %v310 = vpop.permute.xlu0 %309
    %vm311 = vcmask 7168
    %s312 = scalar_lea.vmem %s1, 45
    %313 = vst.msk [vmem:[%s312] ss:$49 sm:$0x3] %vm311, %v310
    %v314 = vld [vmem:[#allocation0] sm:$0x3]
    %315 = vrot.lane.b32.xlu0 %v314, 82
    %v316 = vpop.permute.xlu0 %315
    %vm317 = vcmask 7168
    %s318 = scalar_lea.vmem %s1, 46
    %319 = vst.msk [vmem:[%s318] ss:$49 sm:$0x3] %vm317, %v316
    %s320 = scalar_lea.vmem [#allocation0], 1
    %s321 = smov 3
    %v322 = vld [vmem:[%s320] ss:$-1 sm:%s321]
    %323 = vrot.lane.b32.xlu0 %v322, 81
    %v324 = vpop.permute.xlu0 %323
    %vm325 = vcmask 7168
    %s326 = scalar_lea.vmem %s1, 96
    %327 = vst.msk [vmem:[%s326] ss:$-49 sm:$0x3] %vm325, %v324
    %s328 = scalar_lea.vmem [#allocation0], 1
    %s329 = smov 3
    %v330 = vld [vmem:[%s328] ss:$-1 sm:%s329]
    %331 = vrot.lane.b32.xlu0 %v330, 80
    %v332 = vpop.permute.xlu0 %331
    %vm333 = vcmask 7168
    %s334 = scalar_lea.vmem %s1, 97
    %335 = vst.msk [vmem:[%s334] ss:$-49 sm:$0x3] %vm333, %v332

// kernel: mhdpa_relation_network_forward.3
$region0: #{mhdpa_relation_network_forward.3}
  #allocation0 [shape = 'u32[]', space=smem, size = 0x4, offset = 0x4, fixed_abs, tag = 'smem constant byte address 0x4 - core index']
  #allocation1 [shape = 'u32[144,128]{1,0:T(1,128)}', space=vmem, size = 0x12000, scoped, tag = 'internal scratch']
  %s0 = inlined_call_operand.vmem [shape: f32[2,1813], index: 0, kind: input, shape index: {}]
  %s1 = inlined_call_operand.vmem [shape: f32[1813,64], index: 1, kind: input, shape index: {}]
  %s2 = inlined_call_operand.vmem [shape: f32[64,32], index: 2, kind: input, shape index: {}]
  %s3 = inlined_call_operand.hbm [shape: f32[2,32], index: 3, kind: output, shape index: {}]
  %s4 = sld [smem:[#allocation0]]
  $region22: #{mhdpa_relation_network_forward.3} parent=0
    _
  %s6 = ssub.s32 1, %s4
  %s7 = scalar_select 0, %s6, %s4
  $region1: #{mhdpa_relation_network_forward.3} parent=0
    #allocation2 [shape = 'u8[1024]{0}', space=vmem, size = 0x400, scoped, tag = 'output window, operand 0, single buffered']
    #allocation3 [shape = 's32[1]{0}', space=sflag, size = 0x4, scoped, tag = 'scoped memory for mhdpa_relation_network_forward.3']
    %8 = vsyncpa [#allocation3], 0
    // Predicated region
    $region2: #{mhdpa_relation_network_forward.3} parent=1 // pred_check
      _
    $region3: #{mhdpa_relation_network_forward.3} parent=1 // pred_check_branch
      %10 = sbr.rel (0) target = $region5
    $region4: #{mhdpa_relation_network_forward.3} parent=1 // pred_region
      _
    $region5: #{mhdpa_relation_network_forward.3} parent=1 // pred_fallthru
      _
    // Predicated region
    $region6: #{mhdpa_relation_network_forward.3} parent=1 // pred_check
      _
    $region7: #{mhdpa_relation_network_forward.3} parent=1 // pred_check_branch
      %12 = sbr.rel (0) target = $region9
    $region8: #{mhdpa_relation_network_forward.3} parent=1 // pred_region
      _
    $region9: #{mhdpa_relation_network_forward.3} parent=1 // pred_fallthru
      _
    // Predicated region
    $region10: #{mhdpa_relation_network_forward.3} parent=1 // pred_check
      _
    $region11: #{mhdpa_relation_network_forward.3} parent=1 // pred_check_branch
      %14 = sbr.rel (0) target = $region13
    $region12: #{mhdpa_relation_network_forward.3} parent=1 // pred_region
      _
    $region13: #{mhdpa_relation_network_forward.3} parent=1 // pred_fallthru
      _
    %v15 = vld [vmem:[%s0] sm:$0xff]
    %v16 = vld [vmem:[%s0 + $0x8] sm:$0xff]
    %v17 = vld [vmem:[%s0 + $0x10] sm:$0xff]
    %v18 = vld [vmem:[%s0 + $0x18] sm:$0x3f]
    %v19 = vld [vmem:[%s1] sm:$0xff]
    %v20 = vld [vmem:[%s1 + $0x8] sm:$0xff]
    %v21 = vld [vmem:[%s1 + $0x10] sm:$0xff]
    %v22 = vld [vmem:[%s1 + $0x18] sm:$0xff]
    %v23 = vld [vmem:[%s1 + $0x20] sm:$0xff]
    %v24 = vld [vmem:[%s1 + $0x28] sm:$0xff]
    %v25 = vld [vmem:[%s1 + $0x30] sm:$0xff]
    %v26 = vld [vmem:[%s1 + $0x38] sm:$0xff]
    %v27 = vld [vmem:[%s1 + $0x40] sm:$0xff]
    %v28 = vld [vmem:[%s1 + $0x48] sm:$0xff]
    %v29 = vld [vmem:[%s1 + $0x50] sm:$0xff]
    %v30 = vld [vmem:[%s1 + $0x58] sm:$0xff]
    %v31 = vld [vmem:[%s1 + $0x60] sm:$0xff]
    %v32 = vld [vmem:[%s1 + $0x68] sm:$0xff]
    %v33 = vld [vmem:[%s1 + $0x70] sm:$0xff]
    %v34 = vld [vmem:[%s1 + $0x78] sm:$0xff]
    %v35 = vld [vmem:[%s1 + $0x80] sm:$0xff]
    %v36 = vld [vmem:[%s1 + $0x88] sm:$0xff]
    %v37 = vld [vmem:[%s1 + $0x90] sm:$0xff]
    %v38 = vld [vmem:[%s1 + $0x98] sm:$0xff]
    %v39 = vld [vmem:[%s1 + $0xa0] sm:$0xff]
    %v40 = vld [vmem:[%s1 + $0xa8] sm:$0xff]
    %v41 = vld [vmem:[%s1 + $0xb0] sm:$0xff]
    %v42 = vld [vmem:[%s1 + $0xb8] sm:$0xff]
    %v43 = vld [vmem:[%s1 + $0xc0] sm:$0xff]
    %v44 = vld [vmem:[%s1 + $0xc8] sm:$0xff]
    %v45 = vld [vmem:[%s1 + $0xd0] sm:$0xff]
    %v46 = vld [vmem:[%s1 + $0xd8] sm:$0xff]
    %v47 = vld [vmem:[%s1 + $0xe0] sm:$0xff]
    %v48 = vld [vmem:[%s1 + $0xe8] sm:$0xff]
    %v49 = vld [vmem:[%s1 + $0xf0] sm:$0xff]
    %v50 = vld [vmem:[%s1 + $0xf8] sm:$0xff]
    %v51 = vld [vmem:[%s1 + $0x100] sm:$0xff]
    %v52 = vld [vmem:[%s1 + $0x108] sm:$0xff]
    %v53 = vld [vmem:[%s1 + $0x110] sm:$0xff]
    %v54 = vld [vmem:[%s1 + $0x118] sm:$0xff]
    %v55 = vld [vmem:[%s1 + $0x120] sm:$0xff]
    %v56 = vld [vmem:[%s1 + $0x128] sm:$0xff]
    %v57 = vld [vmem:[%s1 + $0x130] sm:$0xff]
    %v58 = vld [vmem:[%s1 + $0x138] sm:$0xff]
    %v59 = vld [vmem:[%s1 + $0x140] sm:$0xff]
    %v60 = vld [vmem:[%s1 + $0x148] sm:$0xff]
    %v61 = vld [vmem:[%s1 + $0x150] sm:$0xff]
    %v62 = vld [vmem:[%s1 + $0x158] sm:$0xff]
    %v63 = vld [vmem:[%s1 + $0x160] sm:$0xff]
    %v64 = vld [vmem:[%s1 + $0x168] sm:$0xff]
    %v65 = vld [vmem:[%s1 + $0x170] sm:$0xff]
    %v66 = vld [vmem:[%s1 + $0x178] sm:$0xff]
    %v67 = vld [vmem:[%s1 + $0x180] sm:$0xff]
    %v68 = vld [vmem:[%s1 + $0x188] sm:$0xff]
    %v69 = vld [vmem:[%s1 + $0x190] sm:$0xff]
    %v70 = vld [vmem:[%s1 + $0x198] sm:$0xff]
    %v71 = vld [vmem:[%s1 + $0x1a0] sm:$0xff]
    %v72 = vld [vmem:[%s1 + $0x1a8] sm:$0xff]
    %v73 = vld [vmem:[%s1 + $0x1b0] sm:$0xff]
    %v74 = vld [vmem:[%s1 + $0x1b8] sm:$0xff]
    %v75 = vld [vmem:[%s1 + $0x1c0] sm:$0xff]
    %v76 = vld [vmem:[%s1 + $0x1c8] sm:$0xff]
    %v77 = vld [vmem:[%s1 + $0x1d0] sm:$0xff]
    %v78 = vld [vmem:[%s1 + $0x1d8] sm:$0xff]
    %v79 = vld [vmem:[%s1 + $0x1e0] sm:$0xff]
    %v80 = vld [vmem:[%s1 + $0x1e8] sm:$0xff]
    %v81 = vld [vmem:[%s1 + $0x1f0] sm:$0xff]
    %v82 = vld [vmem:[%s1 + $0x1f8] sm:$0xff]
    %v83 = vld [vmem:[%s1 + $0x200] sm:$0xff]
    %v84 = vld [vmem:[%s1 + $0x208] sm:$0xff]
    %v85 = vld [vmem:[%s1 + $0x210] sm:$0xff]
    %v86 = vld [vmem:[%s1 + $0x218] sm:$0xff]
    %v87 = vld [vmem:[%s1 + $0x220] sm:$0xff]
    %v88 = vld [vmem:[%s1 + $0x228] sm:$0xff]
    %v89 = vld [vmem:[%s1 + $0x230] sm:$0xff]
    %v90 = vld [vmem:[%s1 + $0x238] sm:$0xff]
    %v91 = vld [vmem:[%s1 + $0x240] sm:$0xff]
    %v92 = vld [vmem:[%s1 + $0x248] sm:$0xff]
    %v93 = vld [vmem:[%s1 + $0x250] sm:$0xff]
    %v94 = vld [vmem:[%s1 + $0x258] sm:$0xff]
    %v95 = vld [vmem:[%s1 + $0x260] sm:$0xff]
    %v96 = vld [vmem:[%s1 + $0x268] sm:$0xff]
    %v97 = vld [vmem:[%s1 + $0x270] sm:$0xff]
    %v98 = vld [vmem:[%s1 + $0x278] sm:$0xff]
    %v99 = vld [vmem:[%s1 + $0x280] sm:$0xff]
    %v100 = vld [vmem:[%s1 + $0x288] sm:$0xff]
    %v101 = vld [vmem:[%s1 + $0x290] sm:$0xff]
    %v102 = vld [vmem:[%s1 + $0x298] sm:$0xff]
    %v103 = vld [vmem:[%s1 + $0x2a0] sm:$0xff]
    %v104 = vld [vmem:[%s1 + $0x2a8] sm:$0xff]
    %v105 = vld [vmem:[%s1 + $0x2b0] sm:$0xff]
    %v106 = vld [vmem:[%s1 + $0x2b8] sm:$0xff]
    %v107 = vld [vmem:[%s1 + $0x2c0] sm:$0xff]
    %v108 = vld [vmem:[%s1 + $0x2c8] sm:$0xff]
    %v109 = vld [vmem:[%s1 + $0x2d0] sm:$0xff]
    %v110 = vld [vmem:[%s1 + $0x2d8] sm:$0xff]
    %v111 = vld [vmem:[%s1 + $0x2e0] sm:$0xff]
    %v112 = vld [vmem:[%s1 + $0x2e8] sm:$0xff]
    %v113 = vld [vmem:[%s1 + $0x2f0] sm:$0xff]
    %v114 = vld [vmem:[%s1 + $0x2f8] sm:$0xff]
    %v115 = vld [vmem:[%s1 + $0x300] sm:$0xff]
    %v116 = vld [vmem:[%s1 + $0x308] sm:$0xff]
    %v117 = vld [vmem:[%s1 + $0x310] sm:$0xff]
    %v118 = vld [vmem:[%s1 + $0x318] sm:$0xff]
    %v119 = vld [vmem:[%s1 + $0x320] sm:$0xff]
    %v120 = vld [vmem:[%s1 + $0x328] sm:$0xff]
    %v121 = vld [vmem:[%s1 + $0x330] sm:$0xff]
    %v122 = vld [vmem:[%s1 + $0x338] sm:$0xff]
    %v123 = vld [vmem:[%s1 + $0x340] sm:$0xff]
    %v124 = vld [vmem:[%s1 + $0x348] sm:$0xff]
    %v125 = vld [vmem:[%s1 + $0x350] sm:$0xff]
    %v126 = vld [vmem:[%s1 + $0x358] sm:$0xff]
    %v127 = vld [vmem:[%s1 + $0x360] sm:$0xff]
    %v128 = vld [vmem:[%s1 + $0x368] sm:$0xff]
    %v129 = vld [vmem:[%s1 + $0x370] sm:$0xff]
    %v130 = vld [vmem:[%s1 + $0x378] sm:$0xff]
    %v131 = vld [vmem:[%s1 + $0x380] sm:$0xff]
    %v132 = vld [vmem:[%s1 + $0x388] sm:$0xff]
    %v133 = vld [vmem:[%s1 + $0x390] sm:$0xff]
    %v134 = vld [vmem:[%s1 + $0x398] sm:$0xff]
    %v135 = vld [vmem:[%s1 + $0x3a0] sm:$0xff]
    %v136 = vld [vmem:[%s1 + $0x3a8] sm:$0xff]
    %v137 = vld [vmem:[%s1 + $0x3b0] sm:$0xff]
    %v138 = vld [vmem:[%s1 + $0x3b8] sm:$0xff]
    %v139 = vld [vmem:[%s1 + $0x3c0] sm:$0xff]
    %v140 = vld [vmem:[%s1 + $0x3c8] sm:$0xff]
    %v141 = vld [vmem:[%s1 + $0x3d0] sm:$0xff]
    %v142 = vld [vmem:[%s1 + $0x3d8] sm:$0xff]
    %v143 = vld [vmem:[%s1 + $0x3e0] sm:$0xff]
    %v144 = vld [vmem:[%s1 + $0x3e8] sm:$0xff]
    %v145 = vld [vmem:[%s1 + $0x3f0] sm:$0xff]
    %v146 = vld [vmem:[%s1 + $0x3f8] sm:$0xff]
    %v147 = vld [vmem:[%s1 + $0x400] sm:$0xff]
    %v148 = vld [vmem:[%s1 + $0x408] sm:$0xff]
    %v149 = vld [vmem:[%s1 + $0x410] sm:$0xff]
    %v150 = vld [vmem:[%s1 + $0x418] sm:$0xff]
    %v151 = vld [vmem:[%s1 + $0x420] sm:$0xff]
    %v152 = vld [vmem:[%s1 + $0x428] sm:$0xff]
    %v153 = vld [vmem:[%s1 + $0x430] sm:$0xff]
    %v154 = vld [vmem:[%s1 + $0x438] sm:$0xff]
    %v155 = vld [vmem:[%s1 + $0x440] sm:$0xff]
    %v156 = vld [vmem:[%s1 + $0x448] sm:$0xff]
    %v157 = vld [vmem:[%s1 + $0x450] sm:$0xff]
    %v158 = vld [vmem:[%s1 + $0x458] sm:$0xff]
    %v159 = vld [vmem:[%s1 + $0x460] sm:$0xff]
    %v160 = vld [vmem:[%s1 + $0x468] sm:$0xff]
    %v161 = vld [vmem:[%s1 + $0x470] sm:$0xff]
    %v162 = vld [vmem:[%s1 + $0x478] sm:$0xff]
    %v163 = vld [vmem:[%s1 + $0x480] sm:$0xff]
    %v164 = vld [vmem:[%s1 + $0x488] sm:$0xff]
    %v165 = vld [vmem:[%s1 + $0x490] sm:$0xff]
    %v166 = vld [vmem:[%s1 + $0x498] sm:$0xff]
    %v167 = vld [vmem:[%s1 + $0x4a0] sm:$0xff]
    %v168 = vld [vmem:[%s1 + $0x4a8] sm:$0xff]
    %v169 = vld [vmem:[%s1 + $0x4b0] sm:$0xff]
    %v170 = vld [vmem:[%s1 + $0x4b8] sm:$0xff]
    %v171 = vld [vmem:[%s1 + $0x4c0] sm:$0xff]
    %v172 = vld [vmem:[%s1 + $0x4c8] sm:$0xff]
    %v173 = vld [vmem:[%s1 + $0x4d0] sm:$0xff]
    %v174 = vld [vmem:[%s1 + $0x4d8] sm:$0xff]
    %v175 = vld [vmem:[%s1 + $0x4e0] sm:$0xff]
    %v176 = vld [vmem:[%s1 + $0x4e8] sm:$0xff]
    %v177 = vld [vmem:[%s1 + $0x4f0] sm:$0xff]
    %v178 = vld [vmem:[%s1 + $0x4f8] sm:$0xff]
    %v179 = vld [vmem:[%s1 + $0x500] sm:$0xff]
    %v180 = vld [vmem:[%s1 + $0x508] sm:$0xff]
    %v181 = vld [vmem:[%s1 + $0x510] sm:$0xff]
    %v182 = vld [vmem:[%s1 + $0x518] sm:$0xff]
    %v183 = vld [vmem:[%s1 + $0x520] sm:$0xff]
    %v184 = vld [vmem:[%s1 + $0x528] sm:$0xff]
    %v185 = vld [vmem:[%s1 + $0x530] sm:$0xff]
    %v186 = vld [vmem:[%s1 + $0x538] sm:$0xff]
    %v187 = vld [vmem:[%s1 + $0x540] sm:$0xff]
    %v188 = vld [vmem:[%s1 + $0x548] sm:$0xff]
    %v189 = vld [vmem:[%s1 + $0x550] sm:$0xff]
    %v190 = vld [vmem:[%s1 + $0x558] sm:$0xff]
    %v191 = vld [vmem:[%s1 + $0x560] sm:$0xff]
    %v192 = vld [vmem:[%s1 + $0x568] sm:$0xff]
    %v193 = vld [vmem:[%s1 + $0x570] sm:$0xff]
    %v194 = vld [vmem:[%s1 + $0x578] sm:$0xff]
    %v195 = vld [vmem:[%s1 + $0x580] sm:$0xff]
    %v196 = vld [vmem:[%s1 + $0x588] sm:$0xff]
    %v197 = vld [vmem:[%s1 + $0x590] sm:$0xff]
    %v198 = vld [vmem:[%s1 + $0x598] sm:$0xff]
    %v199 = vld [vmem:[%s1 + $0x5a0] sm:$0xff]
    %v200 = vld [vmem:[%s1 + $0x5a8] sm:$0xff]
    %v201 = vld [vmem:[%s1 + $0x5b0] sm:$0xff]
    %v202 = vld [vmem:[%s1 + $0x5b8] sm:$0xff]
    %v203 = vld [vmem:[%s1 + $0x5c0] sm:$0xff]
    %v204 = vld [vmem:[%s1 + $0x5c8] sm:$0xff]
    %v205 = vld [vmem:[%s1 + $0x5d0] sm:$0xff]
    %v206 = vld [vmem:[%s1 + $0x5d8] sm:$0xff]
    %v207 = vld [vmem:[%s1 + $0x5e0] sm:$0xff]
    %v208 = vld [vmem:[%s1 + $0x5e8] sm:$0xff]
    %v209 = vld [vmem:[%s1 + $0x5f0] sm:$0xff]
    %v210 = vld [vmem:[%s1 + $0x5f8] sm:$0xff]
    %v211 = vld [vmem:[%s1 + $0x600] sm:$0xff]
    %v212 = vld [vmem:[%s1 + $0x608] sm:$0xff]
    %v213 = vld [vmem:[%s1 + $0x610] sm:$0xff]
    %v214 = vld [vmem:[%s1 + $0x618] sm:$0xff]
    %v215 = vld [vmem:[%s1 + $0x620] sm:$0xff]
    %v216 = vld [vmem:[%s1 + $0x628] sm:$0xff]
    %v217 = vld [vmem:[%s1 + $0x630] sm:$0xff]
    %v218 = vld [vmem:[%s1 + $0x638] sm:$0xff]
    %v219 = vld [vmem:[%s1 + $0x640] sm:$0xff]
    %v220 = vld [vmem:[%s1 + $0x648] sm:$0xff]
    %v221 = vld [vmem:[%s1 + $0x650] sm:$0xff]
    %v222 = vld [vmem:[%s1 + $0x658] sm:$0xff]
    %v223 = vld [vmem:[%s1 + $0x660] sm:$0xff]
    %v224 = vld [vmem:[%s1 + $0x668] sm:$0xff]
    %v225 = vld [vmem:[%s1 + $0x670] sm:$0xff]
    %v226 = vld [vmem:[%s1 + $0x678] sm:$0xff]
    %v227 = vld [vmem:[%s1 + $0x680] sm:$0xff]
    %v228 = vld [vmem:[%s1 + $0x688] sm:$0xff]
    %v229 = vld [vmem:[%s1 + $0x690] sm:$0xff]
    %v230 = vld [vmem:[%s1 + $0x698] sm:$0xff]
    %v231 = vld [vmem:[%s1 + $0x6a0] sm:$0xff]
    %v232 = vld [vmem:[%s1 + $0x6a8] sm:$0xff]
    %v233 = vld [vmem:[%s1 + $0x6b0] sm:$0xff]
    %v234 = vld [vmem:[%s1 + $0x6b8] sm:$0xff]
    %v235 = vld [vmem:[%s1 + $0x6c0] sm:$0xff]
    %v236 = vld [vmem:[%s1 + $0x6c8] sm:$0xff]
    %v237 = vld [vmem:[%s1 + $0x6d0] sm:$0xff]
    %v238 = vld [vmem:[%s1 + $0x6d8] sm:$0xff]
    %v239 = vld [vmem:[%s1 + $0x6e0] sm:$0xff]
    %v240 = vld [vmem:[%s1 + $0x6e8] sm:$0xff]
    %v241 = vld [vmem:[%s1 + $0x6f0] sm:$0xff]
    %v242 = vld [vmem:[%s1 + $0x6f8] sm:$0xff]
    %v243 = vld [vmem:[%s1 + $0x700] sm:$0xff]
    %v244 = vld [vmem:[%s1 + $0x708] sm:$0xff]
    %v245 = vld [vmem:[%s1 + $0x710] sm:$0x1f]
    %v250 = vcombine.high %v15, %v15
    %v252 = vunpack.c.l.s4 1983009808
    %v253 = vunpack.c.0.s8 %v252
    %v254 = vlaneseq
    %v255 = vshrl.u32 %v254, 7
    %v256 = vsub.s32 %v253, %v255
    %v257 = vrot.slane %v15, %v256
    %v259 = vunpack.c.l.s4 1983009808
    %v260 = vunpack.c.0.s8 %v259
    %v261 = vlaneseq
    %v262 = vshrl.u32 %v261, 7
    %v263 = vsub.s32 %v260, %v262
    %v264 = vrot.slane %v250, %v263
    %v265 = vcombine.high %v257, %v257
    %v266 = vcombine.high %v264, %v264
    %v267 = vcombine.high %v16, %v16
    %v269 = vunpack.c.l.s4 1983009808
    %v270 = vunpack.c.0.s8 %v269
    %v271 = vlaneseq
    %v272 = vshrl.u32 %v271, 7
    %v273 = vsub.s32 %v270, %v272
    %v274 = vrot.slane %v16, %v273
    %v276 = vunpack.c.l.s4 1983009808
    %v277 = vunpack.c.0.s8 %v276
    %v278 = vlaneseq
    %v279 = vshrl.u32 %v278, 7
    %v280 = vsub.s32 %v277, %v279
    %v281 = vrot.slane %v267, %v280
    %v282 = vcombine.high %v274, %v274
    %v283 = vcombine.high %v281, %v281
    %v284 = vcombine.high %v17, %v17
    %v286 = vunpack.c.l.s4 1983009808
    %v287 = vunpack.c.0.s8 %v286
    %v288 = vlaneseq
    %v289 = vshrl.u32 %v288, 7
    %v290 = vsub.s32 %v287, %v289
    %v291 = vrot.slane %v17, %v290
    %v293 = vunpack.c.l.s4 1983009808
    %v294 = vunpack.c.0.s8 %v293
    %v295 = vlaneseq
    %v296 = vshrl.u32 %v295, 7
    %v297 = vsub.s32 %v294, %v296
    %v298 = vrot.slane %v284, %v297
    %v299 = vcombine.high %v291, %v291
    %v300 = vcombine.high %v298, %v298
    %v301 = vcombine.high %v18, %v18
    %v303 = vunpack.c.l.s4 1983009808
    %v304 = vunpack.c.0.s8 %v303
    %v305 = vlaneseq
    %v306 = vshrl.u32 %v305, 7
    %v307 = vsub.s32 %v304, %v306
    %v308 = vrot.slane %v18, %v307
    %v310 = vunpack.c.l.s4 1983009808
    %v311 = vunpack.c.0.s8 %v310
    %v312 = vlaneseq
    %v313 = vshrl.u32 %v312, 7
    %v314 = vsub.s32 %v311, %v313
    %v315 = vrot.slane %v301, %v314
    %v316 = vcombine.high %v308, %v308
    %vm331 = vcmask 171008
    %v332 = vsel %vm331, %v315, 0
    %vm334 = vcmask 1044480
    %v336 = vsel %vm334, %v245, 0
    %338 = vmatprep.subr.mxu0 0.0
    %339 = vmatpush1.msra.mxu0 %v34
    %340 = vmatprep.subr.mxu0 0.0
    %341 = vmatpush1.msra.mxu0 %v33
    %342 = vmatprep.subr.mxu0 0.0
    %343 = vmatpush1.msra.mxu0 %v32
    %344 = vmatprep.subr.mxu0 0.0
    %345 = vmatpush1.msra.mxu0 %v31
    %346 = vmatprep.subr.mxu0 0.0
    %347 = vmatpush1.msra.mxu0 %v30
    %348 = vmatprep.subr.mxu0 0.0
    %349 = vmatpush1.msra.mxu0 %v29
    %350 = vmatprep.subr.mxu0 0.0
    %351 = vmatpush1.msra.mxu0 %v28
    %352 = vmatprep.subr.mxu0 0.0
    %353 = vmatpush1.msra.mxu0 %v27
    %354 = vmatprep.subr.mxu0 0.0
    %355 = vmatpush1.msra.mxu0 %v26
    %356 = vmatprep.subr.mxu0 0.0
    %357 = vmatpush1.msra.mxu0 %v25
    %358 = vmatprep.subr.mxu0 0.0
    %359 = vmatpush1.msra.mxu0 %v24
    %360 = vmatprep.subr.mxu0 0.0
    %361 = vmatpush1.msra.mxu0 %v23
    %362 = vmatprep.subr.mxu0 0.0
    %363 = vmatpush1.msra.mxu0 %v22
    %364 = vmatprep.subr.mxu0 0.0
    %365 = vmatpush1.msra.mxu0 %v21
    %366 = vmatprep.subr.mxu0 0.0
    %367 = vmatpush1.msra.mxu0 %v20
    %368 = vmatprep.subr.mxu0 0.0
    %369 = vmatpush1.msra.mxu0 %v19
    %370 = vmatprep.subr.mxu0 0.0
    %371 = vmatpush2.msra.mxu0 %v50
    %372 = vmatprep.subr.mxu0 0.0
    %373 = vmatpush2.msra.mxu0 %v49
    %374 = vmatprep.subr.mxu0 0.0
    %375 = vmatpush2.msra.mxu0 %v48
    %376 = vmatprep.subr.mxu0 0.0
    %377 = vmatpush2.msra.mxu0 %v47
    %378 = vmatprep.subr.mxu0 0.0
    %379 = vmatpush2.msra.mxu0 %v46
    %380 = vmatprep.subr.mxu0 0.0
    %381 = vmatpush2.msra.mxu0 %v45
    %382 = vmatprep.subr.mxu0 0.0
    %383 = vmatpush2.msra.mxu0 %v44
    %384 = vmatprep.subr.mxu0 0.0
    %385 = vmatpush2.msra.mxu0 %v43
    %386 = vmatprep.subr.mxu0 0.0
    %387 = vmatpush2.msra.mxu0 %v42
    %388 = vmatprep.subr.mxu0 0.0
    %389 = vmatpush2.msra.mxu0 %v41
    %390 = vmatprep.subr.mxu0 0.0
    %391 = vmatpush2.msra.mxu0 %v40
    %392 = vmatprep.subr.mxu0 0.0
    %393 = vmatpush2.msra.mxu0 %v39
    %394 = vmatprep.subr.mxu0 0.0
    %395 = vmatpush2.msra.mxu0 %v38
    %396 = vmatprep.subr.mxu0 0.0
    %397 = vmatpush2.msra.mxu0 %v37
    %398 = vmatprep.subr.mxu0 0.0
    %399 = vmatpush2.msra.mxu0 %v36
    %400 = vmatprep.subr.mxu0 0.0
    %401 = vmatpush2.msra.mxu0 %v35
    %402 = vmatprep.mubr.f32.mxu0 %v265
    %403 = vmatmul.mubr.f32.gmra.mxu0 %v257
    %v404 = vpop.f32.mrf.mxu0
    %v405 = vadd.f32 0.0, %v404
    %v406 = vpop.f32.mrf.mxu0
    %407 = vdwg.mxu0
    %408 = vmatprep.subr.mxu0 0.0
    %409 = vmatpush1.msra.mxu0 %v66
    %410 = vmatprep.subr.mxu0 0.0
    %411 = vmatpush1.msra.mxu0 %v65
    %412 = vmatprep.subr.mxu0 0.0
    %413 = vmatpush1.msra.mxu0 %v64
    %414 = vmatprep.subr.mxu0 0.0
    %415 = vmatpush1.msra.mxu0 %v63
    %416 = vmatprep.subr.mxu0 0.0
    %417 = vmatpush1.msra.mxu0 %v62
    %418 = vmatprep.subr.mxu0 0.0
    %419 = vmatpush1.msra.mxu0 %v61
    %420 = vmatprep.subr.mxu0 0.0
    %421 = vmatpush1.msra.mxu0 %v60
    %422 = vmatprep.subr.mxu0 0.0
    %423 = vmatpush1.msra.mxu0 %v59
    %424 = vmatprep.subr.mxu0 0.0
    %425 = vmatpush1.msra.mxu0 %v58
    %426 = vmatprep.subr.mxu0 0.0
    %427 = vmatpush1.msra.mxu0 %v57
    %428 = vmatprep.subr.mxu0 0.0
    %429 = vmatpush1.msra.mxu0 %v56
    %430 = vmatprep.subr.mxu0 0.0
    %431 = vmatpush1.msra.mxu0 %v55
    %432 = vmatprep.subr.mxu0 0.0
    %433 = vmatpush1.msra.mxu0 %v54
    %434 = vmatprep.subr.mxu0 0.0
    %435 = vmatpush1.msra.mxu0 %v53
    %436 = vmatprep.subr.mxu0 0.0
    %437 = vmatpush1.msra.mxu0 %v52
    %438 = vmatprep.subr.mxu0 0.0
    %439 = vmatpush1.msra.mxu0 %v51
    %440 = vmatprep.subr.mxu0 0.0
    %441 = vmatpush2.msra.mxu0 %v82
    %442 = vmatprep.subr.mxu0 0.0
    %443 = vmatpush2.msra.mxu0 %v81
    %444 = vmatprep.subr.mxu0 0.0
    %445 = vmatpush2.msra.mxu0 %v80
    %446 = vmatprep.subr.mxu0 0.0
    %447 = vmatpush2.msra.mxu0 %v79
    %448 = vmatprep.subr.mxu0 0.0
    %449 = vmatpush2.msra.mxu0 %v78
    %450 = vmatprep.subr.mxu0 0.0
    %451 = vmatpush2.msra.mxu0 %v77
    %452 = vmatprep.subr.mxu0 0.0
    %453 = vmatpush2.msra.mxu0 %v76
    %454 = vmatprep.subr.mxu0 0.0
    %455 = vmatpush2.msra.mxu0 %v75
    %456 = vmatprep.subr.mxu0 0.0
    %457 = vmatpush2.msra.mxu0 %v74
    %458 = vmatprep.subr.mxu0 0.0
    %459 = vmatpush2.msra.mxu0 %v73
    %460 = vmatprep.subr.mxu0 0.0
    %461 = vmatpush2.msra.mxu0 %v72
    %462 = vmatprep.subr.mxu0 0.0
    %463 = vmatpush2.msra.mxu0 %v71
    %464 = vmatprep.subr.mxu0 0.0
    %465 = vmatpush2.msra.mxu0 %v70
    %466 = vmatprep.subr.mxu0 0.0
    %467 = vmatpush2.msra.mxu0 %v69
    %468 = vmatprep.subr.mxu0 0.0
    %469 = vmatpush2.msra.mxu0 %v68
    %470 = vmatprep.subr.mxu0 0.0
    %471 = vmatpush2.msra.mxu0 %v67
    %472 = vmatprep.mubr.f32.mxu0 %v266
    %473 = vmatmul.mubr.f32.gmra.mxu0 %v264
    %v474 = vpop.f32.mrf.mxu0
    %v475 = vadd.f32 %v405, %v474
    %v476 = vpop.f32.mrf.mxu0
    %477 = vdwg.mxu0
    %478 = vmatprep.subr.mxu0 0.0
    %479 = vmatpush1.msra.mxu0 %v98
    %480 = vmatprep.subr.mxu0 0.0
    %481 = vmatpush1.msra.mxu0 %v97
    %482 = vmatprep.subr.mxu0 0.0
    %483 = vmatpush1.msra.mxu0 %v96
    %484 = vmatprep.subr.mxu0 0.0
    %485 = vmatpush1.msra.mxu0 %v95
    %486 = vmatprep.subr.mxu0 0.0
    %487 = vmatpush1.msra.mxu0 %v94
    %488 = vmatprep.subr.mxu0 0.0
    %489 = vmatpush1.msra.mxu0 %v93
    %490 = vmatprep.subr.mxu0 0.0
    %491 = vmatpush1.msra.mxu0 %v92
    %492 = vmatprep.subr.mxu0 0.0
    %493 = vmatpush1.msra.mxu0 %v91
    %494 = vmatprep.subr.mxu0 0.0
    %495 = vmatpush1.msra.mxu0 %v90
    %496 = vmatprep.subr.mxu0 0.0
    %497 = vmatpush1.msra.mxu0 %v89
    %498 = vmatprep.subr.mxu0 0.0
    %499 = vmatpush1.msra.mxu0 %v88
    %500 = vmatprep.subr.mxu0 0.0
    %501 = vmatpush1.msra.mxu0 %v87
    %502 = vmatprep.subr.mxu0 0.0
    %503 = vmatpush1.msra.mxu0 %v86
    %504 = vmatprep.subr.mxu0 0.0
    %505 = vmatpush1.msra.mxu0 %v85
    %506 = vmatprep.subr.mxu0 0.0
    %507 = vmatpush1.msra.mxu0 %v84
    %508 = vmatprep.subr.mxu0 0.0
    %509 = vmatpush1.msra.mxu0 %v83
    %510 = vmatprep.subr.mxu0 0.0
    %511 = vmatpush2.msra.mxu0 %v114
    %512 = vmatprep.subr.mxu0 0.0
    %513 = vmatpush2.msra.mxu0 %v113
    %514 = vmatprep.subr.mxu0 0.0
    %515 = vmatpush2.msra.mxu0 %v112
    %516 = vmatprep.subr.mxu0 0.0
    %517 = vmatpush2.msra.mxu0 %v111
    %518 = vmatprep.subr.mxu0 0.0
    %519 = vmatpush2.msra.mxu0 %v110
    %520 = vmatprep.subr.mxu0 0.0
    %521 = vmatpush2.msra.mxu0 %v109
    %522 = vmatprep.subr.mxu0 0.0
    %523 = vmatpush2.msra.mxu0 %v108
    %524 = vmatprep.subr.mxu0 0.0
    %525 = vmatpush2.msra.mxu0 %v107
    %526 = vmatprep.subr.mxu0 0.0
    %527 = vmatpush2.msra.mxu0 %v106
    %528 = vmatprep.subr.mxu0 0.0
    %529 = vmatpush2.msra.mxu0 %v105
    %530 = vmatprep.subr.mxu0 0.0
    %531 = vmatpush2.msra.mxu0 %v104
    %532 = vmatprep.subr.mxu0 0.0
    %533 = vmatpush2.msra.mxu0 %v103
    %534 = vmatprep.subr.mxu0 0.0
    %535 = vmatpush2.msra.mxu0 %v102
    %536 = vmatprep.subr.mxu0 0.0
    %537 = vmatpush2.msra.mxu0 %v101
    %538 = vmatprep.subr.mxu0 0.0
    %539 = vmatpush2.msra.mxu0 %v100
    %540 = vmatprep.subr.mxu0 0.0
    %541 = vmatpush2.msra.mxu0 %v99
    %542 = vmatprep.mubr.f32.mxu0 %v282
    %543 = vmatmul.mubr.f32.gmra.mxu0 %v274
    %v544 = vpop.f32.mrf.mxu0
    %v545 = vadd.f32 %v475, %v544
    %v546 = vpop.f32.mrf.mxu0
    %547 = vdwg.mxu0
    %548 = vmatprep.subr.mxu0 0.0
    %549 = vmatpush1.msra.mxu0 %v130
    %550 = vmatprep.subr.mxu0 0.0
    %551 = vmatpush1.msra.mxu0 %v129
    %552 = vmatprep.subr.mxu0 0.0
    %553 = vmatpush1.msra.mxu0 %v128
    %554 = vmatprep.subr.mxu0 0.0
    %555 = vmatpush1.msra.mxu0 %v127
    %556 = vmatprep.subr.mxu0 0.0
    %557 = vmatpush1.msra.mxu0 %v126
    %558 = vmatprep.subr.mxu0 0.0
    %559 = vmatpush1.msra.mxu0 %v125
    %560 = vmatprep.subr.mxu0 0.0
    %561 = vmatpush1.msra.mxu0 %v124
    %562 = vmatprep.subr.mxu0 0.0
    %563 = vmatpush1.msra.mxu0 %v123
    %564 = vmatprep.subr.mxu0 0.0
    %565 = vmatpush1.msra.mxu0 %v122
    %566 = vmatprep.subr.mxu0 0.0
    %567 = vmatpush1.msra.mxu0 %v121
    %568 = vmatprep.subr.mxu0 0.0
    %569 = vmatpush1.msra.mxu0 %v120
    %570 = vmatprep.subr.mxu0 0.0
    %571 = vmatpush1.msra.mxu0 %v119
    %572 = vmatprep.subr.mxu0 0.0
    %573 = vmatpush1.msra.mxu0 %v118
    %574 = vmatprep.subr.mxu0 0.0
    %575 = vmatpush1.msra.mxu0 %v117
    %576 = vmatprep.subr.mxu0 0.0
    %577 = vmatpush1.msra.mxu0 %v116
    %578 = vmatprep.subr.mxu0 0.0
    %579 = vmatpush1.msra.mxu0 %v115
    %580 = vmatprep.subr.mxu0 0.0
    %581 = vmatpush2.msra.mxu0 %v146
    %582 = vmatprep.subr.mxu0 0.0
    %583 = vmatpush2.msra.mxu0 %v145
    %584 = vmatprep.subr.mxu0 0.0
    %585 = vmatpush2.msra.mxu0 %v144
    %586 = vmatprep.subr.mxu0 0.0
    %587 = vmatpush2.msra.mxu0 %v143
    %588 = vmatprep.subr.mxu0 0.0
    %589 = vmatpush2.msra.mxu0 %v142
    %590 = vmatprep.subr.mxu0 0.0
    %591 = vmatpush2.msra.mxu0 %v141
    %592 = vmatprep.subr.mxu0 0.0
    %593 = vmatpush2.msra.mxu0 %v140
    %594 = vmatprep.subr.mxu0 0.0
    %595 = vmatpush2.msra.mxu0 %v139
    %596 = vmatprep.subr.mxu0 0.0
    %597 = vmatpush2.msra.mxu0 %v138
    %598 = vmatprep.subr.mxu0 0.0
    %599 = vmatpush2.msra.mxu0 %v137
    %600 = vmatprep.subr.mxu0 0.0
    %601 = vmatpush2.msra.mxu0 %v136
    %602 = vmatprep.subr.mxu0 0.0
    %603 = vmatpush2.msra.mxu0 %v135
    %604 = vmatprep.subr.mxu0 0.0
    %605 = vmatpush2.msra.mxu0 %v134
    %606 = vmatprep.subr.mxu0 0.0
    %607 = vmatpush2.msra.mxu0 %v133
    %608 = vmatprep.subr.mxu0 0.0
    %609 = vmatpush2.msra.mxu0 %v132
    %610 = vmatprep.subr.mxu0 0.0
    %611 = vmatpush2.msra.mxu0 %v131
    %612 = vmatprep.mubr.f32.mxu0 %v283
    %613 = vmatmul.mubr.f32.gmra.mxu0 %v281
    %v614 = vpop.f32.mrf.mxu0
    %v615 = vadd.f32 %v545, %v614
    %v616 = vpop.f32.mrf.mxu0
    %617 = vdwg.mxu0
    %618 = vmatprep.subr.mxu0 0.0
    %619 = vmatpush1.msra.mxu0 %v162
    %620 = vmatprep.subr.mxu0 0.0
    %621 = vmatpush1.msra.mxu0 %v161
    %622 = vmatprep.subr.mxu0 0.0
    %623 = vmatpush1.msra.mxu0 %v160
    %624 = vmatprep.subr.mxu0 0.0
    %625 = vmatpush1.msra.mxu0 %v159
    %626 = vmatprep.subr.mxu0 0.0
    %627 = vmatpush1.msra.mxu0 %v158
    %628 = vmatprep.subr.mxu0 0.0
    %629 = vmatpush1.msra.mxu0 %v157
    %630 = vmatprep.subr.mxu0 0.0
    %631 = vmatpush1.msra.mxu0 %v156
    %632 = vmatprep.subr.mxu0 0.0
    %633 = vmatpush1.msra.mxu0 %v155
    %634 = vmatprep.subr.mxu0 0.0
    %635 = vmatpush1.msra.mxu0 %v154
    %636 = vmatprep.subr.mxu0 0.0
    %637 = vmatpush1.msra.mxu0 %v153
    %638 = vmatprep.subr.mxu0 0.0
    %639 = vmatpush1.msra.mxu0 %v152
    %640 = vmatprep.subr.mxu0 0.0
    %641 = vmatpush1.msra.mxu0 %v151
    %642 = vmatprep.subr.mxu0 0.0
    %643 = vmatpush1.msra.mxu0 %v150
    %644 = vmatprep.subr.mxu0 0.0
    %645 = vmatpush1.msra.mxu0 %v149
    %646 = vmatprep.subr.mxu0 0.0
    %647 = vmatpush1.msra.mxu0 %v148
    %648 = vmatprep.subr.mxu0 0.0
    %649 = vmatpush1.msra.mxu0 %v147
    %650 = vmatprep.subr.mxu0 0.0
    %651 = vmatpush2.msra.mxu0 %v178
    %652 = vmatprep.subr.mxu0 0.0
    %653 = vmatpush2.msra.mxu0 %v177
    %654 = vmatprep.subr.mxu0 0.0
    %655 = vmatpush2.msra.mxu0 %v176
    %656 = vmatprep.subr.mxu0 0.0
    %657 = vmatpush2.msra.mxu0 %v175
    %658 = vmatprep.subr.mxu0 0.0
    %659 = vmatpush2.msra.mxu0 %v174
    %660 = vmatprep.subr.mxu0 0.0
    %661 = vmatpush2.msra.mxu0 %v173
    %662 = vmatprep.subr.mxu0 0.0
    %663 = vmatpush2.msra.mxu0 %v172
    %664 = vmatprep.subr.mxu0 0.0
    %665 = vmatpush2.msra.mxu0 %v171
    %666 = vmatprep.subr.mxu0 0.0
    %667 = vmatpush2.msra.mxu0 %v170
    %668 = vmatprep.subr.mxu0 0.0
    %669 = vmatpush2.msra.mxu0 %v169
    %670 = vmatprep.subr.mxu0 0.0
    %671 = vmatpush2.msra.mxu0 %v168
    %672 = vmatprep.subr.mxu0 0.0
    %673 = vmatpush2.msra.mxu0 %v167
    %674 = vmatprep.subr.mxu0 0.0
    %675 = vmatpush2.msra.mxu0 %v166
    %676 = vmatprep.subr.mxu0 0.0
    %677 = vmatpush2.msra.mxu0 %v165
    %678 = vmatprep.subr.mxu0 0.0
    %679 = vmatpush2.msra.mxu0 %v164
    %680 = vmatprep.subr.mxu0 0.0
    %681 = vmatpush2.msra.mxu0 %v163
    %682 = vmatprep.mubr.f32.mxu0 %v299
    %683 = vmatmul.mubr.f32.gmra.mxu0 %v291
    %v684 = vpop.f32.mrf.mxu0
    %v685 = vadd.f32 %v615, %v684
    %v686 = vpop.f32.mrf.mxu0
    %687 = vdwg.mxu0
    %688 = vmatprep.subr.mxu0 0.0
    %689 = vmatpush1.msra.mxu0 %v194
    %690 = vmatprep.subr.mxu0 0.0
    %691 = vmatpush1.msra.mxu0 %v193
    %692 = vmatprep.subr.mxu0 0.0
    %693 = vmatpush1.msra.mxu0 %v192
    %694 = vmatprep.subr.mxu0 0.0
    %695 = vmatpush1.msra.mxu0 %v191
    %696 = vmatprep.subr.mxu0 0.0
    %697 = vmatpush1.msra.mxu0 %v190
    %698 = vmatprep.subr.mxu0 0.0
    %699 = vmatpush1.msra.mxu0 %v189
    %700 = vmatprep.subr.mxu0 0.0
    %701 = vmatpush1.msra.mxu0 %v188
    %702 = vmatprep.subr.mxu0 0.0
    %703 = vmatpush1.msra.mxu0 %v187
    %704 = vmatprep.subr.mxu0 0.0
    %705 = vmatpush1.msra.mxu0 %v186
    %706 = vmatprep.subr.mxu0 0.0
    %707 = vmatpush1.msra.mxu0 %v185
    %708 = vmatprep.subr.mxu0 0.0
    %709 = vmatpush1.msra.mxu0 %v184
    %710 = vmatprep.subr.mxu0 0.0
    %711 = vmatpush1.msra.mxu0 %v183
    %712 = vmatprep.subr.mxu0 0.0
    %713 = vmatpush1.msra.mxu0 %v182
    %714 = vmatprep.subr.mxu0 0.0
    %715 = vmatpush1.msra.mxu0 %v181
    %716 = vmatprep.subr.mxu0 0.0
    %717 = vmatpush1.msra.mxu0 %v180
    %718 = vmatprep.subr.mxu0 0.0
    %719 = vmatpush1.msra.mxu0 %v179
    %720 = vmatprep.subr.mxu0 0.0
    %721 = vmatpush2.msra.mxu0 %v210
    %722 = vmatprep.subr.mxu0 0.0
    %723 = vmatpush2.msra.mxu0 %v209
    %724 = vmatprep.subr.mxu0 0.0
    %725 = vmatpush2.msra.mxu0 %v208
    %726 = vmatprep.subr.mxu0 0.0
    %727 = vmatpush2.msra.mxu0 %v207
    %728 = vmatprep.subr.mxu0 0.0
    %729 = vmatpush2.msra.mxu0 %v206
    %730 = vmatprep.subr.mxu0 0.0
    %731 = vmatpush2.msra.mxu0 %v205
    %732 = vmatprep.subr.mxu0 0.0
    %733 = vmatpush2.msra.mxu0 %v204
    %734 = vmatprep.subr.mxu0 0.0
    %735 = vmatpush2.msra.mxu0 %v203
    %736 = vmatprep.subr.mxu0 0.0
    %737 = vmatpush2.msra.mxu0 %v202
    %738 = vmatprep.subr.mxu0 0.0
    %739 = vmatpush2.msra.mxu0 %v201
    %740 = vmatprep.subr.mxu0 0.0
    %741 = vmatpush2.msra.mxu0 %v200
    %742 = vmatprep.subr.mxu0 0.0
    %743 = vmatpush2.msra.mxu0 %v199
    %744 = vmatprep.subr.mxu0 0.0
    %745 = vmatpush2.msra.mxu0 %v198
    %746 = vmatprep.subr.mxu0 0.0
    %747 = vmatpush2.msra.mxu0 %v197
    %748 = vmatprep.subr.mxu0 0.0
    %749 = vmatpush2.msra.mxu0 %v196
    %750 = vmatprep.subr.mxu0 0.0
    %751 = vmatpush2.msra.mxu0 %v195
    %752 = vmatprep.mubr.f32.mxu0 %v300
    %753 = vmatmul.mubr.f32.gmra.mxu0 %v298
    %v754 = vpop.f32.mrf.mxu0
    %v755 = vadd.f32 %v685, %v754
    %v756 = vpop.f32.mrf.mxu0
    %757 = vdwg.mxu0
    %758 = vmatprep.subr.mxu0 0.0
    %759 = vmatpush1.msra.mxu0 %v226
    %760 = vmatprep.subr.mxu0 0.0
    %761 = vmatpush1.msra.mxu0 %v225
    %762 = vmatprep.subr.mxu0 0.0
    %763 = vmatpush1.msra.mxu0 %v224
    %764 = vmatprep.subr.mxu0 0.0
    %765 = vmatpush1.msra.mxu0 %v223
    %766 = vmatprep.subr.mxu0 0.0
    %767 = vmatpush1.msra.mxu0 %v222
    %768 = vmatprep.subr.mxu0 0.0
    %769 = vmatpush1.msra.mxu0 %v221
    %770 = vmatprep.subr.mxu0 0.0
    %771 = vmatpush1.msra.mxu0 %v220
    %772 = vmatprep.subr.mxu0 0.0
    %773 = vmatpush1.msra.mxu0 %v219
    %774 = vmatprep.subr.mxu0 0.0
    %775 = vmatpush1.msra.mxu0 %v218
    %776 = vmatprep.subr.mxu0 0.0
    %777 = vmatpush1.msra.mxu0 %v217
    %778 = vmatprep.subr.mxu0 0.0
    %779 = vmatpush1.msra.mxu0 %v216
    %780 = vmatprep.subr.mxu0 0.0
    %781 = vmatpush1.msra.mxu0 %v215
    %782 = vmatprep.subr.mxu0 0.0
    %783 = vmatpush1.msra.mxu0 %v214
    %784 = vmatprep.subr.mxu0 0.0
    %785 = vmatpush1.msra.mxu0 %v213
    %786 = vmatprep.subr.mxu0 0.0
    %787 = vmatpush1.msra.mxu0 %v212
    %788 = vmatprep.subr.mxu0 0.0
    %789 = vmatpush1.msra.mxu0 %v211
    %790 = vmatprep.subr.mxu0 0.0
    %791 = vmatpush2.msra.mxu0 %v242
    %792 = vmatprep.subr.mxu0 0.0
    %793 = vmatpush2.msra.mxu0 %v241
    %794 = vmatprep.subr.mxu0 0.0
    %795 = vmatpush2.msra.mxu0 %v240
    %796 = vmatprep.subr.mxu0 0.0
    %797 = vmatpush2.msra.mxu0 %v239
    %798 = vmatprep.subr.mxu0 0.0
    %799 = vmatpush2.msra.mxu0 %v238
    %800 = vmatprep.subr.mxu0 0.0
    %801 = vmatpush2.msra.mxu0 %v237
    %802 = vmatprep.subr.mxu0 0.0
    %803 = vmatpush2.msra.mxu0 %v236
    %804 = vmatprep.subr.mxu0 0.0
    %805 = vmatpush2.msra.mxu0 %v235
    %806 = vmatprep.subr.mxu0 0.0
    %807 = vmatpush2.msra.mxu0 %v234
    %808 = vmatprep.subr.mxu0 0.0
    %809 = vmatpush2.msra.mxu0 %v233
    %810 = vmatprep.subr.mxu0 0.0
    %811 = vmatpush2.msra.mxu0 %v232
    %812 = vmatprep.subr.mxu0 0.0
    %813 = vmatpush2.msra.mxu0 %v231
    %814 = vmatprep.subr.mxu0 0.0
    %815 = vmatpush2.msra.mxu0 %v230
    %816 = vmatprep.subr.mxu0 0.0
    %817 = vmatpush2.msra.mxu0 %v229
    %818 = vmatprep.subr.mxu0 0.0
    %819 = vmatpush2.msra.mxu0 %v228
    %820 = vmatprep.subr.mxu0 0.0
    %821 = vmatpush2.msra.mxu0 %v227
    %822 = vmatprep.mubr.f32.mxu0 %v316
    %823 = vmatmul.mubr.f32.gmra.mxu0 %v308
    %v824 = vpop.f32.mrf.mxu0
    %v825 = vadd.f32 %v755, %v824
    %v826 = vpop.f32.mrf.mxu0
    %827 = vdwg.mxu0
    %828 = vmatprep.subr.mxu0 0.0
    %829 = vmatpush1.msra.mxu0 0.0
    %830 = vmatprep.subr.mxu0 0.0
    %831 = vmatpush1.msra.mxu0 0.0
    %832 = vmatprep.subr.mxu0 0.0
    %833 = vmatpush1.msra.mxu0 0.0
    %834 = vmatprep.subr.mxu0 0.0
    %835 = vmatpush1.msra.mxu0 0.0
    %836 = vmatprep.subr.mxu0 0.0
    %837 = vmatpush1.msra.mxu0 0.0
    %838 = vmatprep.subr.mxu0 0.0
    %839 = vmatpush1.msra.mxu0 0.0
    %840 = vmatprep.subr.mxu0 0.0
    %841 = vmatpush1.msra.mxu0 0.0
    %842 = vmatprep.subr.mxu0 0.0
    %843 = vmatpush1.msra.mxu0 0.0
    %844 = vmatprep.subr.mxu0 0.0
    %845 = vmatpush1.msra.mxu0 0.0
    %846 = vmatprep.subr.mxu0 0.0
    %847 = vmatpush1.msra.mxu0 0.0
    %848 = vmatprep.subr.mxu0 0.0
    %849 = vmatpush1.msra.mxu0 0.0
    %850 = vmatprep.subr.mxu0 0.0
    %851 = vmatpush1.msra.mxu0 0.0
    %852 = vmatprep.subr.mxu0 0.0
    %853 = vmatpush1.msra.mxu0 0.0
    %854 = vmatprep.subr.mxu0 0.0
    %855 = vmatpush1.msra.mxu0 %v336
    %856 = vmatprep.subr.mxu0 0.0
    %857 = vmatpush1.msra.mxu0 %v244
    %858 = vmatprep.subr.mxu0 0.0
    %859 = vmatpush1.msra.mxu0 %v243
    %860 = vmatprep.subr.mxu0 0.0
    %861 = vmatpush2.msra.mxu0 0.0
    %862 = vmatprep.subr.mxu0 0.0
    %863 = vmatpush2.msra.mxu0 0.0
    %864 = vmatprep.subr.mxu0 0.0
    %865 = vmatpush2.msra.mxu0 0.0
    %866 = vmatprep.subr.mxu0 0.0
    %867 = vmatpush2.msra.mxu0 0.0
    %868 = vmatprep.subr.mxu0 0.0
    %869 = vmatpush2.msra.mxu0 0.0
    %870 = vmatprep.subr.mxu0 0.0
    %871 = vmatpush2.msra.mxu0 0.0
    %872 = vmatprep.subr.mxu0 0.0
    %873 = vmatpush2.msra.mxu0 0.0
    %874 = vmatprep.subr.mxu0 0.0
    %875 = vmatpush2.msra.mxu0 0.0
    %876 = vmatprep.subr.mxu0 0.0
    %877 = vmatpush2.msra.mxu0 0.0
    %878 = vmatprep.subr.mxu0 0.0
    %879 = vmatpush2.msra.mxu0 0.0
    %880 = vmatprep.subr.mxu0 0.0
    %881 = vmatpush2.msra.mxu0 0.0
    %882 = vmatprep.subr.mxu0 0.0
    %883 = vmatpush2.msra.mxu0 0.0
    %884 = vmatprep.subr.mxu0 0.0
    %885 = vmatpush2.msra.mxu0 0.0
    %886 = vmatprep.subr.mxu0 0.0
    %887 = vmatpush2.msra.mxu0 0.0
    %888 = vmatprep.subr.mxu0 0.0
    %889 = vmatpush2.msra.mxu0 0.0
    %890 = vmatprep.subr.mxu0 0.0
    %891 = vmatpush2.msra.mxu0 0.0
    %892 = vmatprep.mubr.f32.mxu0 0.0
    %893 = vmatmul.mubr.f32.gmra.mxu0 %v332
    %v894 = vpop.f32.mrf.mxu0
    %v895 = vadd.f32 %v825, %v894
    %v896 = vpop.f32.mrf.mxu0
    %897 = vdwg.mxu0
    %v898 = vmax.f32 %v895, 0.0
    %v899 = vld [vmem:[%s2] sm:$0xff]
    %v900 = vld [vmem:[%s2 + $0x8] sm:$0xff]
    %v901 = vld [vmem:[%s2 + $0x10] sm:$0xff]
    %v902 = vld [vmem:[%s2 + $0x18] sm:$0xff]
    %v903 = vld [vmem:[%s2 + $0x20] sm:$0xff]
    %v904 = vld [vmem:[%s2 + $0x28] sm:$0xff]
    %v905 = vld [vmem:[%s2 + $0x30] sm:$0xff]
    %v906 = vld [vmem:[%s2 + $0x38] sm:$0xff]
    %vm907 = vcmask 523264
    %v909 = vsel %vm907, %v898, 0
    %911 = vmatprep.subr.mxu0 0.0
    %912 = vmatpush1.msra.mxu0 0.0
    %913 = vmatprep.subr.mxu0 0.0
    %914 = vmatpush1.msra.mxu0 0.0
    %915 = vmatprep.subr.mxu0 0.0
    %916 = vmatpush1.msra.mxu0 0.0
    %917 = vmatprep.subr.mxu0 0.0
    %918 = vmatpush1.msra.mxu0 0.0
    %919 = vmatprep.subr.mxu0 0.0
    %920 = vmatpush1.msra.mxu0 0.0
    %921 = vmatprep.subr.mxu0 0.0
    %922 = vmatpush1.msra.mxu0 0.0
    %923 = vmatprep.subr.mxu0 0.0
    %924 = vmatpush1.msra.mxu0 0.0
    %925 = vmatprep.subr.mxu0 0.0
    %926 = vmatpush1.msra.mxu0 0.0
    %927 = vmatprep.subr.mxu0 0.0
    %928 = vmatpush1.msra.mxu0 %v906
    %929 = vmatprep.subr.mxu0 0.0
    %930 = vmatpush1.msra.mxu0 %v905
    %931 = vmatprep.subr.mxu0 0.0
    %932 = vmatpush1.msra.mxu0 %v904
    %933 = vmatprep.subr.mxu0 0.0
    %934 = vmatpush1.msra.mxu0 %v903
    %935 = vmatprep.subr.mxu0 0.0
    %936 = vmatpush1.msra.mxu0 %v902
    %937 = vmatprep.subr.mxu0 0.0
    %938 = vmatpush1.msra.mxu0 %v901
    %939 = vmatprep.subr.mxu0 0.0
    %940 = vmatpush1.msra.mxu0 %v900
    %941 = vmatprep.subr.mxu0 0.0
    %942 = vmatpush1.msra.mxu0 %v899
    %943 = vmatprep.subr.mxu0 0.0
    %944 = vmatpush2.msra.mxu0 0.0
    %945 = vmatprep.subr.mxu0 0.0
    %946 = vmatpush2.msra.mxu0 0.0
    %947 = vmatprep.subr.mxu0 0.0
    %948 = vmatpush2.msra.mxu0 0.0
    %949 = vmatprep.subr.mxu0 0.0
    %950 = vmatpush2.msra.mxu0 0.0
    %951 = vmatprep.subr.mxu0 0.0
    %952 = vmatpush2.msra.mxu0 0.0
    %953 = vmatprep.subr.mxu0 0.0
    %954 = vmatpush2.msra.mxu0 0.0
    %955 = vmatprep.subr.mxu0 0.0
    %956 = vmatpush2.msra.mxu0 0.0
    %957 = vmatprep.subr.mxu0 0.0
    %958 = vmatpush2.msra.mxu0 0.0
    %959 = vmatprep.subr.mxu0 0.0
    %960 = vmatpush2.msra.mxu0 0.0
    %961 = vmatprep.subr.mxu0 0.0
    %962 = vmatpush2.msra.mxu0 0.0
    %963 = vmatprep.subr.mxu0 0.0
    %964 = vmatpush2.msra.mxu0 0.0
    %965 = vmatprep.subr.mxu0 0.0
    %966 = vmatpush2.msra.mxu0 0.0
    %967 = vmatprep.subr.mxu0 0.0
    %968 = vmatpush2.msra.mxu0 0.0
    %969 = vmatprep.subr.mxu0 0.0
    %970 = vmatpush2.msra.mxu0 0.0
    %971 = vmatprep.subr.mxu0 0.0
    %972 = vmatpush2.msra.mxu0 0.0
    %973 = vmatprep.subr.mxu0 0.0
    %974 = vmatpush2.msra.mxu0 0.0
    %975 = vmatprep.mubr.f32.mxu0 0.0
    %976 = vmatmul.mubr.f32.gmra.mxu0 %v909
    %v977 = vpop.f32.mrf.mxu0
    %v978 = vadd.f32 0.0, %v977
    %v979 = vpop.f32.mrf.mxu0
    %980 = vdwg.mxu0
    %vm981 = vcmask 254976
    %982 = vst.msk [vmem:[#allocation2] sm:$0x3] %vm981, %v978
    // Predicated region
    $region14: #{mhdpa_relation_network_forward.3} parent=1 // pred_check
      _
    $region15: #{mhdpa_relation_network_forward.3} parent=1 // pred_check_branch
      %984 = sbr.rel (0) target = $region17
    $region16: #{mhdpa_relation_network_forward.3} parent=1 // pred_region
      %s986 = ssub.s32 32, 32
      %987 = vsyncadd [#allocation3], %s986
      %s989 = sshll.u32 [#allocation2], 4
      %s990 = int_to_ptr.vmem [resolvable:$true] %s989
      %992 = dma.vmem_to_hbm [thread:$0]  %s990, 32, %s3, [#allocation3]
    $region17: #{mhdpa_relation_network_forward.3} parent=1 // pred_fallthru
      _
    // Predicated region
    $region18: #{mhdpa_relation_network_forward.3} parent=1 // pred_check
      _
    $region19: #{mhdpa_relation_network_forward.3} parent=1 // pred_check_branch
      %994 = sbr.rel (0) target = $region21
    $region20: #{mhdpa_relation_network_forward.3} parent=1 // pred_region
      %995 = dma.done [#allocation3], 32
    $region21: #{mhdpa_relation_network_forward.3} parent=1 // pred_fallthru
      _
    %996 = vsyncpa [#allocation3], 1

// kernel: mhdpa_relation_network_forward.2
$region0: #{mhdpa_relation_network_forward.2}
  #allocation0 [shape = 'u32[]', space=smem, size = 0x4, offset = 0x4, fixed_abs, tag = 'smem constant byte address 0x4 - core index']
  #allocation1 [shape = 'u32[144,128]{1,0:T(1,128)}', space=vmem, size = 0x12000, scoped, tag = 'internal scratch']
  %s0 = inlined_call_operand.vmem [shape: f32[98,37], index: 0, kind: input, shape index: {}]
  %s1 = inlined_call_operand.vmem [shape: f32[37,288], index: 1, kind: input, shape index: {}]
  %s2 = inlined_call_operand.vmem [shape: f32[96,64], index: 2, kind: input, shape index: {}]
  %s3 = inlined_call_operand.vmem [shape: f32[64,64], index: 3, kind: input, shape index: {}]
  %s4 = inlined_call_operand.vmem [shape: f32[64,37], index: 4, kind: input, shape index: {}]
  %s5 = inlined_call_operand.vmem [shape: f32[98,98], index: 5, kind: input, shape index: {}]
  %s6 = inlined_call_operand.vmem [shape: f32[98,1], index: 6, kind: input, shape index: {}]
  %s7 = inlined_call_operand.vmem [shape: f32[98,1], index: 7, kind: input, shape index: {}]
  %s8 = inlined_call_operand.vmem [shape: f32[98,37], index: 8, kind: output, shape index: {}]
  %s9 = sld [smem:[#allocation0]]
  $region42: #{mhdpa_relation_network_forward.2} parent=0
    _
  %s11 = ssub.s32 1, %s9
  %s12 = scalar_select 0, %s11, %s9
  // Predicated region
  $region2: #{mhdpa_relation_network_forward.2} parent=0 // pred_check
    _
  $region3: #{mhdpa_relation_network_forward.2} parent=0 // pred_check_branch
    %14 = sbr.rel (0) target = $region5
  $region4: #{mhdpa_relation_network_forward.2} parent=0 // pred_region
    _
  $region5: #{mhdpa_relation_network_forward.2} parent=0 // pred_fallthru
    _
  // Predicated region
  $region6: #{mhdpa_relation_network_forward.2} parent=0 // pred_check
    _
  $region7: #{mhdpa_relation_network_forward.2} parent=0 // pred_check_branch
    %16 = sbr.rel (0) target = $region9
  $region8: #{mhdpa_relation_network_forward.2} parent=0 // pred_region
    _
  $region9: #{mhdpa_relation_network_forward.2} parent=0 // pred_fallthru
    _
  // Predicated region
  $region10: #{mhdpa_relation_network_forward.2} parent=0 // pred_check
    _
  $region11: #{mhdpa_relation_network_forward.2} parent=0 // pred_check_branch
    %18 = sbr.rel (0) target = $region13
  $region12: #{mhdpa_relation_network_forward.2} parent=0 // pred_region
    _
  $region13: #{mhdpa_relation_network_forward.2} parent=0 // pred_fallthru
    _
  // Predicated region
  $region14: #{mhdpa_relation_network_forward.2} parent=0 // pred_check
    _
  $region15: #{mhdpa_relation_network_forward.2} parent=0 // pred_check_branch
    %20 = sbr.rel (0) target = $region17
  $region16: #{mhdpa_relation_network_forward.2} parent=0 // pred_region
    _
  $region17: #{mhdpa_relation_network_forward.2} parent=0 // pred_fallthru
    _
  // Predicated region
  $region18: #{mhdpa_relation_network_forward.2} parent=0 // pred_check
    _
  $region19: #{mhdpa_relation_network_forward.2} parent=0 // pred_check_branch
    %22 = sbr.rel (0) target = $region21
  $region20: #{mhdpa_relation_network_forward.2} parent=0 // pred_region
    _
  $region21: #{mhdpa_relation_network_forward.2} parent=0 // pred_fallthru
    _
  // Predicated region
  $region22: #{mhdpa_relation_network_forward.2} parent=0 // pred_check
    _
  $region23: #{mhdpa_relation_network_forward.2} parent=0 // pred_check_branch
    %24 = sbr.rel (0) target = $region25
  $region24: #{mhdpa_relation_network_forward.2} parent=0 // pred_region
    _
  $region25: #{mhdpa_relation_network_forward.2} parent=0 // pred_fallthru
    _
  // Predicated region
  $region26: #{mhdpa_relation_network_forward.2} parent=0 // pred_check
    _
  $region27: #{mhdpa_relation_network_forward.2} parent=0 // pred_check_branch
    %26 = sbr.rel (0) target = $region29
  $region28: #{mhdpa_relation_network_forward.2} parent=0 // pred_region
    _
  $region29: #{mhdpa_relation_network_forward.2} parent=0 // pred_fallthru
    _
  // Predicated region
  $region30: #{mhdpa_relation_network_forward.2} parent=0 // pred_check
    _
  $region31: #{mhdpa_relation_network_forward.2} parent=0 // pred_check_branch
    %28 = sbr.rel (0) target = $region33
  $region32: #{mhdpa_relation_network_forward.2} parent=0 // pred_region
    _
  $region33: #{mhdpa_relation_network_forward.2} parent=0 // pred_fallthru
    _
  %v29 = vld [vmem:[%s0] sm:$0xff]
  %v30 = vld [vmem:[%s0 + $0x8] sm:$0xff]
  %v31 = vld [vmem:[%s0 + $0x10] sm:$0xff]
  %v32 = vld [vmem:[%s0 + $0x18] sm:$0xff]
  %v33 = vld [vmem:[%s0 + $0x20] sm:$0xff]
  %v34 = vld [vmem:[%s0 + $0x28] sm:$0xff]
  %v35 = vld [vmem:[%s0 + $0x30] sm:$0xff]
  %v36 = vld [vmem:[%s0 + $0x38] sm:$0xff]
  %v37 = vld [vmem:[%s0 + $0x40] sm:$0xff]
  %v38 = vld [vmem:[%s0 + $0x48] sm:$0xff]
  %v39 = vld [vmem:[%s0 + $0x50] sm:$0xff]
  %v40 = vld [vmem:[%s0 + $0x58] sm:$0xff]
  %v41 = vld [vmem:[%s0 + $0x60] sm:$0x3]
  %v42 = vld [vmem:[%s1] sm:$0xff]
  %v43 = vld [vmem:[%s1 + $0x8] sm:$0xff]
  %v44 = vld [vmem:[%s1 + $0x10] sm:$0xff]
  %v45 = vld [vmem:[%s1 + $0x18] sm:$0xff]
  %v46 = vld [vmem:[%s1 + $0x20] sm:$0xff]
  %v47 = vld [vmem:[%s1 + $0x28] sm:$0xff]
  %v48 = vld [vmem:[%s1 + $0x30] sm:$0xff]
  %v49 = vld [vmem:[%s1 + $0x38] sm:$0xff]
  %v50 = vld [vmem:[%s1 + $0x40] sm:$0xff]
  %v51 = vld [vmem:[%s1 + $0x48] sm:$0xff]
  %v52 = vld [vmem:[%s1 + $0x50] sm:$0xff]
  %v53 = vld [vmem:[%s1 + $0x58] sm:$0xff]
  %v54 = vld [vmem:[%s1 + $0x60] sm:$0x1f]
  %v55 = vld [vmem:[%s1 + $0x68] sm:$0x1f]
  %v56 = vld [vmem:[%s1 + $0x70] sm:$0x1f]
  %v57 = vld [vmem:[%s2] sm:$0xff]
  %v58 = vld [vmem:[%s2 + $0x8] sm:$0xff]
  %v59 = vld [vmem:[%s2 + $0x10] sm:$0xff]
  %v60 = vld [vmem:[%s2 + $0x18] sm:$0xff]
  %v61 = vld [vmem:[%s2 + $0x20] sm:$0xff]
  %v62 = vld [vmem:[%s2 + $0x28] sm:$0xff]
  %v63 = vld [vmem:[%s2 + $0x30] sm:$0xff]
  %v64 = vld [vmem:[%s2 + $0x38] sm:$0xff]
  %v65 = vld [vmem:[%s2 + $0x40] sm:$0xff]
  %v66 = vld [vmem:[%s2 + $0x48] sm:$0xff]
  %v67 = vld [vmem:[%s2 + $0x50] sm:$0xff]
  %v68 = vld [vmem:[%s2 + $0x58] sm:$0xff]
  %v69 = vld [vmem:[%s3] sm:$0xff]
  %v70 = vld [vmem:[%s3 + $0x8] sm:$0xff]
  %v71 = vld [vmem:[%s3 + $0x10] sm:$0xff]
  %v72 = vld [vmem:[%s3 + $0x18] sm:$0xff]
  %v73 = vld [vmem:[%s3 + $0x20] sm:$0xff]
  %v74 = vld [vmem:[%s3 + $0x28] sm:$0xff]
  %v75 = vld [vmem:[%s3 + $0x30] sm:$0xff]
  %v76 = vld [vmem:[%s3 + $0x38] sm:$0xff]
  %v77 = vld [vmem:[%s4] sm:$0xff]
  %v78 = vld [vmem:[%s4 + $0x8] sm:$0xff]
  %v79 = vld [vmem:[%s4 + $0x10] sm:$0xff]
  %v80 = vld [vmem:[%s4 + $0x18] sm:$0xff]
  %v81 = vld [vmem:[%s4 + $0x20] sm:$0xff]
  %v82 = vld [vmem:[%s4 + $0x28] sm:$0xff]
  %v83 = vld [vmem:[%s4 + $0x30] sm:$0xff]
  %v84 = vld [vmem:[%s4 + $0x38] sm:$0xff]
  %v85 = vld [vmem:[%s5] sm:$0xff]
  %v86 = vld [vmem:[%s5 + $0x8] sm:$0xff]
  %v87 = vld [vmem:[%s5 + $0x10] sm:$0xff]
  %v88 = vld [vmem:[%s5 + $0x18] sm:$0xff]
  %v89 = vld [vmem:[%s5 + $0x20] sm:$0xff]
  %v90 = vld [vmem:[%s5 + $0x28] sm:$0xff]
  %v91 = vld [vmem:[%s5 + $0x30] sm:$0xff]
  %v92 = vld [vmem:[%s5 + $0x38] sm:$0xff]
  %v93 = vld [vmem:[%s5 + $0x40] sm:$0xff]
  %v94 = vld [vmem:[%s5 + $0x48] sm:$0xff]
  %v95 = vld [vmem:[%s5 + $0x50] sm:$0xff]
  %v96 = vld [vmem:[%s5 + $0x58] sm:$0xff]
  %v97 = vld [vmem:[%s5 + $0x60] sm:$0x3]
  %v98 = vld [vmem:[%s6] sm:$0xff]
  %v99 = vld [vmem:[%s6 + $0x8] sm:$0xff]
  %v100 = vld [vmem:[%s6 + $0x10] sm:$0xff]
  %v101 = vld [vmem:[%s6 + $0x18] sm:$0xff]
  %v102 = vld [vmem:[%s6 + $0x20] sm:$0xff]
  %v103 = vld [vmem:[%s6 + $0x28] sm:$0xff]
  %v104 = vld [vmem:[%s6 + $0x30] sm:$0xff]
  %v105 = vld [vmem:[%s6 + $0x38] sm:$0xff]
  %v106 = vld [vmem:[%s6 + $0x40] sm:$0xff]
  %v107 = vld [vmem:[%s6 + $0x48] sm:$0xff]
  %v108 = vld [vmem:[%s6 + $0x50] sm:$0xff]
  %v109 = vld [vmem:[%s6 + $0x58] sm:$0xff]
  %v110 = vld [vmem:[%s6 + $0x60] sm:$0x3]
  %v111 = vld [vmem:[%s7] sm:$0xff]
  %v112 = vld [vmem:[%s7 + $0x8] sm:$0xff]
  %v113 = vld [vmem:[%s7 + $0x10] sm:$0xff]
  %v114 = vld [vmem:[%s7 + $0x18] sm:$0xff]
  %v115 = vld [vmem:[%s7 + $0x20] sm:$0xff]
  %v116 = vld [vmem:[%s7 + $0x28] sm:$0xff]
  %v117 = vld [vmem:[%s7 + $0x30] sm:$0xff]
  %v118 = vld [vmem:[%s7 + $0x38] sm:$0xff]
  %v119 = vld [vmem:[%s7 + $0x40] sm:$0xff]
  %v120 = vld [vmem:[%s7 + $0x48] sm:$0xff]
  %v121 = vld [vmem:[%s7 + $0x50] sm:$0xff]
  %v122 = vld [vmem:[%s7 + $0x58] sm:$0xff]
  %v123 = vld [vmem:[%s7 + $0x60] sm:$0x3]
  %vm124 = vcmask 302080
  %v126 = vsel %vm124, %v29, 0
  %v129 = vsel %vm124, %v30, 0
  %v132 = vsel %vm124, %v31, 0
  %v135 = vsel %vm124, %v32, 0
  %v138 = vsel %vm124, %v33, 0
  %v141 = vsel %vm124, %v34, 0
  %v144 = vsel %vm124, %v35, 0
  %v147 = vsel %vm124, %v36, 0
  %v150 = vsel %vm124, %v37, 0
  %v153 = vsel %vm124, %v38, 0
  %v156 = vsel %vm124, %v39, 0
  %v159 = vsel %vm124, %v40, 0
  %v162 = vsel %vm124, %v41, 0
  %vm164 = vcmask 1044480
  %v166 = vsel %vm164, %v54, 0
  %v169 = vsel %vm164, %v55, 0
  %v172 = vsel %vm164, %v56, 0
  %174 = vmatprep.subr.mxu0 0.0
  %175 = vmatpush1.msra.mxu0 0.0
  %176 = vmatprep.subr.mxu0 0.0
  %177 = vmatpush1.msra.mxu0 0.0
  %178 = vmatprep.subr.mxu0 0.0
  %179 = vmatpush1.msra.mxu0 0.0
  %180 = vmatprep.subr.mxu0 0.0
  %181 = vmatpush1.msra.mxu0 0.0
  %182 = vmatprep.subr.mxu0 0.0
  %183 = vmatpush1.msra.mxu0 0.0
  %184 = vmatprep.subr.mxu0 0.0
  %185 = vmatpush1.msra.mxu0 0.0
  %186 = vmatprep.subr.mxu0 0.0
  %187 = vmatpush1.msra.mxu0 0.0
  %188 = vmatprep.subr.mxu0 0.0
  %189 = vmatpush1.msra.mxu0 0.0
  %190 = vmatprep.subr.mxu0 0.0
  %191 = vmatpush1.msra.mxu0 0.0
  %192 = vmatprep.subr.mxu0 0.0
  %193 = vmatpush1.msra.mxu0 0.0
  %194 = vmatprep.subr.mxu0 0.0
  %195 = vmatpush1.msra.mxu0 0.0
  %196 = vmatprep.subr.mxu0 %v169
  %197 = vmatpush1.msra.mxu0 %v166
  %198 = vmatprep.subr.mxu0 %v52
  %199 = vmatpush1.msra.mxu0 %v51
  %200 = vmatprep.subr.mxu0 %v49
  %201 = vmatpush1.msra.mxu0 %v48
  %202 = vmatprep.subr.mxu0 %v46
  %203 = vmatpush1.msra.mxu0 %v45
  %204 = vmatprep.subr.mxu0 %v43
  %205 = vmatpush1.msra.mxu0 %v42
  %206 = vmatprep.subr.mxu0 0.0
  %207 = vmatpush2.msra.mxu0 0.0
  %208 = vmatprep.subr.mxu0 0.0
  %209 = vmatpush2.msra.mxu0 0.0
  %210 = vmatprep.subr.mxu0 0.0
  %211 = vmatpush2.msra.mxu0 0.0
  %212 = vmatprep.subr.mxu0 0.0
  %213 = vmatpush2.msra.mxu0 0.0
  %214 = vmatprep.subr.mxu0 0.0
  %215 = vmatpush2.msra.mxu0 0.0
  %216 = vmatprep.subr.mxu0 0.0
  %217 = vmatpush2.msra.mxu0 0.0
  %218 = vmatprep.subr.mxu0 0.0
  %219 = vmatpush2.msra.mxu0 0.0
  %220 = vmatprep.subr.mxu0 0.0
  %221 = vmatpush2.msra.mxu0 0.0
  %222 = vmatprep.subr.mxu0 0.0
  %223 = vmatpush2.msra.mxu0 0.0
  %224 = vmatprep.subr.mxu0 0.0
  %225 = vmatpush2.msra.mxu0 0.0
  %226 = vmatprep.subr.mxu0 0.0
  %227 = vmatpush2.msra.mxu0 0.0
  %228 = vmatprep.subr.mxu0 0.0
  %229 = vmatpush2.msra.mxu0 0.0
  %230 = vmatprep.subr.mxu0 0.0
  %231 = vmatpush2.msra.mxu0 0.0
  %232 = vmatprep.subr.mxu0 0.0
  %233 = vmatpush2.msra.mxu0 0.0
  %234 = vmatprep.subr.mxu0 0.0
  %235 = vmatpush2.msra.mxu0 0.0
  %236 = vmatprep.subr.mxu0 0.0
  %237 = vmatpush2.msra.mxu0 0.0
  %238 = vmatprep.mubr.f32.mxu0 0.0
  %239 = vmatmul.mubr.f32.gmra.mxu0 %v126
  %v240 = vpop.f32.mrf.mxu0
  %v241 = vadd.f32 0.0, %v240
  %v242 = vpop.f32.mrf.mxu0
  %v243 = vadd.f32 0.0, %v242
  %244 = vmatprep.mubr.f32.mxu0 0.0
  %245 = vmatmul.mubr.f32.gmra.mxu0 %v129
  %v246 = vpop.f32.mrf.mxu0
  %v247 = vadd.f32 0.0, %v246
  %v248 = vpop.f32.mrf.mxu0
  %v249 = vadd.f32 0.0, %v248
  %250 = vmatprep.mubr.f32.mxu0 0.0
  %251 = vmatmul.mubr.f32.gmra.mxu0 %v132
  %v252 = vpop.f32.mrf.mxu0
  %v253 = vadd.f32 0.0, %v252
  %v254 = vpop.f32.mrf.mxu0
  %v255 = vadd.f32 0.0, %v254
  %256 = vmatprep.mubr.f32.mxu0 0.0
  %257 = vmatmul.mubr.f32.gmra.mxu0 %v135
  %v258 = vpop.f32.mrf.mxu0
  %v259 = vadd.f32 0.0, %v258
  %v260 = vpop.f32.mrf.mxu0
  %v261 = vadd.f32 0.0, %v260
  %262 = vmatprep.mubr.f32.mxu0 0.0
  %263 = vmatmul.mubr.f32.gmra.mxu0 %v138
  %v264 = vpop.f32.mrf.mxu0
  %v265 = vadd.f32 0.0, %v264
  %v266 = vpop.f32.mrf.mxu0
  %v267 = vadd.f32 0.0, %v266
  %268 = vmatprep.mubr.f32.mxu0 0.0
  %269 = vmatmul.mubr.f32.gmra.mxu0 %v141
  %v270 = vpop.f32.mrf.mxu0
  %v271 = vadd.f32 0.0, %v270
  %v272 = vpop.f32.mrf.mxu0
  %v273 = vadd.f32 0.0, %v272
  %274 = vmatprep.mubr.f32.mxu0 0.0
  %275 = vmatmul.mubr.f32.gmra.mxu0 %v144
  %v276 = vpop.f32.mrf.mxu0
  %v277 = vadd.f32 0.0, %v276
  %v278 = vpop.f32.mrf.mxu0
  %v279 = vadd.f32 0.0, %v278
  %280 = vmatprep.mubr.f32.mxu0 0.0
  %281 = vmatmul.mubr.f32.gmra.mxu0 %v147
  %v282 = vpop.f32.mrf.mxu0
  %v283 = vadd.f32 0.0, %v282
  %v284 = vpop.f32.mrf.mxu0
  %v285 = vadd.f32 0.0, %v284
  %286 = vmatprep.mubr.f32.mxu0 0.0
  %287 = vmatmul.mubr.f32.gmra.mxu0 %v150
  %v288 = vpop.f32.mrf.mxu0
  %v289 = vadd.f32 0.0, %v288
  %v290 = vpop.f32.mrf.mxu0
  %v291 = vadd.f32 0.0, %v290
  %292 = vmatprep.mubr.f32.mxu0 0.0
  %293 = vmatmul.mubr.f32.gmra.mxu0 %v153
  %v294 = vpop.f32.mrf.mxu0
  %v295 = vadd.f32 0.0, %v294
  %v296 = vpop.f32.mrf.mxu0
  %v297 = vadd.f32 0.0, %v296
  %298 = vmatprep.mubr.f32.mxu0 0.0
  %299 = vmatmul.mubr.f32.gmra.mxu0 %v156
  %v300 = vpop.f32.mrf.mxu0
  %v301 = vadd.f32 0.0, %v300
  %v302 = vpop.f32.mrf.mxu0
  %v303 = vadd.f32 0.0, %v302
  %304 = vmatprep.mubr.f32.mxu0 0.0
  %305 = vmatmul.mubr.f32.gmra.mxu0 %v159
  %v306 = vpop.f32.mrf.mxu0
  %v307 = vadd.f32 0.0, %v306
  %v308 = vpop.f32.mrf.mxu0
  %v309 = vadd.f32 0.0, %v308
  %310 = vmatprep.mubr.f32.mxu0 0.0
  %311 = vmatmul.mubr.f32.gmra.mxu0 %v162
  %v312 = vpop.f32.mrf.mxu0
  %v313 = vadd.f32 0.0, %v312
  %v314 = vpop.f32.mrf.mxu0
  %v315 = vadd.f32 0.0, %v314
  %316 = vdwg.mxu0
  %317 = vmatprep.subr.mxu0 0.0
  %318 = vmatpush1.msra.mxu0 0.0
  %319 = vmatprep.subr.mxu0 0.0
  %320 = vmatpush1.msra.mxu0 0.0
  %321 = vmatprep.subr.mxu0 0.0
  %322 = vmatpush1.msra.mxu0 0.0
  %323 = vmatprep.subr.mxu0 0.0
  %324 = vmatpush1.msra.mxu0 0.0
  %325 = vmatprep.subr.mxu0 0.0
  %326 = vmatpush1.msra.mxu0 0.0
  %327 = vmatprep.subr.mxu0 0.0
  %328 = vmatpush1.msra.mxu0 0.0
  %329 = vmatprep.subr.mxu0 0.0
  %330 = vmatpush1.msra.mxu0 0.0
  %331 = vmatprep.subr.mxu0 0.0
  %332 = vmatpush1.msra.mxu0 0.0
  %333 = vmatprep.subr.mxu0 0.0
  %334 = vmatpush1.msra.mxu0 0.0
  %335 = vmatprep.subr.mxu0 0.0
  %336 = vmatpush1.msra.mxu0 0.0
  %337 = vmatprep.subr.mxu0 0.0
  %338 = vmatpush1.msra.mxu0 0.0
  %339 = vmatprep.subr.mxu0 0.0
  %340 = vmatpush1.msra.mxu0 %v172
  %341 = vmatprep.subr.mxu0 0.0
  %342 = vmatpush1.msra.mxu0 %v53
  %343 = vmatprep.subr.mxu0 0.0
  %344 = vmatpush1.msra.mxu0 %v50
  %345 = vmatprep.subr.mxu0 0.0
  %346 = vmatpush1.msra.mxu0 %v47
  %347 = vmatprep.subr.mxu0 0.0
  %348 = vmatpush1.msra.mxu0 %v44
  %349 = vmatprep.subr.mxu0 0.0
  %350 = vmatpush2.msra.mxu0 0.0
  %351 = vmatprep.subr.mxu0 0.0
  %352 = vmatpush2.msra.mxu0 0.0
  %353 = vmatprep.subr.mxu0 0.0
  %354 = vmatpush2.msra.mxu0 0.0
  %355 = vmatprep.subr.mxu0 0.0
  %356 = vmatpush2.msra.mxu0 0.0
  %357 = vmatprep.subr.mxu0 0.0
  %358 = vmatpush2.msra.mxu0 0.0
  %359 = vmatprep.subr.mxu0 0.0
  %360 = vmatpush2.msra.mxu0 0.0
  %361 = vmatprep.subr.mxu0 0.0
  %362 = vmatpush2.msra.mxu0 0.0
  %363 = vmatprep.subr.mxu0 0.0
  %364 = vmatpush2.msra.mxu0 0.0
  %365 = vmatprep.subr.mxu0 0.0
  %366 = vmatpush2.msra.mxu0 0.0
  %367 = vmatprep.subr.mxu0 0.0
  %368 = vmatpush2.msra.mxu0 0.0
  %369 = vmatprep.subr.mxu0 0.0
  %370 = vmatpush2.msra.mxu0 0.0
  %371 = vmatprep.subr.mxu0 0.0
  %372 = vmatpush2.msra.mxu0 0.0
  %373 = vmatprep.subr.mxu0 0.0
  %374 = vmatpush2.msra.mxu0 0.0
  %375 = vmatprep.subr.mxu0 0.0
  %376 = vmatpush2.msra.mxu0 0.0
  %377 = vmatprep.subr.mxu0 0.0
  %378 = vmatpush2.msra.mxu0 0.0
  %379 = vmatprep.subr.mxu0 0.0
  %380 = vmatpush2.msra.mxu0 0.0
  %381 = vmatprep.mubr.f32.mxu0 0.0
  %382 = vmatmul.mubr.f32.gmra.mxu0 %v126
  %v383 = vpop.f32.mrf.mxu0
  %v384 = vadd.f32 0.0, %v383
  %v385 = vpop.f32.mrf.mxu0
  %386 = vmatprep.mubr.f32.mxu0 0.0
  %387 = vmatmul.mubr.f32.gmra.mxu0 %v129
  %v388 = vpop.f32.mrf.mxu0
  %v389 = vadd.f32 0.0, %v388
  %v390 = vpop.f32.mrf.mxu0
  %391 = vmatprep.mubr.f32.mxu0 0.0
  %392 = vmatmul.mubr.f32.gmra.mxu0 %v132
  %v393 = vpop.f32.mrf.mxu0
  %v394 = vadd.f32 0.0, %v393
  %v395 = vpop.f32.mrf.mxu0
  %396 = vmatprep.mubr.f32.mxu0 0.0
  %397 = vmatmul.mubr.f32.gmra.mxu0 %v135
  %v398 = vpop.f32.mrf.mxu0
  %v399 = vadd.f32 0.0, %v398
  %v400 = vpop.f32.mrf.mxu0
  %401 = vmatprep.mubr.f32.mxu0 0.0
  %402 = vmatmul.mubr.f32.gmra.mxu0 %v138
  %v403 = vpop.f32.mrf.mxu0
  %v404 = vadd.f32 0.0, %v403
  %v405 = vpop.f32.mrf.mxu0
  %406 = vmatprep.mubr.f32.mxu0 0.0
  %407 = vmatmul.mubr.f32.gmra.mxu0 %v141
  %v408 = vpop.f32.mrf.mxu0
  %v409 = vadd.f32 0.0, %v408
  %v410 = vpop.f32.mrf.mxu0
  %411 = vmatprep.mubr.f32.mxu0 0.0
  %412 = vmatmul.mubr.f32.gmra.mxu0 %v144
  %v413 = vpop.f32.mrf.mxu0
  %v414 = vadd.f32 0.0, %v413
  %v415 = vpop.f32.mrf.mxu0
  %416 = vmatprep.mubr.f32.mxu0 0.0
  %417 = vmatmul.mubr.f32.gmra.mxu0 %v147
  %v418 = vpop.f32.mrf.mxu0
  %v419 = vadd.f32 0.0, %v418
  %v420 = vpop.f32.mrf.mxu0
  %421 = vmatprep.mubr.f32.mxu0 0.0
  %422 = vmatmul.mubr.f32.gmra.mxu0 %v150
  %v423 = vpop.f32.mrf.mxu0
  %v424 = vadd.f32 0.0, %v423
  %v425 = vpop.f32.mrf.mxu0
  %426 = vmatprep.mubr.f32.mxu0 0.0
  %427 = vmatmul.mubr.f32.gmra.mxu0 %v153
  %v428 = vpop.f32.mrf.mxu0
  %v429 = vadd.f32 0.0, %v428
  %v430 = vpop.f32.mrf.mxu0
  %431 = vmatprep.mubr.f32.mxu0 0.0
  %432 = vmatmul.mubr.f32.gmra.mxu0 %v156
  %v433 = vpop.f32.mrf.mxu0
  %v434 = vadd.f32 0.0, %v433
  %v435 = vpop.f32.mrf.mxu0
  %436 = vmatprep.mubr.f32.mxu0 0.0
  %437 = vmatmul.mubr.f32.gmra.mxu0 %v159
  %v438 = vpop.f32.mrf.mxu0
  %v439 = vadd.f32 0.0, %v438
  %v440 = vpop.f32.mrf.mxu0
  %441 = vmatprep.mubr.f32.mxu0 0.0
  %442 = vmatmul.mubr.f32.gmra.mxu0 %v162
  %v443 = vpop.f32.mrf.mxu0
  %v444 = vadd.f32 0.0, %v443
  %v445 = vpop.f32.mrf.mxu0
  %446 = vdwg.mxu0
  %460 = vrot.lane.b32.xlu0 %v241, 32
  %v461 = vpop.permute.xlu0 %460
  %462 = vrot.lane.b32.xlu0 %v247, 32
  %v463 = vpop.permute.xlu0 %462
  %464 = vrot.lane.b32.xlu0 %v253, 32
  %v465 = vpop.permute.xlu0 %464
  %466 = vrot.lane.b32.xlu0 %v259, 32
  %v467 = vpop.permute.xlu0 %466
  %468 = vrot.lane.b32.xlu0 %v265, 32
  %v469 = vpop.permute.xlu0 %468
  %470 = vrot.lane.b32.xlu0 %v271, 32
  %v471 = vpop.permute.xlu0 %470
  %472 = vrot.lane.b32.xlu0 %v277, 32
  %v473 = vpop.permute.xlu0 %472
  %474 = vrot.lane.b32.xlu0 %v283, 32
  %v475 = vpop.permute.xlu0 %474
  %476 = vrot.lane.b32.xlu0 %v289, 32
  %v477 = vpop.permute.xlu0 %476
  %478 = vrot.lane.b32.xlu0 %v295, 32
  %v479 = vpop.permute.xlu0 %478
  %480 = vrot.lane.b32.xlu0 %v301, 32
  %v481 = vpop.permute.xlu0 %480
  %482 = vrot.lane.b32.xlu0 %v307, 32
  %v483 = vpop.permute.xlu0 %482
  %484 = vrot.lane.b32.xlu0 %v313, 32
  %v485 = vpop.permute.xlu0 %484
  %vm486 = vcmask 261120
  %v487 = vsel %vm486, %v241, 0
  %v489 = vsel %vm486, %v247, 0
  %v491 = vsel %vm486, %v253, 0
  %v493 = vsel %vm486, %v259, 0
  %v495 = vsel %vm486, %v265, 0
  %v497 = vsel %vm486, %v271, 0
  %v499 = vsel %vm486, %v277, 0
  %v501 = vsel %vm486, %v283, 0
  %v503 = vsel %vm486, %v289, 0
  %v505 = vsel %vm486, %v295, 0
  %v507 = vsel %vm486, %v301, 0
  %v509 = vsel %vm486, %v307, 0
  %v511 = vsel %vm486, %v313, 0
  %v513 = vsel %vm486, %v461, 0
  %v515 = vsel %vm486, %v463, 0
  %v517 = vsel %vm486, %v465, 0
  %v519 = vsel %vm486, %v467, 0
  %v521 = vsel %vm486, %v469, 0
  %v523 = vsel %vm486, %v471, 0
  %v525 = vsel %vm486, %v473, 0
  %v527 = vsel %vm486, %v475, 0
  %v529 = vsel %vm486, %v477, 0
  %v531 = vsel %vm486, %v479, 0
  %v533 = vsel %vm486, %v481, 0
  %v535 = vsel %vm486, %v483, 0
  %v537 = vsel %vm486, %v485, 0
  %539 = vmatprep.subr.mxu0 0.0
  %540 = vmatpush1.xpose.msra.mxu0 0.0
  %541 = vmatprep.subr.mxu0 0.0
  %542 = vmatpush1.xpose.msra.mxu0 0.0
  %543 = vmatprep.subr.mxu0 0.0
  %544 = vmatpush1.xpose.msra.mxu0 0.0
  %545 = vmatprep.subr.mxu0 0.0
  %546 = vmatpush1.xpose.msra.mxu0 %v537
  %547 = vmatprep.subr.mxu0 0.0
  %548 = vmatpush1.xpose.msra.mxu0 %v535
  %549 = vmatprep.subr.mxu0 0.0
  %550 = vmatpush1.xpose.msra.mxu0 %v533
  %551 = vmatprep.subr.mxu0 0.0
  %552 = vmatpush1.xpose.msra.mxu0 %v531
  %553 = vmatprep.subr.mxu0 0.0
  %554 = vmatpush1.xpose.msra.mxu0 %v529
  %555 = vmatprep.subr.mxu0 0.0
  %556 = vmatpush1.xpose.msra.mxu0 %v527
  %557 = vmatprep.subr.mxu0 0.0
  %558 = vmatpush1.xpose.msra.mxu0 %v525
  %559 = vmatprep.subr.mxu0 0.0
  %560 = vmatpush1.xpose.msra.mxu0 %v523
  %561 = vmatprep.subr.mxu0 0.0
  %562 = vmatpush1.xpose.msra.mxu0 %v521
  %563 = vmatprep.subr.mxu0 0.0
  %564 = vmatpush1.xpose.msra.mxu0 %v519
  %565 = vmatprep.subr.mxu0 0.0
  %566 = vmatpush1.xpose.msra.mxu0 %v517
  %567 = vmatprep.subr.mxu0 0.0
  %568 = vmatpush1.xpose.msra.mxu0 %v515
  %569 = vmatprep.subr.mxu0 0.0
  %570 = vmatpush1.xpose.msra.mxu0 %v513
  %571 = vmatprep.subr.mxu0 0.0
  %572 = vmatpush2.xpose.msra.mxu0 0.0
  %573 = vmatprep.subr.mxu0 0.0
  %574 = vmatpush2.xpose.msra.mxu0 0.0
  %575 = vmatprep.subr.mxu0 0.0
  %576 = vmatpush2.xpose.msra.mxu0 0.0
  %577 = vmatprep.subr.mxu0 0.0
  %578 = vmatpush2.xpose.msra.mxu0 0.0
  %579 = vmatprep.subr.mxu0 0.0
  %580 = vmatpush2.xpose.msra.mxu0 0.0
  %581 = vmatprep.subr.mxu0 0.0
  %582 = vmatpush2.xpose.msra.mxu0 0.0
  %583 = vmatprep.subr.mxu0 0.0
  %584 = vmatpush2.xpose.msra.mxu0 0.0
  %585 = vmatprep.subr.mxu0 0.0
  %586 = vmatpush2.xpose.msra.mxu0 0.0
  %587 = vmatprep.subr.mxu0 0.0
  %588 = vmatpush2.xpose.msra.mxu0 0.0
  %589 = vmatprep.subr.mxu0 0.0
  %590 = vmatpush2.xpose.msra.mxu0 0.0
  %591 = vmatprep.subr.mxu0 0.0
  %592 = vmatpush2.xpose.msra.mxu0 0.0
  %593 = vmatprep.subr.mxu0 0.0
  %594 = vmatpush2.xpose.msra.mxu0 0.0
  %595 = vmatprep.subr.mxu0 0.0
  %596 = vmatpush2.xpose.msra.mxu0 0.0
  %597 = vmatprep.subr.mxu0 0.0
  %598 = vmatpush2.xpose.msra.mxu0 0.0
  %599 = vmatprep.subr.mxu0 0.0
  %600 = vmatpush2.xpose.msra.mxu0 0.0
  %601 = vmatprep.subr.mxu0 0.0
  %602 = vmatpush2.xpose.msra.mxu0 0.0
  %603 = vmatprep.mubr.f32.mxu0 0.0
  %604 = vmatmul.mubr.f32.gmra.mxu0 %v487
  %v605 = vpop.f32.mrf.mxu0
  %v606 = vadd.f32 0.0, %v605
  %v607 = vpop.f32.mrf.mxu0
  %608 = vmatprep.mubr.f32.mxu0 0.0
  %609 = vmatmul.mubr.f32.gmra.mxu0 %v489
  %v610 = vpop.f32.mrf.mxu0
  %v611 = vadd.f32 0.0, %v610
  %v612 = vpop.f32.mrf.mxu0
  %613 = vmatprep.mubr.f32.mxu0 0.0
  %614 = vmatmul.mubr.f32.gmra.mxu0 %v491
  %v615 = vpop.f32.mrf.mxu0
  %v616 = vadd.f32 0.0, %v615
  %v617 = vpop.f32.mrf.mxu0
  %618 = vmatprep.mubr.f32.mxu0 0.0
  %619 = vmatmul.mubr.f32.gmra.mxu0 %v493
  %v620 = vpop.f32.mrf.mxu0
  %v621 = vadd.f32 0.0, %v620
  %v622 = vpop.f32.mrf.mxu0
  %623 = vmatprep.mubr.f32.mxu0 0.0
  %624 = vmatmul.mubr.f32.gmra.mxu0 %v495
  %v625 = vpop.f32.mrf.mxu0
  %v626 = vadd.f32 0.0, %v625
  %v627 = vpop.f32.mrf.mxu0
  %628 = vmatprep.mubr.f32.mxu0 0.0
  %629 = vmatmul.mubr.f32.gmra.mxu0 %v497
  %v630 = vpop.f32.mrf.mxu0
  %v631 = vadd.f32 0.0, %v630
  %v632 = vpop.f32.mrf.mxu0
  %633 = vmatprep.mubr.f32.mxu0 0.0
  %634 = vmatmul.mubr.f32.gmra.mxu0 %v499
  %v635 = vpop.f32.mrf.mxu0
  %v636 = vadd.f32 0.0, %v635
  %v637 = vpop.f32.mrf.mxu0
  %638 = vmatprep.mubr.f32.mxu0 0.0
  %639 = vmatmul.mubr.f32.gmra.mxu0 %v501
  %v640 = vpop.f32.mrf.mxu0
  %v641 = vadd.f32 0.0, %v640
  %v642 = vpop.f32.mrf.mxu0
  %643 = vmatprep.mubr.f32.mxu0 0.0
  %644 = vmatmul.mubr.f32.gmra.mxu0 %v503
  %v645 = vpop.f32.mrf.mxu0
  %v646 = vadd.f32 0.0, %v645
  %v647 = vpop.f32.mrf.mxu0
  %648 = vmatprep.mubr.f32.mxu0 0.0
  %649 = vmatmul.mubr.f32.gmra.mxu0 %v505
  %v650 = vpop.f32.mrf.mxu0
  %v651 = vadd.f32 0.0, %v650
  %v652 = vpop.f32.mrf.mxu0
  %653 = vmatprep.mubr.f32.mxu0 0.0
  %654 = vmatmul.mubr.f32.gmra.mxu0 %v507
  %v655 = vpop.f32.mrf.mxu0
  %v656 = vadd.f32 0.0, %v655
  %v657 = vpop.f32.mrf.mxu0
  %658 = vmatprep.mubr.f32.mxu0 0.0
  %659 = vmatmul.mubr.f32.gmra.mxu0 %v509
  %v660 = vpop.f32.mrf.mxu0
  %v661 = vadd.f32 0.0, %v660
  %v662 = vpop.f32.mrf.mxu0
  %663 = vmatprep.mubr.f32.mxu0 0.0
  %664 = vmatmul.mubr.f32.gmra.mxu0 %v511
  %v665 = vpop.f32.mrf.mxu0
  %v666 = vadd.f32 0.0, %v665
  %v667 = vpop.f32.mrf.mxu0
  %668 = vdwg.mxu0
  %vm669 = vcmask 801792
  %v670 = vsel %vm669, %v606, -inf
  %671 = vmax.xlane.f32.xlu0 %v670
  %v672 = vpop.xlane.xlu0 %671
  %v673 = vsel %vm669, %v611, -inf
  %674 = vmax.xlane.f32.xlu0 %v673
  %v675 = vpop.xlane.xlu0 %674
  %v676 = vsel %vm669, %v616, -inf
  %677 = vmax.xlane.f32.xlu0 %v676
  %v678 = vpop.xlane.xlu0 %677
  %v679 = vsel %vm669, %v621, -inf
  %680 = vmax.xlane.f32.xlu0 %v679
  %v681 = vpop.xlane.xlu0 %680
  %v682 = vsel %vm669, %v626, -inf
  %683 = vmax.xlane.f32.xlu0 %v682
  %v684 = vpop.xlane.xlu0 %683
  %v685 = vsel %vm669, %v631, -inf
  %686 = vmax.xlane.f32.xlu0 %v685
  %v687 = vpop.xlane.xlu0 %686
  %v688 = vsel %vm669, %v636, -inf
  %689 = vmax.xlane.f32.xlu0 %v688
  %v690 = vpop.xlane.xlu0 %689
  %v691 = vsel %vm669, %v641, -inf
  %692 = vmax.xlane.f32.xlu0 %v691
  %v693 = vpop.xlane.xlu0 %692
  %v694 = vsel %vm669, %v646, -inf
  %695 = vmax.xlane.f32.xlu0 %v694
  %v696 = vpop.xlane.xlu0 %695
  %v697 = vsel %vm669, %v651, -inf
  %698 = vmax.xlane.f32.xlu0 %v697
  %v699 = vpop.xlane.xlu0 %698
  %v700 = vsel %vm669, %v656, -inf
  %701 = vmax.xlane.f32.xlu0 %v700
  %v702 = vpop.xlane.xlu0 %701
  %v703 = vsel %vm669, %v661, -inf
  %704 = vmax.xlane.f32.xlu0 %v703
  %v705 = vpop.xlane.xlu0 %704
  %vm706 = vcmask 795648
  %v707 = vsel %vm706, %v666, -inf
  %708 = vmax.xlane.f32.xlu0 %v707
  %v709 = vpop.xlane.xlu0 %708
  %v710 = vsub.f32 %v606, %v672
  %v711 = vsub.f32 %v611, %v675
  %v712 = vsub.f32 %v616, %v678
  %v713 = vsub.f32 %v621, %v681
  %v714 = vsub.f32 %v626, %v684
  %v715 = vsub.f32 %v631, %v687
  %v716 = vsub.f32 %v636, %v690
  %v717 = vsub.f32 %v641, %v693
  %v718 = vsub.f32 %v646, %v696
  %v719 = vsub.f32 %v651, %v699
  %v720 = vsub.f32 %v656, %v702
  %v721 = vsub.f32 %v661, %v705
  %v722 = vsub.f32 %v666, %v709
  %v723 = vmul.f32 %v710, 1.442695
  %v724 = vpow.pop %v723
  %v725 = vmul.f32 %v711, 1.442695
  %v726 = vpow.pop %v725
  %v727 = vmul.f32 %v712, 1.442695
  %v728 = vpow.pop %v727
  %v729 = vmul.f32 %v713, 1.442695
  %v730 = vpow.pop %v729
  %v731 = vmul.f32 %v714, 1.442695
  %v732 = vpow.pop %v731
  %v733 = vmul.f32 %v715, 1.442695
  %v734 = vpow.pop %v733
  %v735 = vmul.f32 %v716, 1.442695
  %v736 = vpow.pop %v735
  %v737 = vmul.f32 %v717, 1.442695
  %v738 = vpow.pop %v737
  %v739 = vmul.f32 %v718, 1.442695
  %v740 = vpow.pop %v739
  %v741 = vmul.f32 %v719, 1.442695
  %v742 = vpow.pop %v741
  %v743 = vmul.f32 %v720, 1.442695
  %v744 = vpow.pop %v743
  %v745 = vmul.f32 %v721, 1.442695
  %v746 = vpow.pop %v745
  %v747 = vmul.f32 %v722, 1.442695
  %v748 = vpow.pop %v747
  %v749 = vsel %vm669, %v724, 0.0
  %750 = vadd.xlane.f32.xlu0 %v749
  %v751 = vpop.xlane.xlu0 %750
  %v752 = vsel %vm669, %v726, 0.0
  %753 = vadd.xlane.f32.xlu0 %v752
  %v754 = vpop.xlane.xlu0 %753
  %v755 = vsel %vm669, %v728, 0.0
  %756 = vadd.xlane.f32.xlu0 %v755
  %v757 = vpop.xlane.xlu0 %756
  %v758 = vsel %vm669, %v730, 0.0
  %759 = vadd.xlane.f32.xlu0 %v758
  %v760 = vpop.xlane.xlu0 %759
  %v761 = vsel %vm669, %v732, 0.0
  %762 = vadd.xlane.f32.xlu0 %v761
  %v763 = vpop.xlane.xlu0 %762
  %v764 = vsel %vm669, %v734, 0.0
  %765 = vadd.xlane.f32.xlu0 %v764
  %v766 = vpop.xlane.xlu0 %765
  %v767 = vsel %vm669, %v736, 0.0
  %768 = vadd.xlane.f32.xlu0 %v767
  %v769 = vpop.xlane.xlu0 %768
  %v770 = vsel %vm669, %v738, 0.0
  %771 = vadd.xlane.f32.xlu0 %v770
  %v772 = vpop.xlane.xlu0 %771
  %v773 = vsel %vm669, %v740, 0.0
  %774 = vadd.xlane.f32.xlu0 %v773
  %v775 = vpop.xlane.xlu0 %774
  %v776 = vsel %vm669, %v742, 0.0
  %777 = vadd.xlane.f32.xlu0 %v776
  %v778 = vpop.xlane.xlu0 %777
  %v779 = vsel %vm669, %v744, 0.0
  %780 = vadd.xlane.f32.xlu0 %v779
  %v781 = vpop.xlane.xlu0 %780
  %v782 = vsel %vm669, %v746, 0.0
  %783 = vadd.xlane.f32.xlu0 %v782
  %v784 = vpop.xlane.xlu0 %783
  %v785 = vsel %vm706, %v748, 0.0
  %786 = vadd.xlane.f32.xlu0 %v785
  %v787 = vpop.xlane.xlu0 %786
  %v788 = vrcp.pop %v751
  %v789 = vrcp.pop %v754
  %v790 = vrcp.pop %v757
  %v791 = vrcp.pop %v760
  %v792 = vrcp.pop %v763
  %v793 = vrcp.pop %v766
  %v794 = vrcp.pop %v769
  %v795 = vrcp.pop %v772
  %v796 = vrcp.pop %v775
  %v797 = vrcp.pop %v778
  %v798 = vrcp.pop %v781
  %v799 = vrcp.pop %v784
  %v800 = vrcp.pop %v787
  %v801 = vmul.f32 %v724, %v788
  %v802 = vmul.f32 %v726, %v789
  %v803 = vmul.f32 %v728, %v790
  %v804 = vmul.f32 %v730, %v791
  %v805 = vmul.f32 %v732, %v792
  %v806 = vmul.f32 %v734, %v793
  %v807 = vmul.f32 %v736, %v794
  %v808 = vmul.f32 %v738, %v795
  %v809 = vmul.f32 %v740, %v796
  %v810 = vmul.f32 %v742, %v797
  %v811 = vmul.f32 %v744, %v798
  %v812 = vmul.f32 %v746, %v799
  %v813 = vmul.f32 %v748, %v800
  %827 = vrot.lane.b32.xlu0 %v243, 64
  %v828 = vpop.permute.xlu0 %827
  %829 = vrot.lane.b32.xlu0 %v249, 64
  %v830 = vpop.permute.xlu0 %829
  %831 = vrot.lane.b32.xlu0 %v255, 64
  %v832 = vpop.permute.xlu0 %831
  %833 = vrot.lane.b32.xlu0 %v261, 64
  %v834 = vpop.permute.xlu0 %833
  %835 = vrot.lane.b32.xlu0 %v267, 64
  %v836 = vpop.permute.xlu0 %835
  %837 = vrot.lane.b32.xlu0 %v273, 64
  %v838 = vpop.permute.xlu0 %837
  %839 = vrot.lane.b32.xlu0 %v279, 64
  %v840 = vpop.permute.xlu0 %839
  %841 = vrot.lane.b32.xlu0 %v285, 64
  %v842 = vpop.permute.xlu0 %841
  %843 = vrot.lane.b32.xlu0 %v291, 64
  %v844 = vpop.permute.xlu0 %843
  %845 = vrot.lane.b32.xlu0 %v297, 64
  %v846 = vpop.permute.xlu0 %845
  %847 = vrot.lane.b32.xlu0 %v303, 64
  %v848 = vpop.permute.xlu0 %847
  %849 = vrot.lane.b32.xlu0 %v309, 64
  %v850 = vpop.permute.xlu0 %849
  %851 = vrot.lane.b32.xlu0 %v315, 64
  %v852 = vpop.permute.xlu0 %851
  %v866 = vsel %vm669, %v801, 0
  %v869 = vsel %vm669, %v802, 0
  %v872 = vsel %vm669, %v803, 0
  %v875 = vsel %vm669, %v804, 0
  %v878 = vsel %vm669, %v805, 0
  %v881 = vsel %vm669, %v806, 0
  %v884 = vsel %vm669, %v807, 0
  %v887 = vsel %vm669, %v808, 0
  %v890 = vsel %vm669, %v809, 0
  %v893 = vsel %vm669, %v810, 0
  %v896 = vsel %vm669, %v811, 0
  %v899 = vsel %vm669, %v812, 0
  %v902 = vsel %vm669, %v813, 0
  %vm904 = vcmask 1041408
  %v905 = vsel %vm904, %v852, 0
  %907 = vmatprep.subr.mxu0 0.0
  %908 = vmatpush1.msra.mxu0 0.0
  %909 = vmatprep.subr.mxu0 0.0
  %910 = vmatpush1.msra.mxu0 0.0
  %911 = vmatprep.subr.mxu0 0.0
  %912 = vmatpush1.msra.mxu0 0.0
  %913 = vmatprep.subr.mxu0 0.0
  %914 = vmatpush1.msra.mxu0 %v905
  %915 = vmatprep.subr.mxu0 0.0
  %916 = vmatpush1.msra.mxu0 %v850
  %917 = vmatprep.subr.mxu0 0.0
  %918 = vmatpush1.msra.mxu0 %v848
  %919 = vmatprep.subr.mxu0 0.0
  %920 = vmatpush1.msra.mxu0 %v846
  %921 = vmatprep.subr.mxu0 0.0
  %922 = vmatpush1.msra.mxu0 %v844
  %923 = vmatprep.subr.mxu0 0.0
  %924 = vmatpush1.msra.mxu0 %v842
  %925 = vmatprep.subr.mxu0 0.0
  %926 = vmatpush1.msra.mxu0 %v840
  %927 = vmatprep.subr.mxu0 0.0
  %928 = vmatpush1.msra.mxu0 %v838
  %929 = vmatprep.subr.mxu0 0.0
  %930 = vmatpush1.msra.mxu0 %v836
  %931 = vmatprep.subr.mxu0 0.0
  %932 = vmatpush1.msra.mxu0 %v834
  %933 = vmatprep.subr.mxu0 0.0
  %934 = vmatpush1.msra.mxu0 %v832
  %935 = vmatprep.subr.mxu0 0.0
  %936 = vmatpush1.msra.mxu0 %v830
  %937 = vmatprep.subr.mxu0 0.0
  %938 = vmatpush1.msra.mxu0 %v828
  %939 = vmatprep.subr.mxu0 0.0
  %940 = vmatpush2.msra.mxu0 0.0
  %941 = vmatprep.subr.mxu0 0.0
  %942 = vmatpush2.msra.mxu0 0.0
  %943 = vmatprep.subr.mxu0 0.0
  %944 = vmatpush2.msra.mxu0 0.0
  %945 = vmatprep.subr.mxu0 0.0
  %946 = vmatpush2.msra.mxu0 0.0
  %947 = vmatprep.subr.mxu0 0.0
  %948 = vmatpush2.msra.mxu0 0.0
  %949 = vmatprep.subr.mxu0 0.0
  %950 = vmatpush2.msra.mxu0 0.0
  %951 = vmatprep.subr.mxu0 0.0
  %952 = vmatpush2.msra.mxu0 0.0
  %953 = vmatprep.subr.mxu0 0.0
  %954 = vmatpush2.msra.mxu0 0.0
  %955 = vmatprep.subr.mxu0 0.0
  %956 = vmatpush2.msra.mxu0 0.0
  %957 = vmatprep.subr.mxu0 0.0
  %958 = vmatpush2.msra.mxu0 0.0
  %959 = vmatprep.subr.mxu0 0.0
  %960 = vmatpush2.msra.mxu0 0.0
  %961 = vmatprep.subr.mxu0 0.0
  %962 = vmatpush2.msra.mxu0 0.0
  %963 = vmatprep.subr.mxu0 0.0
  %964 = vmatpush2.msra.mxu0 0.0
  %965 = vmatprep.subr.mxu0 0.0
  %966 = vmatpush2.msra.mxu0 0.0
  %967 = vmatprep.subr.mxu0 0.0
  %968 = vmatpush2.msra.mxu0 0.0
  %969 = vmatprep.subr.mxu0 0.0
  %970 = vmatpush2.msra.mxu0 0.0
  %971 = vmatprep.mubr.f32.mxu0 0.0
  %972 = vmatmul.mubr.f32.gmra.mxu0 %v866
  %v973 = vpop.f32.mrf.mxu0
  %v974 = vadd.f32 0.0, %v973
  %v975 = vpop.f32.mrf.mxu0
  %976 = vmatprep.mubr.f32.mxu0 0.0
  %977 = vmatmul.mubr.f32.gmra.mxu0 %v869
  %v978 = vpop.f32.mrf.mxu0
  %v979 = vadd.f32 0.0, %v978
  %v980 = vpop.f32.mrf.mxu0
  %981 = vmatprep.mubr.f32.mxu0 0.0
  %982 = vmatmul.mubr.f32.gmra.mxu0 %v872
  %v983 = vpop.f32.mrf.mxu0
  %v984 = vadd.f32 0.0, %v983
  %v985 = vpop.f32.mrf.mxu0
  %986 = vmatprep.mubr.f32.mxu0 0.0
  %987 = vmatmul.mubr.f32.gmra.mxu0 %v875
  %v988 = vpop.f32.mrf.mxu0
  %v989 = vadd.f32 0.0, %v988
  %v990 = vpop.f32.mrf.mxu0
  %991 = vmatprep.mubr.f32.mxu0 0.0
  %992 = vmatmul.mubr.f32.gmra.mxu0 %v878
  %v993 = vpop.f32.mrf.mxu0
  %v994 = vadd.f32 0.0, %v993
  %v995 = vpop.f32.mrf.mxu0
  %996 = vmatprep.mubr.f32.mxu0 0.0
  %997 = vmatmul.mubr.f32.gmra.mxu0 %v881
  %v998 = vpop.f32.mrf.mxu0
  %v999 = vadd.f32 0.0, %v998
  %v1000 = vpop.f32.mrf.mxu0
  %1001 = vmatprep.mubr.f32.mxu0 0.0
  %1002 = vmatmul.mubr.f32.gmra.mxu0 %v884
  %v1003 = vpop.f32.mrf.mxu0
  %v1004 = vadd.f32 0.0, %v1003
  %v1005 = vpop.f32.mrf.mxu0
  %1006 = vmatprep.mubr.f32.mxu0 0.0
  %1007 = vmatmul.mubr.f32.gmra.mxu0 %v887
  %v1008 = vpop.f32.mrf.mxu0
  %v1009 = vadd.f32 0.0, %v1008
  %v1010 = vpop.f32.mrf.mxu0
  %1011 = vmatprep.mubr.f32.mxu0 0.0
  %1012 = vmatmul.mubr.f32.gmra.mxu0 %v890
  %v1013 = vpop.f32.mrf.mxu0
  %v1014 = vadd.f32 0.0, %v1013
  %v1015 = vpop.f32.mrf.mxu0
  %1016 = vmatprep.mubr.f32.mxu0 0.0
  %1017 = vmatmul.mubr.f32.gmra.mxu0 %v893
  %v1018 = vpop.f32.mrf.mxu0
  %v1019 = vadd.f32 0.0, %v1018
  %v1020 = vpop.f32.mrf.mxu0
  %1021 = vmatprep.mubr.f32.mxu0 0.0
  %1022 = vmatmul.mubr.f32.gmra.mxu0 %v896
  %v1023 = vpop.f32.mrf.mxu0
  %v1024 = vadd.f32 0.0, %v1023
  %v1025 = vpop.f32.mrf.mxu0
  %1026 = vmatprep.mubr.f32.mxu0 0.0
  %1027 = vmatmul.mubr.f32.gmra.mxu0 %v899
  %v1028 = vpop.f32.mrf.mxu0
  %v1029 = vadd.f32 0.0, %v1028
  %v1030 = vpop.f32.mrf.mxu0
  %1031 = vmatprep.mubr.f32.mxu0 0.0
  %1032 = vmatmul.mubr.f32.gmra.mxu0 %v902
  %v1033 = vpop.f32.mrf.mxu0
  %v1034 = vadd.f32 0.0, %v1033
  %v1035 = vpop.f32.mrf.mxu0
  %1036 = vdwg.mxu0
  %1037 = vrot.lane.b32.xlu0 %v241, 96
  %v1038 = vpop.permute.xlu0 %1037
  %1039 = vrot.lane.b32.xlu0 %v247, 96
  %v1040 = vpop.permute.xlu0 %1039
  %1041 = vrot.lane.b32.xlu0 %v253, 96
  %v1042 = vpop.permute.xlu0 %1041
  %1043 = vrot.lane.b32.xlu0 %v259, 96
  %v1044 = vpop.permute.xlu0 %1043
  %1045 = vrot.lane.b32.xlu0 %v265, 96
  %v1046 = vpop.permute.xlu0 %1045
  %1047 = vrot.lane.b32.xlu0 %v271, 96
  %v1048 = vpop.permute.xlu0 %1047
  %1049 = vrot.lane.b32.xlu0 %v277, 96
  %v1050 = vpop.permute.xlu0 %1049
  %1051 = vrot.lane.b32.xlu0 %v283, 96
  %v1052 = vpop.permute.xlu0 %1051
  %1053 = vrot.lane.b32.xlu0 %v289, 96
  %v1054 = vpop.permute.xlu0 %1053
  %1055 = vrot.lane.b32.xlu0 %v295, 96
  %v1056 = vpop.permute.xlu0 %1055
  %1057 = vrot.lane.b32.xlu0 %v301, 96
  %v1058 = vpop.permute.xlu0 %1057
  %1059 = vrot.lane.b32.xlu0 %v307, 96
  %v1060 = vpop.permute.xlu0 %1059
  %1061 = vrot.lane.b32.xlu0 %v313, 96
  %v1062 = vpop.permute.xlu0 %1061
  %v1063 = vsel %vm486, %v1038, 0
  %v1065 = vsel %vm486, %v1040, 0
  %v1067 = vsel %vm486, %v1042, 0
  %v1069 = vsel %vm486, %v1044, 0
  %v1071 = vsel %vm486, %v1046, 0
  %v1073 = vsel %vm486, %v1048, 0
  %v1075 = vsel %vm486, %v1050, 0
  %v1077 = vsel %vm486, %v1052, 0
  %v1079 = vsel %vm486, %v1054, 0
  %v1081 = vsel %vm486, %v1056, 0
  %v1083 = vsel %vm486, %v1058, 0
  %v1085 = vsel %vm486, %v1060, 0
  %v1087 = vsel %vm486, %v1062, 0
  %v1089 = vsel %vm486, %v243, 0
  %v1091 = vsel %vm486, %v249, 0
  %v1093 = vsel %vm486, %v255, 0
  %v1095 = vsel %vm486, %v261, 0
  %v1097 = vsel %vm486, %v267, 0
  %v1099 = vsel %vm486, %v273, 0
  %v1101 = vsel %vm486, %v279, 0
  %v1103 = vsel %vm486, %v285, 0
  %v1105 = vsel %vm486, %v291, 0
  %v1107 = vsel %vm486, %v297, 0
  %v1109 = vsel %vm486, %v303, 0
  %v1111 = vsel %vm486, %v309, 0
  %v1113 = vsel %vm486, %v315, 0
  %1115 = vmatprep.subr.mxu0 0.0
  %1116 = vmatpush1.xpose.msra.mxu0 0.0
  %1117 = vmatprep.subr.mxu0 0.0
  %1118 = vmatpush1.xpose.msra.mxu0 0.0
  %1119 = vmatprep.subr.mxu0 0.0
  %1120 = vmatpush1.xpose.msra.mxu0 0.0
  %1121 = vmatprep.subr.mxu0 0.0
  %1122 = vmatpush1.xpose.msra.mxu0 %v1113
  %1123 = vmatprep.subr.mxu0 0.0
  %1124 = vmatpush1.xpose.msra.mxu0 %v1111
  %1125 = vmatprep.subr.mxu0 0.0
  %1126 = vmatpush1.xpose.msra.mxu0 %v1109
  %1127 = vmatprep.subr.mxu0 0.0
  %1128 = vmatpush1.xpose.msra.mxu0 %v1107
  %1129 = vmatprep.subr.mxu0 0.0
  %1130 = vmatpush1.xpose.msra.mxu0 %v1105
  %1131 = vmatprep.subr.mxu0 0.0
  %1132 = vmatpush1.xpose.msra.mxu0 %v1103
  %1133 = vmatprep.subr.mxu0 0.0
  %1134 = vmatpush1.xpose.msra.mxu0 %v1101
  %1135 = vmatprep.subr.mxu0 0.0
  %1136 = vmatpush1.xpose.msra.mxu0 %v1099
  %1137 = vmatprep.subr.mxu0 0.0
  %1138 = vmatpush1.xpose.msra.mxu0 %v1097
  %1139 = vmatprep.subr.mxu0 0.0
  %1140 = vmatpush1.xpose.msra.mxu0 %v1095
  %1141 = vmatprep.subr.mxu0 0.0
  %1142 = vmatpush1.xpose.msra.mxu0 %v1093
  %1143 = vmatprep.subr.mxu0 0.0
  %1144 = vmatpush1.xpose.msra.mxu0 %v1091
  %1145 = vmatprep.subr.mxu0 0.0
  %1146 = vmatpush1.xpose.msra.mxu0 %v1089
  %1147 = vmatprep.subr.mxu0 0.0
  %1148 = vmatpush2.xpose.msra.mxu0 0.0
  %1149 = vmatprep.subr.mxu0 0.0
  %1150 = vmatpush2.xpose.msra.mxu0 0.0
  %1151 = vmatprep.subr.mxu0 0.0
  %1152 = vmatpush2.xpose.msra.mxu0 0.0
  %1153 = vmatprep.subr.mxu0 0.0
  %1154 = vmatpush2.xpose.msra.mxu0 0.0
  %1155 = vmatprep.subr.mxu0 0.0
  %1156 = vmatpush2.xpose.msra.mxu0 0.0
  %1157 = vmatprep.subr.mxu0 0.0
  %1158 = vmatpush2.xpose.msra.mxu0 0.0
  %1159 = vmatprep.subr.mxu0 0.0
  %1160 = vmatpush2.xpose.msra.mxu0 0.0
  %1161 = vmatprep.subr.mxu0 0.0
  %1162 = vmatpush2.xpose.msra.mxu0 0.0
  %1163 = vmatprep.subr.mxu0 0.0
  %1164 = vmatpush2.xpose.msra.mxu0 0.0
  %1165 = vmatprep.subr.mxu0 0.0
  %1166 = vmatpush2.xpose.msra.mxu0 0.0
  %1167 = vmatprep.subr.mxu0 0.0
  %1168 = vmatpush2.xpose.msra.mxu0 0.0
  %1169 = vmatprep.subr.mxu0 0.0
  %1170 = vmatpush2.xpose.msra.mxu0 0.0
  %1171 = vmatprep.subr.mxu0 0.0
  %1172 = vmatpush2.xpose.msra.mxu0 0.0
  %1173 = vmatprep.subr.mxu0 0.0
  %1174 = vmatpush2.xpose.msra.mxu0 0.0
  %1175 = vmatprep.subr.mxu0 0.0
  %1176 = vmatpush2.xpose.msra.mxu0 0.0
  %1177 = vmatprep.subr.mxu0 0.0
  %1178 = vmatpush2.xpose.msra.mxu0 0.0
  %1179 = vmatprep.mubr.f32.mxu0 0.0
  %1180 = vmatmul.mubr.f32.gmra.mxu0 %v1063
  %v1181 = vpop.f32.mrf.mxu0
  %v1182 = vadd.f32 0.0, %v1181
  %v1183 = vpop.f32.mrf.mxu0
  %1184 = vmatprep.mubr.f32.mxu0 0.0
  %1185 = vmatmul.mubr.f32.gmra.mxu0 %v1065
  %v1186 = vpop.f32.mrf.mxu0
  %v1187 = vadd.f32 0.0, %v1186
  %v1188 = vpop.f32.mrf.mxu0
  %1189 = vmatprep.mubr.f32.mxu0 0.0
  %1190 = vmatmul.mubr.f32.gmra.mxu0 %v1067
  %v1191 = vpop.f32.mrf.mxu0
  %v1192 = vadd.f32 0.0, %v1191
  %v1193 = vpop.f32.mrf.mxu0
  %1194 = vmatprep.mubr.f32.mxu0 0.0
  %1195 = vmatmul.mubr.f32.gmra.mxu0 %v1069
  %v1196 = vpop.f32.mrf.mxu0
  %v1197 = vadd.f32 0.0, %v1196
  %v1198 = vpop.f32.mrf.mxu0
  %1199 = vmatprep.mubr.f32.mxu0 0.0
  %1200 = vmatmul.mubr.f32.gmra.mxu0 %v1071
  %v1201 = vpop.f32.mrf.mxu0
  %v1202 = vadd.f32 0.0, %v1201
  %v1203 = vpop.f32.mrf.mxu0
  %1204 = vmatprep.mubr.f32.mxu0 0.0
  %1205 = vmatmul.mubr.f32.gmra.mxu0 %v1073
  %v1206 = vpop.f32.mrf.mxu0
  %v1207 = vadd.f32 0.0, %v1206
  %v1208 = vpop.f32.mrf.mxu0
  %1209 = vmatprep.mubr.f32.mxu0 0.0
  %1210 = vmatmul.mubr.f32.gmra.mxu0 %v1075
  %v1211 = vpop.f32.mrf.mxu0
  %v1212 = vadd.f32 0.0, %v1211
  %v1213 = vpop.f32.mrf.mxu0
  %1214 = vmatprep.mubr.f32.mxu0 0.0
  %1215 = vmatmul.mubr.f32.gmra.mxu0 %v1077
  %v1216 = vpop.f32.mrf.mxu0
  %v1217 = vadd.f32 0.0, %v1216
  %v1218 = vpop.f32.mrf.mxu0
  %1219 = vmatprep.mubr.f32.mxu0 0.0
  %1220 = vmatmul.mubr.f32.gmra.mxu0 %v1079
  %v1221 = vpop.f32.mrf.mxu0
  %v1222 = vadd.f32 0.0, %v1221
  %v1223 = vpop.f32.mrf.mxu0
  %1224 = vmatprep.mubr.f32.mxu0 0.0
  %1225 = vmatmul.mubr.f32.gmra.mxu0 %v1081
  %v1226 = vpop.f32.mrf.mxu0
  %v1227 = vadd.f32 0.0, %v1226
  %v1228 = vpop.f32.mrf.mxu0
  %1229 = vmatprep.mubr.f32.mxu0 0.0
  %1230 = vmatmul.mubr.f32.gmra.mxu0 %v1083
  %v1231 = vpop.f32.mrf.mxu0
  %v1232 = vadd.f32 0.0, %v1231
  %v1233 = vpop.f32.mrf.mxu0
  %1234 = vmatprep.mubr.f32.mxu0 0.0
  %1235 = vmatmul.mubr.f32.gmra.mxu0 %v1085
  %v1236 = vpop.f32.mrf.mxu0
  %v1237 = vadd.f32 0.0, %v1236
  %v1238 = vpop.f32.mrf.mxu0
  %1239 = vmatprep.mubr.f32.mxu0 0.0
  %1240 = vmatmul.mubr.f32.gmra.mxu0 %v1087
  %v1241 = vpop.f32.mrf.mxu0
  %v1242 = vadd.f32 0.0, %v1241
  %v1243 = vpop.f32.mrf.mxu0
  %1244 = vdwg.mxu0
  %v1245 = vsel %vm669, %v1182, -inf
  %1246 = vmax.xlane.f32.xlu0 %v1245
  %v1247 = vpop.xlane.xlu0 %1246
  %v1248 = vsel %vm669, %v1187, -inf
  %1249 = vmax.xlane.f32.xlu0 %v1248
  %v1250 = vpop.xlane.xlu0 %1249
  %v1251 = vsel %vm669, %v1192, -inf
  %1252 = vmax.xlane.f32.xlu0 %v1251
  %v1253 = vpop.xlane.xlu0 %1252
  %v1254 = vsel %vm669, %v1197, -inf
  %1255 = vmax.xlane.f32.xlu0 %v1254
  %v1256 = vpop.xlane.xlu0 %1255
  %v1257 = vsel %vm669, %v1202, -inf
  %1258 = vmax.xlane.f32.xlu0 %v1257
  %v1259 = vpop.xlane.xlu0 %1258
  %v1260 = vsel %vm669, %v1207, -inf
  %1261 = vmax.xlane.f32.xlu0 %v1260
  %v1262 = vpop.xlane.xlu0 %1261
  %v1263 = vsel %vm669, %v1212, -inf
  %1264 = vmax.xlane.f32.xlu0 %v1263
  %v1265 = vpop.xlane.xlu0 %1264
  %v1266 = vsel %vm669, %v1217, -inf
  %1267 = vmax.xlane.f32.xlu0 %v1266
  %v1268 = vpop.xlane.xlu0 %1267
  %v1269 = vsel %vm669, %v1222, -inf
  %1270 = vmax.xlane.f32.xlu0 %v1269
  %v1271 = vpop.xlane.xlu0 %1270
  %v1272 = vsel %vm669, %v1227, -inf
  %1273 = vmax.xlane.f32.xlu0 %v1272
  %v1274 = vpop.xlane.xlu0 %1273
  %v1275 = vsel %vm669, %v1232, -inf
  %1276 = vmax.xlane.f32.xlu0 %v1275
  %v1277 = vpop.xlane.xlu0 %1276
  %v1278 = vsel %vm669, %v1237, -inf
  %1279 = vmax.xlane.f32.xlu0 %v1278
  %v1280 = vpop.xlane.xlu0 %1279
  %v1281 = vsel %vm706, %v1242, -inf
  %1282 = vmax.xlane.f32.xlu0 %v1281
  %v1283 = vpop.xlane.xlu0 %1282
  %v1284 = vsub.f32 %v1182, %v1247
  %v1285 = vsub.f32 %v1187, %v1250
  %v1286 = vsub.f32 %v1192, %v1253
  %v1287 = vsub.f32 %v1197, %v1256
  %v1288 = vsub.f32 %v1202, %v1259
  %v1289 = vsub.f32 %v1207, %v1262
  %v1290 = vsub.f32 %v1212, %v1265
  %v1291 = vsub.f32 %v1217, %v1268
  %v1292 = vsub.f32 %v1222, %v1271
  %v1293 = vsub.f32 %v1227, %v1274
  %v1294 = vsub.f32 %v1232, %v1277
  %v1295 = vsub.f32 %v1237, %v1280
  %v1296 = vsub.f32 %v1242, %v1283
  %v1297 = vmul.f32 %v1284, 1.442695
  %v1298 = vpow.pop %v1297
  %v1299 = vmul.f32 %v1285, 1.442695
  %v1300 = vpow.pop %v1299
  %v1301 = vmul.f32 %v1286, 1.442695
  %v1302 = vpow.pop %v1301
  %v1303 = vmul.f32 %v1287, 1.442695
  %v1304 = vpow.pop %v1303
  %v1305 = vmul.f32 %v1288, 1.442695
  %v1306 = vpow.pop %v1305
  %v1307 = vmul.f32 %v1289, 1.442695
  %v1308 = vpow.pop %v1307
  %v1309 = vmul.f32 %v1290, 1.442695
  %v1310 = vpow.pop %v1309
  %v1311 = vmul.f32 %v1291, 1.442695
  %v1312 = vpow.pop %v1311
  %v1313 = vmul.f32 %v1292, 1.442695
  %v1314 = vpow.pop %v1313
  %v1315 = vmul.f32 %v1293, 1.442695
  %v1316 = vpow.pop %v1315
  %v1317 = vmul.f32 %v1294, 1.442695
  %v1318 = vpow.pop %v1317
  %v1319 = vmul.f32 %v1295, 1.442695
  %v1320 = vpow.pop %v1319
  %v1321 = vmul.f32 %v1296, 1.442695
  %v1322 = vpow.pop %v1321
  %v1323 = vsel %vm669, %v1298, 0.0
  %1324 = vadd.xlane.f32.xlu0 %v1323
  %v1325 = vpop.xlane.xlu0 %1324
  %v1326 = vsel %vm669, %v1300, 0.0
  %1327 = vadd.xlane.f32.xlu0 %v1326
  %v1328 = vpop.xlane.xlu0 %1327
  %v1329 = vsel %vm669, %v1302, 0.0
  %1330 = vadd.xlane.f32.xlu0 %v1329
  %v1331 = vpop.xlane.xlu0 %1330
  %v1332 = vsel %vm669, %v1304, 0.0
  %1333 = vadd.xlane.f32.xlu0 %v1332
  %v1334 = vpop.xlane.xlu0 %1333
  %v1335 = vsel %vm669, %v1306, 0.0
  %1336 = vadd.xlane.f32.xlu0 %v1335
  %v1337 = vpop.xlane.xlu0 %1336
  %v1338 = vsel %vm669, %v1308, 0.0
  %1339 = vadd.xlane.f32.xlu0 %v1338
  %v1340 = vpop.xlane.xlu0 %1339
  %v1341 = vsel %vm669, %v1310, 0.0
  %1342 = vadd.xlane.f32.xlu0 %v1341
  %v1343 = vpop.xlane.xlu0 %1342
  %v1344 = vsel %vm669, %v1312, 0.0
  %1345 = vadd.xlane.f32.xlu0 %v1344
  %v1346 = vpop.xlane.xlu0 %1345
  %v1347 = vsel %vm669, %v1314, 0.0
  %1348 = vadd.xlane.f32.xlu0 %v1347
  %v1349 = vpop.xlane.xlu0 %1348
  %v1350 = vsel %vm669, %v1316, 0.0
  %1351 = vadd.xlane.f32.xlu0 %v1350
  %v1352 = vpop.xlane.xlu0 %1351
  %v1353 = vsel %vm669, %v1318, 0.0
  %1354 = vadd.xlane.f32.xlu0 %v1353
  %v1355 = vpop.xlane.xlu0 %1354
  %v1356 = vsel %vm669, %v1320, 0.0
  %1357 = vadd.xlane.f32.xlu0 %v1356
  %v1358 = vpop.xlane.xlu0 %1357
  %v1359 = vsel %vm706, %v1322, 0.0
  %1360 = vadd.xlane.f32.xlu0 %v1359
  %v1361 = vpop.xlane.xlu0 %1360
  %v1362 = vrcp.pop %v1325
  %v1363 = vrcp.pop %v1328
  %v1364 = vrcp.pop %v1331
  %v1365 = vrcp.pop %v1334
  %v1366 = vrcp.pop %v1337
  %v1367 = vrcp.pop %v1340
  %v1368 = vrcp.pop %v1343
  %v1369 = vrcp.pop %v1346
  %v1370 = vrcp.pop %v1349
  %v1371 = vrcp.pop %v1352
  %v1372 = vrcp.pop %v1355
  %v1373 = vrcp.pop %v1358
  %v1374 = vrcp.pop %v1361
  %v1375 = vmul.f32 %v1298, %v1362
  %v1376 = vmul.f32 %v1300, %v1363
  %v1377 = vmul.f32 %v1302, %v1364
  %v1378 = vmul.f32 %v1304, %v1365
  %v1379 = vmul.f32 %v1306, %v1366
  %v1380 = vmul.f32 %v1308, %v1367
  %v1381 = vmul.f32 %v1310, %v1368
  %v1382 = vmul.f32 %v1312, %v1369
  %v1383 = vmul.f32 %v1314, %v1370
  %v1384 = vmul.f32 %v1316, %v1371
  %v1385 = vmul.f32 %v1318, %v1372
  %v1386 = vmul.f32 %v1320, %v1373
  %v1387 = vmul.f32 %v1322, %v1374
  %1388 = vrot.lane.b32.xlu0 %v243, 32
  %v1389 = vpop.permute.xlu0 %1388
  %1390 = vrot.lane.b32.xlu0 %v249, 32
  %v1391 = vpop.permute.xlu0 %1390
  %1392 = vrot.lane.b32.xlu0 %v255, 32
  %v1393 = vpop.permute.xlu0 %1392
  %1394 = vrot.lane.b32.xlu0 %v261, 32
  %v1395 = vpop.permute.xlu0 %1394
  %1396 = vrot.lane.b32.xlu0 %v267, 32
  %v1397 = vpop.permute.xlu0 %1396
  %1398 = vrot.lane.b32.xlu0 %v273, 32
  %v1399 = vpop.permute.xlu0 %1398
  %1400 = vrot.lane.b32.xlu0 %v279, 32
  %v1401 = vpop.permute.xlu0 %1400
  %1402 = vrot.lane.b32.xlu0 %v285, 32
  %v1403 = vpop.permute.xlu0 %1402
  %1404 = vrot.lane.b32.xlu0 %v291, 32
  %v1405 = vpop.permute.xlu0 %1404
  %1406 = vrot.lane.b32.xlu0 %v297, 32
  %v1407 = vpop.permute.xlu0 %1406
  %1408 = vrot.lane.b32.xlu0 %v303, 32
  %v1409 = vpop.permute.xlu0 %1408
  %1410 = vrot.lane.b32.xlu0 %v309, 32
  %v1411 = vpop.permute.xlu0 %1410
  %1412 = vrot.lane.b32.xlu0 %v315, 32
  %v1413 = vpop.permute.xlu0 %1412
  %v1427 = vsel %vm669, %v1375, 0
  %v1430 = vsel %vm669, %v1376, 0
  %v1433 = vsel %vm669, %v1377, 0
  %v1436 = vsel %vm669, %v1378, 0
  %v1439 = vsel %vm669, %v1379, 0
  %v1442 = vsel %vm669, %v1380, 0
  %v1445 = vsel %vm669, %v1381, 0
  %v1448 = vsel %vm669, %v1382, 0
  %v1451 = vsel %vm669, %v1383, 0
  %v1454 = vsel %vm669, %v1384, 0
  %v1457 = vsel %vm669, %v1385, 0
  %v1460 = vsel %vm669, %v1386, 0
  %v1463 = vsel %vm669, %v1387, 0
  %v1465 = vsel %vm904, %v1413, 0
  %1467 = vmatprep.subr.mxu0 0.0
  %1468 = vmatpush1.msra.mxu0 0.0
  %1469 = vmatprep.subr.mxu0 0.0
  %1470 = vmatpush1.msra.mxu0 0.0
  %1471 = vmatprep.subr.mxu0 0.0
  %1472 = vmatpush1.msra.mxu0 0.0
  %1473 = vmatprep.subr.mxu0 0.0
  %1474 = vmatpush1.msra.mxu0 %v1465
  %1475 = vmatprep.subr.mxu0 0.0
  %1476 = vmatpush1.msra.mxu0 %v1411
  %1477 = vmatprep.subr.mxu0 0.0
  %1478 = vmatpush1.msra.mxu0 %v1409
  %1479 = vmatprep.subr.mxu0 0.0
  %1480 = vmatpush1.msra.mxu0 %v1407
  %1481 = vmatprep.subr.mxu0 0.0
  %1482 = vmatpush1.msra.mxu0 %v1405
  %1483 = vmatprep.subr.mxu0 0.0
  %1484 = vmatpush1.msra.mxu0 %v1403
  %1485 = vmatprep.subr.mxu0 0.0
  %1486 = vmatpush1.msra.mxu0 %v1401
  %1487 = vmatprep.subr.mxu0 0.0
  %1488 = vmatpush1.msra.mxu0 %v1399
  %1489 = vmatprep.subr.mxu0 0.0
  %1490 = vmatpush1.msra.mxu0 %v1397
  %1491 = vmatprep.subr.mxu0 0.0
  %1492 = vmatpush1.msra.mxu0 %v1395
  %1493 = vmatprep.subr.mxu0 0.0
  %1494 = vmatpush1.msra.mxu0 %v1393
  %1495 = vmatprep.subr.mxu0 0.0
  %1496 = vmatpush1.msra.mxu0 %v1391
  %1497 = vmatprep.subr.mxu0 0.0
  %1498 = vmatpush1.msra.mxu0 %v1389
  %1499 = vmatprep.subr.mxu0 0.0
  %1500 = vmatpush2.msra.mxu0 0.0
  %1501 = vmatprep.subr.mxu0 0.0
  %1502 = vmatpush2.msra.mxu0 0.0
  %1503 = vmatprep.subr.mxu0 0.0
  %1504 = vmatpush2.msra.mxu0 0.0
  %1505 = vmatprep.subr.mxu0 0.0
  %1506 = vmatpush2.msra.mxu0 0.0
  %1507 = vmatprep.subr.mxu0 0.0
  %1508 = vmatpush2.msra.mxu0 0.0
  %1509 = vmatprep.subr.mxu0 0.0
  %1510 = vmatpush2.msra.mxu0 0.0
  %1511 = vmatprep.subr.mxu0 0.0
  %1512 = vmatpush2.msra.mxu0 0.0
  %1513 = vmatprep.subr.mxu0 0.0
  %1514 = vmatpush2.msra.mxu0 0.0
  %1515 = vmatprep.subr.mxu0 0.0
  %1516 = vmatpush2.msra.mxu0 0.0
  %1517 = vmatprep.subr.mxu0 0.0
  %1518 = vmatpush2.msra.mxu0 0.0
  %1519 = vmatprep.subr.mxu0 0.0
  %1520 = vmatpush2.msra.mxu0 0.0
  %1521 = vmatprep.subr.mxu0 0.0
  %1522 = vmatpush2.msra.mxu0 0.0
  %1523 = vmatprep.subr.mxu0 0.0
  %1524 = vmatpush2.msra.mxu0 0.0
  %1525 = vmatprep.subr.mxu0 0.0
  %1526 = vmatpush2.msra.mxu0 0.0
  %1527 = vmatprep.subr.mxu0 0.0
  %1528 = vmatpush2.msra.mxu0 0.0
  %1529 = vmatprep.subr.mxu0 0.0
  %1530 = vmatpush2.msra.mxu0 0.0
  %1531 = vmatprep.mubr.f32.mxu0 0.0
  %1532 = vmatmul.mubr.f32.gmra.mxu0 %v1427
  %v1533 = vpop.f32.mrf.mxu0
  %v1534 = vadd.f32 0.0, %v1533
  %v1535 = vpop.f32.mrf.mxu0
  %1536 = vmatprep.mubr.f32.mxu0 0.0
  %1537 = vmatmul.mubr.f32.gmra.mxu0 %v1430
  %v1538 = vpop.f32.mrf.mxu0
  %v1539 = vadd.f32 0.0, %v1538
  %v1540 = vpop.f32.mrf.mxu0
  %1541 = vmatprep.mubr.f32.mxu0 0.0
  %1542 = vmatmul.mubr.f32.gmra.mxu0 %v1433
  %v1543 = vpop.f32.mrf.mxu0
  %v1544 = vadd.f32 0.0, %v1543
  %v1545 = vpop.f32.mrf.mxu0
  %1546 = vmatprep.mubr.f32.mxu0 0.0
  %1547 = vmatmul.mubr.f32.gmra.mxu0 %v1436
  %v1548 = vpop.f32.mrf.mxu0
  %v1549 = vadd.f32 0.0, %v1548
  %v1550 = vpop.f32.mrf.mxu0
  %1551 = vmatprep.mubr.f32.mxu0 0.0
  %1552 = vmatmul.mubr.f32.gmra.mxu0 %v1439
  %v1553 = vpop.f32.mrf.mxu0
  %v1554 = vadd.f32 0.0, %v1553
  %v1555 = vpop.f32.mrf.mxu0
  %1556 = vmatprep.mubr.f32.mxu0 0.0
  %1557 = vmatmul.mubr.f32.gmra.mxu0 %v1442
  %v1558 = vpop.f32.mrf.mxu0
  %v1559 = vadd.f32 0.0, %v1558
  %v1560 = vpop.f32.mrf.mxu0
  %1561 = vmatprep.mubr.f32.mxu0 0.0
  %1562 = vmatmul.mubr.f32.gmra.mxu0 %v1445
  %v1563 = vpop.f32.mrf.mxu0
  %v1564 = vadd.f32 0.0, %v1563
  %v1565 = vpop.f32.mrf.mxu0
  %1566 = vmatprep.mubr.f32.mxu0 0.0
  %1567 = vmatmul.mubr.f32.gmra.mxu0 %v1448
  %v1568 = vpop.f32.mrf.mxu0
  %v1569 = vadd.f32 0.0, %v1568
  %v1570 = vpop.f32.mrf.mxu0
  %1571 = vmatprep.mubr.f32.mxu0 0.0
  %1572 = vmatmul.mubr.f32.gmra.mxu0 %v1451
  %v1573 = vpop.f32.mrf.mxu0
  %v1574 = vadd.f32 0.0, %v1573
  %v1575 = vpop.f32.mrf.mxu0
  %1576 = vmatprep.mubr.f32.mxu0 0.0
  %1577 = vmatmul.mubr.f32.gmra.mxu0 %v1454
  %v1578 = vpop.f32.mrf.mxu0
  %v1579 = vadd.f32 0.0, %v1578
  %v1580 = vpop.f32.mrf.mxu0
  %1581 = vmatprep.mubr.f32.mxu0 0.0
  %1582 = vmatmul.mubr.f32.gmra.mxu0 %v1457
  %v1583 = vpop.f32.mrf.mxu0
  %v1584 = vadd.f32 0.0, %v1583
  %v1585 = vpop.f32.mrf.mxu0
  %1586 = vmatprep.mubr.f32.mxu0 0.0
  %1587 = vmatmul.mubr.f32.gmra.mxu0 %v1460
  %v1588 = vpop.f32.mrf.mxu0
  %v1589 = vadd.f32 0.0, %v1588
  %v1590 = vpop.f32.mrf.mxu0
  %1591 = vmatprep.mubr.f32.mxu0 0.0
  %1592 = vmatmul.mubr.f32.gmra.mxu0 %v1463
  %v1593 = vpop.f32.mrf.mxu0
  %v1594 = vadd.f32 0.0, %v1593
  %v1595 = vpop.f32.mrf.mxu0
  %1596 = vdwg.mxu0
  %v1598 = vsel %vm486, %v1534, 0
  %v1601 = vsel %vm486, %v1539, 0
  %v1604 = vsel %vm486, %v1544, 0
  %v1607 = vsel %vm486, %v1549, 0
  %v1610 = vsel %vm486, %v1554, 0
  %v1613 = vsel %vm486, %v1559, 0
  %v1616 = vsel %vm486, %v1564, 0
  %v1619 = vsel %vm486, %v1569, 0
  %v1622 = vsel %vm486, %v1574, 0
  %v1625 = vsel %vm486, %v1579, 0
  %v1628 = vsel %vm486, %v1584, 0
  %v1631 = vsel %vm486, %v1589, 0
  %v1634 = vsel %vm486, %v1594, 0
  %1636 = vmatprep.subr.mxu0 0.0
  %1637 = vmatpush1.msra.mxu0 0.0
  %1638 = vmatprep.subr.mxu0 0.0
  %1639 = vmatpush1.msra.mxu0 0.0
  %1640 = vmatprep.subr.mxu0 0.0
  %1641 = vmatpush1.msra.mxu0 0.0
  %1642 = vmatprep.subr.mxu0 0.0
  %1643 = vmatpush1.msra.mxu0 0.0
  %1644 = vmatprep.subr.mxu0 0.0
  %1645 = vmatpush1.msra.mxu0 0.0
  %1646 = vmatprep.subr.mxu0 0.0
  %1647 = vmatpush1.msra.mxu0 0.0
  %1648 = vmatprep.subr.mxu0 0.0
  %1649 = vmatpush1.msra.mxu0 0.0
  %1650 = vmatprep.subr.mxu0 0.0
  %1651 = vmatpush1.msra.mxu0 0.0
  %1652 = vmatprep.subr.mxu0 0.0
  %1653 = vmatpush1.msra.mxu0 0.0
  %1654 = vmatprep.subr.mxu0 0.0
  %1655 = vmatpush1.msra.mxu0 0.0
  %1656 = vmatprep.subr.mxu0 0.0
  %1657 = vmatpush1.msra.mxu0 0.0
  %1658 = vmatprep.subr.mxu0 0.0
  %1659 = vmatpush1.msra.mxu0 0.0
  %1660 = vmatprep.subr.mxu0 0.0
  %1661 = vmatpush1.msra.mxu0 %v64
  %1662 = vmatprep.subr.mxu0 0.0
  %1663 = vmatpush1.msra.mxu0 %v63
  %1664 = vmatprep.subr.mxu0 0.0
  %1665 = vmatpush1.msra.mxu0 %v62
  %1666 = vmatprep.subr.mxu0 0.0
  %1667 = vmatpush1.msra.mxu0 %v61
  %1668 = vmatprep.subr.mxu0 0.0
  %1669 = vmatpush2.msra.mxu0 0.0
  %1670 = vmatprep.subr.mxu0 0.0
  %1671 = vmatpush2.msra.mxu0 0.0
  %1672 = vmatprep.subr.mxu0 0.0
  %1673 = vmatpush2.msra.mxu0 0.0
  %1674 = vmatprep.subr.mxu0 0.0
  %1675 = vmatpush2.msra.mxu0 0.0
  %1676 = vmatprep.subr.mxu0 0.0
  %1677 = vmatpush2.msra.mxu0 0.0
  %1678 = vmatprep.subr.mxu0 0.0
  %1679 = vmatpush2.msra.mxu0 0.0
  %1680 = vmatprep.subr.mxu0 0.0
  %1681 = vmatpush2.msra.mxu0 0.0
  %1682 = vmatprep.subr.mxu0 0.0
  %1683 = vmatpush2.msra.mxu0 0.0
  %1684 = vmatprep.subr.mxu0 0.0
  %1685 = vmatpush2.msra.mxu0 0.0
  %1686 = vmatprep.subr.mxu0 0.0
  %1687 = vmatpush2.msra.mxu0 0.0
  %1688 = vmatprep.subr.mxu0 0.0
  %1689 = vmatpush2.msra.mxu0 0.0
  %1690 = vmatprep.subr.mxu0 0.0
  %1691 = vmatpush2.msra.mxu0 0.0
  %1692 = vmatprep.subr.mxu0 0.0
  %1693 = vmatpush2.msra.mxu0 0.0
  %1694 = vmatprep.subr.mxu0 0.0
  %1695 = vmatpush2.msra.mxu0 0.0
  %1696 = vmatprep.subr.mxu0 0.0
  %1697 = vmatpush2.msra.mxu0 0.0
  %1698 = vmatprep.subr.mxu0 0.0
  %1699 = vmatpush2.msra.mxu0 0.0
  %1700 = vmatprep.mubr.f32.mxu0 0.0
  %1701 = vmatmul.mubr.f32.gmra.mxu0 %v1598
  %v1702 = vpop.f32.mrf.mxu0
  %v1703 = vadd.f32 0.0, %v1702
  %v1704 = vpop.f32.mrf.mxu0
  %1705 = vmatprep.mubr.f32.mxu0 0.0
  %1706 = vmatmul.mubr.f32.gmra.mxu0 %v1601
  %v1707 = vpop.f32.mrf.mxu0
  %v1708 = vadd.f32 0.0, %v1707
  %v1709 = vpop.f32.mrf.mxu0
  %1710 = vmatprep.mubr.f32.mxu0 0.0
  %1711 = vmatmul.mubr.f32.gmra.mxu0 %v1604
  %v1712 = vpop.f32.mrf.mxu0
  %v1713 = vadd.f32 0.0, %v1712
  %v1714 = vpop.f32.mrf.mxu0
  %1715 = vmatprep.mubr.f32.mxu0 0.0
  %1716 = vmatmul.mubr.f32.gmra.mxu0 %v1607
  %v1717 = vpop.f32.mrf.mxu0
  %v1718 = vadd.f32 0.0, %v1717
  %v1719 = vpop.f32.mrf.mxu0
  %1720 = vmatprep.mubr.f32.mxu0 0.0
  %1721 = vmatmul.mubr.f32.gmra.mxu0 %v1610
  %v1722 = vpop.f32.mrf.mxu0
  %v1723 = vadd.f32 0.0, %v1722
  %v1724 = vpop.f32.mrf.mxu0
  %1725 = vmatprep.mubr.f32.mxu0 0.0
  %1726 = vmatmul.mubr.f32.gmra.mxu0 %v1613
  %v1727 = vpop.f32.mrf.mxu0
  %v1728 = vadd.f32 0.0, %v1727
  %v1729 = vpop.f32.mrf.mxu0
  %1730 = vmatprep.mubr.f32.mxu0 0.0
  %1731 = vmatmul.mubr.f32.gmra.mxu0 %v1616
  %v1732 = vpop.f32.mrf.mxu0
  %v1733 = vadd.f32 0.0, %v1732
  %v1734 = vpop.f32.mrf.mxu0
  %1735 = vmatprep.mubr.f32.mxu0 0.0
  %1736 = vmatmul.mubr.f32.gmra.mxu0 %v1619
  %v1737 = vpop.f32.mrf.mxu0
  %v1738 = vadd.f32 0.0, %v1737
  %v1739 = vpop.f32.mrf.mxu0
  %1740 = vmatprep.mubr.f32.mxu0 0.0
  %1741 = vmatmul.mubr.f32.gmra.mxu0 %v1622
  %v1742 = vpop.f32.mrf.mxu0
  %v1743 = vadd.f32 0.0, %v1742
  %v1744 = vpop.f32.mrf.mxu0
  %1745 = vmatprep.mubr.f32.mxu0 0.0
  %1746 = vmatmul.mubr.f32.gmra.mxu0 %v1625
  %v1747 = vpop.f32.mrf.mxu0
  %v1748 = vadd.f32 0.0, %v1747
  %v1749 = vpop.f32.mrf.mxu0
  %1750 = vmatprep.mubr.f32.mxu0 0.0
  %1751 = vmatmul.mubr.f32.gmra.mxu0 %v1628
  %v1752 = vpop.f32.mrf.mxu0
  %v1753 = vadd.f32 0.0, %v1752
  %v1754 = vpop.f32.mrf.mxu0
  %1755 = vmatprep.mubr.f32.mxu0 0.0
  %1756 = vmatmul.mubr.f32.gmra.mxu0 %v1631
  %v1757 = vpop.f32.mrf.mxu0
  %v1758 = vadd.f32 0.0, %v1757
  %v1759 = vpop.f32.mrf.mxu0
  %1760 = vmatprep.mubr.f32.mxu0 0.0
  %1761 = vmatmul.mubr.f32.gmra.mxu0 %v1634
  %v1762 = vpop.f32.mrf.mxu0
  %v1763 = vadd.f32 0.0, %v1762
  %v1764 = vpop.f32.mrf.mxu0
  %1765 = vdwg.mxu0
  %v1767 = vsel %vm486, %v974, 0
  %v1770 = vsel %vm486, %v979, 0
  %v1773 = vsel %vm486, %v984, 0
  %v1776 = vsel %vm486, %v989, 0
  %v1779 = vsel %vm486, %v994, 0
  %v1782 = vsel %vm486, %v999, 0
  %v1785 = vsel %vm486, %v1004, 0
  %v1788 = vsel %vm486, %v1009, 0
  %v1791 = vsel %vm486, %v1014, 0
  %v1794 = vsel %vm486, %v1019, 0
  %v1797 = vsel %vm486, %v1024, 0
  %v1800 = vsel %vm486, %v1029, 0
  %v1803 = vsel %vm486, %v1034, 0
  %1805 = vmatprep.subr.mxu0 0.0
  %1806 = vmatpush1.msra.mxu0 0.0
  %1807 = vmatprep.subr.mxu0 0.0
  %1808 = vmatpush1.msra.mxu0 0.0
  %1809 = vmatprep.subr.mxu0 0.0
  %1810 = vmatpush1.msra.mxu0 0.0
  %1811 = vmatprep.subr.mxu0 0.0
  %1812 = vmatpush1.msra.mxu0 0.0
  %1813 = vmatprep.subr.mxu0 0.0
  %1814 = vmatpush1.msra.mxu0 0.0
  %1815 = vmatprep.subr.mxu0 0.0
  %1816 = vmatpush1.msra.mxu0 0.0
  %1817 = vmatprep.subr.mxu0 0.0
  %1818 = vmatpush1.msra.mxu0 0.0
  %1819 = vmatprep.subr.mxu0 0.0
  %1820 = vmatpush1.msra.mxu0 0.0
  %1821 = vmatprep.subr.mxu0 0.0
  %1822 = vmatpush1.msra.mxu0 0.0
  %1823 = vmatprep.subr.mxu0 0.0
  %1824 = vmatpush1.msra.mxu0 0.0
  %1825 = vmatprep.subr.mxu0 0.0
  %1826 = vmatpush1.msra.mxu0 0.0
  %1827 = vmatprep.subr.mxu0 0.0
  %1828 = vmatpush1.msra.mxu0 0.0
  %1829 = vmatprep.subr.mxu0 0.0
  %1830 = vmatpush1.msra.mxu0 %v60
  %1831 = vmatprep.subr.mxu0 0.0
  %1832 = vmatpush1.msra.mxu0 %v59
  %1833 = vmatprep.subr.mxu0 0.0
  %1834 = vmatpush1.msra.mxu0 %v58
  %1835 = vmatprep.subr.mxu0 0.0
  %1836 = vmatpush1.msra.mxu0 %v57
  %1837 = vmatprep.subr.mxu0 0.0
  %1838 = vmatpush2.msra.mxu0 0.0
  %1839 = vmatprep.subr.mxu0 0.0
  %1840 = vmatpush2.msra.mxu0 0.0
  %1841 = vmatprep.subr.mxu0 0.0
  %1842 = vmatpush2.msra.mxu0 0.0
  %1843 = vmatprep.subr.mxu0 0.0
  %1844 = vmatpush2.msra.mxu0 0.0
  %1845 = vmatprep.subr.mxu0 0.0
  %1846 = vmatpush2.msra.mxu0 0.0
  %1847 = vmatprep.subr.mxu0 0.0
  %1848 = vmatpush2.msra.mxu0 0.0
  %1849 = vmatprep.subr.mxu0 0.0
  %1850 = vmatpush2.msra.mxu0 0.0
  %1851 = vmatprep.subr.mxu0 0.0
  %1852 = vmatpush2.msra.mxu0 0.0
  %1853 = vmatprep.subr.mxu0 0.0
  %1854 = vmatpush2.msra.mxu0 0.0
  %1855 = vmatprep.subr.mxu0 0.0
  %1856 = vmatpush2.msra.mxu0 0.0
  %1857 = vmatprep.subr.mxu0 0.0
  %1858 = vmatpush2.msra.mxu0 0.0
  %1859 = vmatprep.subr.mxu0 0.0
  %1860 = vmatpush2.msra.mxu0 0.0
  %1861 = vmatprep.subr.mxu0 0.0
  %1862 = vmatpush2.msra.mxu0 0.0
  %1863 = vmatprep.subr.mxu0 0.0
  %1864 = vmatpush2.msra.mxu0 0.0
  %1865 = vmatprep.subr.mxu0 0.0
  %1866 = vmatpush2.msra.mxu0 0.0
  %1867 = vmatprep.subr.mxu0 0.0
  %1868 = vmatpush2.msra.mxu0 0.0
  %1869 = vmatprep.mubr.f32.mxu0 0.0
  %1870 = vmatmul.mubr.f32.gmra.mxu0 %v1767
  %v1871 = vpop.f32.mrf.mxu0
  %v1872 = vadd.f32 %v1703, %v1871
  %v1873 = vpop.f32.mrf.mxu0
  %1874 = vmatprep.mubr.f32.mxu0 0.0
  %1875 = vmatmul.mubr.f32.gmra.mxu0 %v1770
  %v1876 = vpop.f32.mrf.mxu0
  %v1877 = vadd.f32 %v1708, %v1876
  %v1878 = vpop.f32.mrf.mxu0
  %1879 = vmatprep.mubr.f32.mxu0 0.0
  %1880 = vmatmul.mubr.f32.gmra.mxu0 %v1773
  %v1881 = vpop.f32.mrf.mxu0
  %v1882 = vadd.f32 %v1713, %v1881
  %v1883 = vpop.f32.mrf.mxu0
  %1884 = vmatprep.mubr.f32.mxu0 0.0
  %1885 = vmatmul.mubr.f32.gmra.mxu0 %v1776
  %v1886 = vpop.f32.mrf.mxu0
  %v1887 = vadd.f32 %v1718, %v1886
  %v1888 = vpop.f32.mrf.mxu0
  %1889 = vmatprep.mubr.f32.mxu0 0.0
  %1890 = vmatmul.mubr.f32.gmra.mxu0 %v1779
  %v1891 = vpop.f32.mrf.mxu0
  %v1892 = vadd.f32 %v1723, %v1891
  %v1893 = vpop.f32.mrf.mxu0
  %1894 = vmatprep.mubr.f32.mxu0 0.0
  %1895 = vmatmul.mubr.f32.gmra.mxu0 %v1782
  %v1896 = vpop.f32.mrf.mxu0
  %v1897 = vadd.f32 %v1728, %v1896
  %v1898 = vpop.f32.mrf.mxu0
  %1899 = vmatprep.mubr.f32.mxu0 0.0
  %1900 = vmatmul.mubr.f32.gmra.mxu0 %v1785
  %v1901 = vpop.f32.mrf.mxu0
  %v1902 = vadd.f32 %v1733, %v1901
  %v1903 = vpop.f32.mrf.mxu0
  %1904 = vmatprep.mubr.f32.mxu0 0.0
  %1905 = vmatmul.mubr.f32.gmra.mxu0 %v1788
  %v1906 = vpop.f32.mrf.mxu0
  %v1907 = vadd.f32 %v1738, %v1906
  %v1908 = vpop.f32.mrf.mxu0
  %1909 = vmatprep.mubr.f32.mxu0 0.0
  %1910 = vmatmul.mubr.f32.gmra.mxu0 %v1791
  %v1911 = vpop.f32.mrf.mxu0
  %v1912 = vadd.f32 %v1743, %v1911
  %v1913 = vpop.f32.mrf.mxu0
  %1914 = vmatprep.mubr.f32.mxu0 0.0
  %1915 = vmatmul.mubr.f32.gmra.mxu0 %v1794
  %v1916 = vpop.f32.mrf.mxu0
  %v1917 = vadd.f32 %v1748, %v1916
  %v1918 = vpop.f32.mrf.mxu0
  %1919 = vmatprep.mubr.f32.mxu0 0.0
  %1920 = vmatmul.mubr.f32.gmra.mxu0 %v1797
  %v1921 = vpop.f32.mrf.mxu0
  %v1922 = vadd.f32 %v1753, %v1921
  %v1923 = vpop.f32.mrf.mxu0
  %1924 = vmatprep.mubr.f32.mxu0 0.0
  %1925 = vmatmul.mubr.f32.gmra.mxu0 %v1800
  %v1926 = vpop.f32.mrf.mxu0
  %v1927 = vadd.f32 %v1758, %v1926
  %v1928 = vpop.f32.mrf.mxu0
  %1929 = vmatprep.mubr.f32.mxu0 0.0
  %1930 = vmatmul.mubr.f32.gmra.mxu0 %v1803
  %v1931 = vpop.f32.mrf.mxu0
  %v1932 = vadd.f32 %v1763, %v1931
  %v1933 = vpop.f32.mrf.mxu0
  %1934 = vdwg.mxu0
  %1935 = vrot.lane.b32.xlu0 %v241, 64
  %v1936 = vpop.permute.xlu0 %1935
  %1937 = vrot.lane.b32.xlu0 %v247, 64
  %v1938 = vpop.permute.xlu0 %1937
  %1939 = vrot.lane.b32.xlu0 %v253, 64
  %v1940 = vpop.permute.xlu0 %1939
  %1941 = vrot.lane.b32.xlu0 %v259, 64
  %v1942 = vpop.permute.xlu0 %1941
  %1943 = vrot.lane.b32.xlu0 %v265, 64
  %v1944 = vpop.permute.xlu0 %1943
  %1945 = vrot.lane.b32.xlu0 %v271, 64
  %v1946 = vpop.permute.xlu0 %1945
  %1947 = vrot.lane.b32.xlu0 %v277, 64
  %v1948 = vpop.permute.xlu0 %1947
  %1949 = vrot.lane.b32.xlu0 %v283, 64
  %v1950 = vpop.permute.xlu0 %1949
  %1951 = vrot.lane.b32.xlu0 %v289, 64
  %v1952 = vpop.permute.xlu0 %1951
  %1953 = vrot.lane.b32.xlu0 %v295, 64
  %v1954 = vpop.permute.xlu0 %1953
  %1955 = vrot.lane.b32.xlu0 %v301, 64
  %v1956 = vpop.permute.xlu0 %1955
  %1957 = vrot.lane.b32.xlu0 %v307, 64
  %v1958 = vpop.permute.xlu0 %1957
  %1959 = vrot.lane.b32.xlu0 %v313, 64
  %v1960 = vpop.permute.xlu0 %1959
  %1961 = vrot.lane.b32.xlu0 %v243, 96
  %v1962 = vpop.permute.xlu0 %1961
  %1963 = vrot.lane.b32.xlu0 %v249, 96
  %v1964 = vpop.permute.xlu0 %1963
  %1965 = vrot.lane.b32.xlu0 %v255, 96
  %v1966 = vpop.permute.xlu0 %1965
  %1967 = vrot.lane.b32.xlu0 %v261, 96
  %v1968 = vpop.permute.xlu0 %1967
  %1969 = vrot.lane.b32.xlu0 %v267, 96
  %v1970 = vpop.permute.xlu0 %1969
  %1971 = vrot.lane.b32.xlu0 %v273, 96
  %v1972 = vpop.permute.xlu0 %1971
  %1973 = vrot.lane.b32.xlu0 %v279, 96
  %v1974 = vpop.permute.xlu0 %1973
  %1975 = vrot.lane.b32.xlu0 %v285, 96
  %v1976 = vpop.permute.xlu0 %1975
  %1977 = vrot.lane.b32.xlu0 %v291, 96
  %v1978 = vpop.permute.xlu0 %1977
  %1979 = vrot.lane.b32.xlu0 %v297, 96
  %v1980 = vpop.permute.xlu0 %1979
  %1981 = vrot.lane.b32.xlu0 %v303, 96
  %v1982 = vpop.permute.xlu0 %1981
  %1983 = vrot.lane.b32.xlu0 %v309, 96
  %v1984 = vpop.permute.xlu0 %1983
  %1985 = vrot.lane.b32.xlu0 %v315, 96
  %v1986 = vpop.permute.xlu0 %1985
  %v1987 = vsel %vm486, %v1936, 0
  %v1989 = vsel %vm486, %v1938, 0
  %v1991 = vsel %vm486, %v1940, 0
  %v1993 = vsel %vm486, %v1942, 0
  %v1995 = vsel %vm486, %v1944, 0
  %v1997 = vsel %vm486, %v1946, 0
  %v1999 = vsel %vm486, %v1948, 0
  %v2001 = vsel %vm486, %v1950, 0
  %v2003 = vsel %vm486, %v1952, 0
  %v2005 = vsel %vm486, %v1954, 0
  %v2007 = vsel %vm486, %v1956, 0
  %v2009 = vsel %vm486, %v1958, 0
  %v2011 = vsel %vm486, %v1960, 0
  %v2013 = vsel %vm486, %v1962, 0
  %v2015 = vsel %vm486, %v1964, 0
  %v2017 = vsel %vm486, %v1966, 0
  %v2019 = vsel %vm486, %v1968, 0
  %v2021 = vsel %vm486, %v1970, 0
  %v2023 = vsel %vm486, %v1972, 0
  %v2025 = vsel %vm486, %v1974, 0
  %v2027 = vsel %vm486, %v1976, 0
  %v2029 = vsel %vm486, %v1978, 0
  %v2031 = vsel %vm486, %v1980, 0
  %v2033 = vsel %vm486, %v1982, 0
  %v2035 = vsel %vm486, %v1984, 0
  %v2037 = vsel %vm486, %v1986, 0
  %2039 = vmatprep.subr.mxu0 0.0
  %2040 = vmatpush1.xpose.msra.mxu0 0.0
  %2041 = vmatprep.subr.mxu0 0.0
  %2042 = vmatpush1.xpose.msra.mxu0 0.0
  %2043 = vmatprep.subr.mxu0 0.0
  %2044 = vmatpush1.xpose.msra.mxu0 0.0
  %2045 = vmatprep.subr.mxu0 0.0
  %2046 = vmatpush1.xpose.msra.mxu0 %v2037
  %2047 = vmatprep.subr.mxu0 0.0
  %2048 = vmatpush1.xpose.msra.mxu0 %v2035
  %2049 = vmatprep.subr.mxu0 0.0
  %2050 = vmatpush1.xpose.msra.mxu0 %v2033
  %2051 = vmatprep.subr.mxu0 0.0
  %2052 = vmatpush1.xpose.msra.mxu0 %v2031
  %2053 = vmatprep.subr.mxu0 0.0
  %2054 = vmatpush1.xpose.msra.mxu0 %v2029
  %2055 = vmatprep.subr.mxu0 0.0
  %2056 = vmatpush1.xpose.msra.mxu0 %v2027
  %2057 = vmatprep.subr.mxu0 0.0
  %2058 = vmatpush1.xpose.msra.mxu0 %v2025
  %2059 = vmatprep.subr.mxu0 0.0
  %2060 = vmatpush1.xpose.msra.mxu0 %v2023
  %2061 = vmatprep.subr.mxu0 0.0
  %2062 = vmatpush1.xpose.msra.mxu0 %v2021
  %2063 = vmatprep.subr.mxu0 0.0
  %2064 = vmatpush1.xpose.msra.mxu0 %v2019
  %2065 = vmatprep.subr.mxu0 0.0
  %2066 = vmatpush1.xpose.msra.mxu0 %v2017
  %2067 = vmatprep.subr.mxu0 0.0
  %2068 = vmatpush1.xpose.msra.mxu0 %v2015
  %2069 = vmatprep.subr.mxu0 0.0
  %2070 = vmatpush1.xpose.msra.mxu0 %v2013
  %2071 = vmatprep.subr.mxu0 0.0
  %2072 = vmatpush2.xpose.msra.mxu0 0.0
  %2073 = vmatprep.subr.mxu0 0.0
  %2074 = vmatpush2.xpose.msra.mxu0 0.0
  %2075 = vmatprep.subr.mxu0 0.0
  %2076 = vmatpush2.xpose.msra.mxu0 0.0
  %2077 = vmatprep.subr.mxu0 0.0
  %2078 = vmatpush2.xpose.msra.mxu0 0.0
  %2079 = vmatprep.subr.mxu0 0.0
  %2080 = vmatpush2.xpose.msra.mxu0 0.0
  %2081 = vmatprep.subr.mxu0 0.0
  %2082 = vmatpush2.xpose.msra.mxu0 0.0
  %2083 = vmatprep.subr.mxu0 0.0
  %2084 = vmatpush2.xpose.msra.mxu0 0.0
  %2085 = vmatprep.subr.mxu0 0.0
  %2086 = vmatpush2.xpose.msra.mxu0 0.0
  %2087 = vmatprep.subr.mxu0 0.0
  %2088 = vmatpush2.xpose.msra.mxu0 0.0
  %2089 = vmatprep.subr.mxu0 0.0
  %2090 = vmatpush2.xpose.msra.mxu0 0.0
  %2091 = vmatprep.subr.mxu0 0.0
  %2092 = vmatpush2.xpose.msra.mxu0 0.0
  %2093 = vmatprep.subr.mxu0 0.0
  %2094 = vmatpush2.xpose.msra.mxu0 0.0
  %2095 = vmatprep.subr.mxu0 0.0
  %2096 = vmatpush2.xpose.msra.mxu0 0.0
  %2097 = vmatprep.subr.mxu0 0.0
  %2098 = vmatpush2.xpose.msra.mxu0 0.0
  %2099 = vmatprep.subr.mxu0 0.0
  %2100 = vmatpush2.xpose.msra.mxu0 0.0
  %2101 = vmatprep.subr.mxu0 0.0
  %2102 = vmatpush2.xpose.msra.mxu0 0.0
  %2103 = vmatprep.mubr.f32.mxu0 0.0
  %2104 = vmatmul.mubr.f32.gmra.mxu0 %v1987
  %v2105 = vpop.f32.mrf.mxu0
  %v2106 = vadd.f32 0.0, %v2105
  %v2107 = vpop.f32.mrf.mxu0
  %2108 = vmatprep.mubr.f32.mxu0 0.0
  %2109 = vmatmul.mubr.f32.gmra.mxu0 %v1989
  %v2110 = vpop.f32.mrf.mxu0
  %v2111 = vadd.f32 0.0, %v2110
  %v2112 = vpop.f32.mrf.mxu0
  %2113 = vmatprep.mubr.f32.mxu0 0.0
  %2114 = vmatmul.mubr.f32.gmra.mxu0 %v1991
  %v2115 = vpop.f32.mrf.mxu0
  %v2116 = vadd.f32 0.0, %v2115
  %v2117 = vpop.f32.mrf.mxu0
  %2118 = vmatprep.mubr.f32.mxu0 0.0
  %2119 = vmatmul.mubr.f32.gmra.mxu0 %v1993
  %v2120 = vpop.f32.mrf.mxu0
  %v2121 = vadd.f32 0.0, %v2120
  %v2122 = vpop.f32.mrf.mxu0
  %2123 = vmatprep.mubr.f32.mxu0 0.0
  %2124 = vmatmul.mubr.f32.gmra.mxu0 %v1995
  %v2125 = vpop.f32.mrf.mxu0
  %v2126 = vadd.f32 0.0, %v2125
  %v2127 = vpop.f32.mrf.mxu0
  %2128 = vmatprep.mubr.f32.mxu0 0.0
  %2129 = vmatmul.mubr.f32.gmra.mxu0 %v1997
  %v2130 = vpop.f32.mrf.mxu0
  %v2131 = vadd.f32 0.0, %v2130
  %v2132 = vpop.f32.mrf.mxu0
  %2133 = vmatprep.mubr.f32.mxu0 0.0
  %2134 = vmatmul.mubr.f32.gmra.mxu0 %v1999
  %v2135 = vpop.f32.mrf.mxu0
  %v2136 = vadd.f32 0.0, %v2135
  %v2137 = vpop.f32.mrf.mxu0
  %2138 = vmatprep.mubr.f32.mxu0 0.0
  %2139 = vmatmul.mubr.f32.gmra.mxu0 %v2001
  %v2140 = vpop.f32.mrf.mxu0
  %v2141 = vadd.f32 0.0, %v2140
  %v2142 = vpop.f32.mrf.mxu0
  %2143 = vmatprep.mubr.f32.mxu0 0.0
  %2144 = vmatmul.mubr.f32.gmra.mxu0 %v2003
  %v2145 = vpop.f32.mrf.mxu0
  %v2146 = vadd.f32 0.0, %v2145
  %v2147 = vpop.f32.mrf.mxu0
  %2148 = vmatprep.mubr.f32.mxu0 0.0
  %2149 = vmatmul.mubr.f32.gmra.mxu0 %v2005
  %v2150 = vpop.f32.mrf.mxu0
  %v2151 = vadd.f32 0.0, %v2150
  %v2152 = vpop.f32.mrf.mxu0
  %2153 = vmatprep.mubr.f32.mxu0 0.0
  %2154 = vmatmul.mubr.f32.gmra.mxu0 %v2007
  %v2155 = vpop.f32.mrf.mxu0
  %v2156 = vadd.f32 0.0, %v2155
  %v2157 = vpop.f32.mrf.mxu0
  %2158 = vmatprep.mubr.f32.mxu0 0.0
  %2159 = vmatmul.mubr.f32.gmra.mxu0 %v2009
  %v2160 = vpop.f32.mrf.mxu0
  %v2161 = vadd.f32 0.0, %v2160
  %v2162 = vpop.f32.mrf.mxu0
  %2163 = vmatprep.mubr.f32.mxu0 0.0
  %2164 = vmatmul.mubr.f32.gmra.mxu0 %v2011
  %v2165 = vpop.f32.mrf.mxu0
  %v2166 = vadd.f32 0.0, %v2165
  %v2167 = vpop.f32.mrf.mxu0
  %2168 = vdwg.mxu0
  %v2169 = vsel %vm669, %v2106, -inf
  %2170 = vmax.xlane.f32.xlu0 %v2169
  %v2171 = vpop.xlane.xlu0 %2170
  %v2172 = vsel %vm669, %v2111, -inf
  %2173 = vmax.xlane.f32.xlu0 %v2172
  %v2174 = vpop.xlane.xlu0 %2173
  %v2175 = vsel %vm669, %v2116, -inf
  %2176 = vmax.xlane.f32.xlu0 %v2175
  %v2177 = vpop.xlane.xlu0 %2176
  %v2178 = vsel %vm669, %v2121, -inf
  %2179 = vmax.xlane.f32.xlu0 %v2178
  %v2180 = vpop.xlane.xlu0 %2179
  %v2181 = vsel %vm669, %v2126, -inf
  %2182 = vmax.xlane.f32.xlu0 %v2181
  %v2183 = vpop.xlane.xlu0 %2182
  %v2184 = vsel %vm669, %v2131, -inf
  %2185 = vmax.xlane.f32.xlu0 %v2184
  %v2186 = vpop.xlane.xlu0 %2185
  %v2187 = vsel %vm669, %v2136, -inf
  %2188 = vmax.xlane.f32.xlu0 %v2187
  %v2189 = vpop.xlane.xlu0 %2188
  %v2190 = vsel %vm669, %v2141, -inf
  %2191 = vmax.xlane.f32.xlu0 %v2190
  %v2192 = vpop.xlane.xlu0 %2191
  %v2193 = vsel %vm669, %v2146, -inf
  %2194 = vmax.xlane.f32.xlu0 %v2193
  %v2195 = vpop.xlane.xlu0 %2194
  %v2196 = vsel %vm669, %v2151, -inf
  %2197 = vmax.xlane.f32.xlu0 %v2196
  %v2198 = vpop.xlane.xlu0 %2197
  %v2199 = vsel %vm669, %v2156, -inf
  %2200 = vmax.xlane.f32.xlu0 %v2199
  %v2201 = vpop.xlane.xlu0 %2200
  %v2202 = vsel %vm669, %v2161, -inf
  %2203 = vmax.xlane.f32.xlu0 %v2202
  %v2204 = vpop.xlane.xlu0 %2203
  %v2205 = vsel %vm706, %v2166, -inf
  %2206 = vmax.xlane.f32.xlu0 %v2205
  %v2207 = vpop.xlane.xlu0 %2206
  %v2208 = vsub.f32 %v2106, %v2171
  %v2209 = vsub.f32 %v2111, %v2174
  %v2210 = vsub.f32 %v2116, %v2177
  %v2211 = vsub.f32 %v2121, %v2180
  %v2212 = vsub.f32 %v2126, %v2183
  %v2213 = vsub.f32 %v2131, %v2186
  %v2214 = vsub.f32 %v2136, %v2189
  %v2215 = vsub.f32 %v2141, %v2192
  %v2216 = vsub.f32 %v2146, %v2195
  %v2217 = vsub.f32 %v2151, %v2198
  %v2218 = vsub.f32 %v2156, %v2201
  %v2219 = vsub.f32 %v2161, %v2204
  %v2220 = vsub.f32 %v2166, %v2207
  %v2221 = vmul.f32 %v2208, 1.442695
  %v2222 = vpow.pop %v2221
  %v2223 = vmul.f32 %v2209, 1.442695
  %v2224 = vpow.pop %v2223
  %v2225 = vmul.f32 %v2210, 1.442695
  %v2226 = vpow.pop %v2225
  %v2227 = vmul.f32 %v2211, 1.442695
  %v2228 = vpow.pop %v2227
  %v2229 = vmul.f32 %v2212, 1.442695
  %v2230 = vpow.pop %v2229
  %v2231 = vmul.f32 %v2213, 1.442695
  %v2232 = vpow.pop %v2231
  %v2233 = vmul.f32 %v2214, 1.442695
  %v2234 = vpow.pop %v2233
  %v2235 = vmul.f32 %v2215, 1.442695
  %v2236 = vpow.pop %v2235
  %v2237 = vmul.f32 %v2216, 1.442695
  %v2238 = vpow.pop %v2237
  %v2239 = vmul.f32 %v2217, 1.442695
  %v2240 = vpow.pop %v2239
  %v2241 = vmul.f32 %v2218, 1.442695
  %v2242 = vpow.pop %v2241
  %v2243 = vmul.f32 %v2219, 1.442695
  %v2244 = vpow.pop %v2243
  %v2245 = vmul.f32 %v2220, 1.442695
  %v2246 = vpow.pop %v2245
  %v2247 = vsel %vm669, %v2222, 0.0
  %2248 = vadd.xlane.f32.xlu0 %v2247
  %v2249 = vpop.xlane.xlu0 %2248
  %v2250 = vsel %vm669, %v2224, 0.0
  %2251 = vadd.xlane.f32.xlu0 %v2250
  %v2252 = vpop.xlane.xlu0 %2251
  %v2253 = vsel %vm669, %v2226, 0.0
  %2254 = vadd.xlane.f32.xlu0 %v2253
  %v2255 = vpop.xlane.xlu0 %2254
  %v2256 = vsel %vm669, %v2228, 0.0
  %2257 = vadd.xlane.f32.xlu0 %v2256
  %v2258 = vpop.xlane.xlu0 %2257
  %v2259 = vsel %vm669, %v2230, 0.0
  %2260 = vadd.xlane.f32.xlu0 %v2259
  %v2261 = vpop.xlane.xlu0 %2260
  %v2262 = vsel %vm669, %v2232, 0.0
  %2263 = vadd.xlane.f32.xlu0 %v2262
  %v2264 = vpop.xlane.xlu0 %2263
  %v2265 = vsel %vm669, %v2234, 0.0
  %2266 = vadd.xlane.f32.xlu0 %v2265
  %v2267 = vpop.xlane.xlu0 %2266
  %v2268 = vsel %vm669, %v2236, 0.0
  %2269 = vadd.xlane.f32.xlu0 %v2268
  %v2270 = vpop.xlane.xlu0 %2269
  %v2271 = vsel %vm669, %v2238, 0.0
  %2272 = vadd.xlane.f32.xlu0 %v2271
  %v2273 = vpop.xlane.xlu0 %2272
  %v2274 = vsel %vm669, %v2240, 0.0
  %2275 = vadd.xlane.f32.xlu0 %v2274
  %v2276 = vpop.xlane.xlu0 %2275
  %v2277 = vsel %vm669, %v2242, 0.0
  %2278 = vadd.xlane.f32.xlu0 %v2277
  %v2279 = vpop.xlane.xlu0 %2278
  %v2280 = vsel %vm669, %v2244, 0.0
  %2281 = vadd.xlane.f32.xlu0 %v2280
  %v2282 = vpop.xlane.xlu0 %2281
  %v2283 = vsel %vm706, %v2246, 0.0
  %2284 = vadd.xlane.f32.xlu0 %v2283
  %v2285 = vpop.xlane.xlu0 %2284
  %v2286 = vrcp.pop %v2249
  %v2287 = vrcp.pop %v2252
  %v2288 = vrcp.pop %v2255
  %v2289 = vrcp.pop %v2258
  %v2290 = vrcp.pop %v2261
  %v2291 = vrcp.pop %v2264
  %v2292 = vrcp.pop %v2267
  %v2293 = vrcp.pop %v2270
  %v2294 = vrcp.pop %v2273
  %v2295 = vrcp.pop %v2276
  %v2296 = vrcp.pop %v2279
  %v2297 = vrcp.pop %v2282
  %v2298 = vrcp.pop %v2285
  %v2299 = vmul.f32 %v2222, %v2286
  %v2300 = vmul.f32 %v2224, %v2287
  %v2301 = vmul.f32 %v2226, %v2288
  %v2302 = vmul.f32 %v2228, %v2289
  %v2303 = vmul.f32 %v2230, %v2290
  %v2304 = vmul.f32 %v2232, %v2291
  %v2305 = vmul.f32 %v2234, %v2292
  %v2306 = vmul.f32 %v2236, %v2293
  %v2307 = vmul.f32 %v2238, %v2294
  %v2308 = vmul.f32 %v2240, %v2295
  %v2309 = vmul.f32 %v2242, %v2296
  %v2310 = vmul.f32 %v2244, %v2297
  %v2311 = vmul.f32 %v2246, %v2298
  %v2313 = vsel %vm669, %v2299, 0
  %v2316 = vsel %vm669, %v2300, 0
  %v2319 = vsel %vm669, %v2301, 0
  %v2322 = vsel %vm669, %v2302, 0
  %v2325 = vsel %vm669, %v2303, 0
  %v2328 = vsel %vm669, %v2304, 0
  %v2331 = vsel %vm669, %v2305, 0
  %v2334 = vsel %vm669, %v2306, 0
  %v2337 = vsel %vm669, %v2307, 0
  %v2340 = vsel %vm669, %v2308, 0
  %v2343 = vsel %vm669, %v2309, 0
  %v2346 = vsel %vm669, %v2310, 0
  %v2349 = vsel %vm669, %v2311, 0
  %v2352 = vsel %vm904, %v444, 0
  %2354 = vmatprep.subr.mxu0 0.0
  %2355 = vmatpush1.msra.mxu0 0.0
  %2356 = vmatprep.subr.mxu0 0.0
  %2357 = vmatpush1.msra.mxu0 0.0
  %2358 = vmatprep.subr.mxu0 0.0
  %2359 = vmatpush1.msra.mxu0 0.0
  %2360 = vmatprep.subr.mxu0 0.0
  %2361 = vmatpush1.msra.mxu0 %v2352
  %2362 = vmatprep.subr.mxu0 0.0
  %2363 = vmatpush1.msra.mxu0 %v439
  %2364 = vmatprep.subr.mxu0 0.0
  %2365 = vmatpush1.msra.mxu0 %v434
  %2366 = vmatprep.subr.mxu0 0.0
  %2367 = vmatpush1.msra.mxu0 %v429
  %2368 = vmatprep.subr.mxu0 0.0
  %2369 = vmatpush1.msra.mxu0 %v424
  %2370 = vmatprep.subr.mxu0 0.0
  %2371 = vmatpush1.msra.mxu0 %v419
  %2372 = vmatprep.subr.mxu0 0.0
  %2373 = vmatpush1.msra.mxu0 %v414
  %2374 = vmatprep.subr.mxu0 0.0
  %2375 = vmatpush1.msra.mxu0 %v409
  %2376 = vmatprep.subr.mxu0 0.0
  %2377 = vmatpush1.msra.mxu0 %v404
  %2378 = vmatprep.subr.mxu0 0.0
  %2379 = vmatpush1.msra.mxu0 %v399
  %2380 = vmatprep.subr.mxu0 0.0
  %2381 = vmatpush1.msra.mxu0 %v394
  %2382 = vmatprep.subr.mxu0 0.0
  %2383 = vmatpush1.msra.mxu0 %v389
  %2384 = vmatprep.subr.mxu0 0.0
  %2385 = vmatpush1.msra.mxu0 %v384
  %2386 = vmatprep.subr.mxu0 0.0
  %2387 = vmatpush2.msra.mxu0 0.0
  %2388 = vmatprep.subr.mxu0 0.0
  %2389 = vmatpush2.msra.mxu0 0.0
  %2390 = vmatprep.subr.mxu0 0.0
  %2391 = vmatpush2.msra.mxu0 0.0
  %2392 = vmatprep.subr.mxu0 0.0
  %2393 = vmatpush2.msra.mxu0 0.0
  %2394 = vmatprep.subr.mxu0 0.0
  %2395 = vmatpush2.msra.mxu0 0.0
  %2396 = vmatprep.subr.mxu0 0.0
  %2397 = vmatpush2.msra.mxu0 0.0
  %2398 = vmatprep.subr.mxu0 0.0
  %2399 = vmatpush2.msra.mxu0 0.0
  %2400 = vmatprep.subr.mxu0 0.0
  %2401 = vmatpush2.msra.mxu0 0.0
  %2402 = vmatprep.subr.mxu0 0.0
  %2403 = vmatpush2.msra.mxu0 0.0
  %2404 = vmatprep.subr.mxu0 0.0
  %2405 = vmatpush2.msra.mxu0 0.0
  %2406 = vmatprep.subr.mxu0 0.0
  %2407 = vmatpush2.msra.mxu0 0.0
  %2408 = vmatprep.subr.mxu0 0.0
  %2409 = vmatpush2.msra.mxu0 0.0
  %2410 = vmatprep.subr.mxu0 0.0
  %2411 = vmatpush2.msra.mxu0 0.0
  %2412 = vmatprep.subr.mxu0 0.0
  %2413 = vmatpush2.msra.mxu0 0.0
  %2414 = vmatprep.subr.mxu0 0.0
  %2415 = vmatpush2.msra.mxu0 0.0
  %2416 = vmatprep.subr.mxu0 0.0
  %2417 = vmatpush2.msra.mxu0 0.0
  %2418 = vmatprep.mubr.f32.mxu0 0.0
  %2419 = vmatmul.mubr.f32.gmra.mxu0 %v2313
  %v2420 = vpop.f32.mrf.mxu0
  %v2421 = vadd.f32 0.0, %v2420
  %v2422 = vpop.f32.mrf.mxu0
  %2423 = vmatprep.mubr.f32.mxu0 0.0
  %2424 = vmatmul.mubr.f32.gmra.mxu0 %v2316
  %v2425 = vpop.f32.mrf.mxu0
  %v2426 = vadd.f32 0.0, %v2425
  %v2427 = vpop.f32.mrf.mxu0
  %2428 = vmatprep.mubr.f32.mxu0 0.0
  %2429 = vmatmul.mubr.f32.gmra.mxu0 %v2319
  %v2430 = vpop.f32.mrf.mxu0
  %v2431 = vadd.f32 0.0, %v2430
  %v2432 = vpop.f32.mrf.mxu0
  %2433 = vmatprep.mubr.f32.mxu0 0.0
  %2434 = vmatmul.mubr.f32.gmra.mxu0 %v2322
  %v2435 = vpop.f32.mrf.mxu0
  %v2436 = vadd.f32 0.0, %v2435
  %v2437 = vpop.f32.mrf.mxu0
  %2438 = vmatprep.mubr.f32.mxu0 0.0
  %2439 = vmatmul.mubr.f32.gmra.mxu0 %v2325
  %v2440 = vpop.f32.mrf.mxu0
  %v2441 = vadd.f32 0.0, %v2440
  %v2442 = vpop.f32.mrf.mxu0
  %2443 = vmatprep.mubr.f32.mxu0 0.0
  %2444 = vmatmul.mubr.f32.gmra.mxu0 %v2328
  %v2445 = vpop.f32.mrf.mxu0
  %v2446 = vadd.f32 0.0, %v2445
  %v2447 = vpop.f32.mrf.mxu0
  %2448 = vmatprep.mubr.f32.mxu0 0.0
  %2449 = vmatmul.mubr.f32.gmra.mxu0 %v2331
  %v2450 = vpop.f32.mrf.mxu0
  %v2451 = vadd.f32 0.0, %v2450
  %v2452 = vpop.f32.mrf.mxu0
  %2453 = vmatprep.mubr.f32.mxu0 0.0
  %2454 = vmatmul.mubr.f32.gmra.mxu0 %v2334
  %v2455 = vpop.f32.mrf.mxu0
  %v2456 = vadd.f32 0.0, %v2455
  %v2457 = vpop.f32.mrf.mxu0
  %2458 = vmatprep.mubr.f32.mxu0 0.0
  %2459 = vmatmul.mubr.f32.gmra.mxu0 %v2337
  %v2460 = vpop.f32.mrf.mxu0
  %v2461 = vadd.f32 0.0, %v2460
  %v2462 = vpop.f32.mrf.mxu0
  %2463 = vmatprep.mubr.f32.mxu0 0.0
  %2464 = vmatmul.mubr.f32.gmra.mxu0 %v2340
  %v2465 = vpop.f32.mrf.mxu0
  %v2466 = vadd.f32 0.0, %v2465
  %v2467 = vpop.f32.mrf.mxu0
  %2468 = vmatprep.mubr.f32.mxu0 0.0
  %2469 = vmatmul.mubr.f32.gmra.mxu0 %v2343
  %v2470 = vpop.f32.mrf.mxu0
  %v2471 = vadd.f32 0.0, %v2470
  %v2472 = vpop.f32.mrf.mxu0
  %2473 = vmatprep.mubr.f32.mxu0 0.0
  %2474 = vmatmul.mubr.f32.gmra.mxu0 %v2346
  %v2475 = vpop.f32.mrf.mxu0
  %v2476 = vadd.f32 0.0, %v2475
  %v2477 = vpop.f32.mrf.mxu0
  %2478 = vmatprep.mubr.f32.mxu0 0.0
  %2479 = vmatmul.mubr.f32.gmra.mxu0 %v2349
  %v2480 = vpop.f32.mrf.mxu0
  %v2481 = vadd.f32 0.0, %v2480
  %v2482 = vpop.f32.mrf.mxu0
  %2483 = vdwg.mxu0
  %v2485 = vsel %vm486, %v2421, 0
  %v2488 = vsel %vm486, %v2426, 0
  %v2491 = vsel %vm486, %v2431, 0
  %v2494 = vsel %vm486, %v2436, 0
  %v2497 = vsel %vm486, %v2441, 0
  %v2500 = vsel %vm486, %v2446, 0
  %v2503 = vsel %vm486, %v2451, 0
  %v2506 = vsel %vm486, %v2456, 0
  %v2509 = vsel %vm486, %v2461, 0
  %v2512 = vsel %vm486, %v2466, 0
  %v2515 = vsel %vm486, %v2471, 0
  %v2518 = vsel %vm486, %v2476, 0
  %v2521 = vsel %vm486, %v2481, 0
  %2523 = vmatprep.subr.mxu0 0.0
  %2524 = vmatpush1.msra.mxu0 0.0
  %2525 = vmatprep.subr.mxu0 0.0
  %2526 = vmatpush1.msra.mxu0 0.0
  %2527 = vmatprep.subr.mxu0 0.0
  %2528 = vmatpush1.msra.mxu0 0.0
  %2529 = vmatprep.subr.mxu0 0.0
  %2530 = vmatpush1.msra.mxu0 0.0
  %2531 = vmatprep.subr.mxu0 0.0
  %2532 = vmatpush1.msra.mxu0 0.0
  %2533 = vmatprep.subr.mxu0 0.0
  %2534 = vmatpush1.msra.mxu0 0.0
  %2535 = vmatprep.subr.mxu0 0.0
  %2536 = vmatpush1.msra.mxu0 0.0
  %2537 = vmatprep.subr.mxu0 0.0
  %2538 = vmatpush1.msra.mxu0 0.0
  %2539 = vmatprep.subr.mxu0 0.0
  %2540 = vmatpush1.msra.mxu0 0.0
  %2541 = vmatprep.subr.mxu0 0.0
  %2542 = vmatpush1.msra.mxu0 0.0
  %2543 = vmatprep.subr.mxu0 0.0
  %2544 = vmatpush1.msra.mxu0 0.0
  %2545 = vmatprep.subr.mxu0 0.0
  %2546 = vmatpush1.msra.mxu0 0.0
  %2547 = vmatprep.subr.mxu0 0.0
  %2548 = vmatpush1.msra.mxu0 %v68
  %2549 = vmatprep.subr.mxu0 0.0
  %2550 = vmatpush1.msra.mxu0 %v67
  %2551 = vmatprep.subr.mxu0 0.0
  %2552 = vmatpush1.msra.mxu0 %v66
  %2553 = vmatprep.subr.mxu0 0.0
  %2554 = vmatpush1.msra.mxu0 %v65
  %2555 = vmatprep.subr.mxu0 0.0
  %2556 = vmatpush2.msra.mxu0 0.0
  %2557 = vmatprep.subr.mxu0 0.0
  %2558 = vmatpush2.msra.mxu0 0.0
  %2559 = vmatprep.subr.mxu0 0.0
  %2560 = vmatpush2.msra.mxu0 0.0
  %2561 = vmatprep.subr.mxu0 0.0
  %2562 = vmatpush2.msra.mxu0 0.0
  %2563 = vmatprep.subr.mxu0 0.0
  %2564 = vmatpush2.msra.mxu0 0.0
  %2565 = vmatprep.subr.mxu0 0.0
  %2566 = vmatpush2.msra.mxu0 0.0
  %2567 = vmatprep.subr.mxu0 0.0
  %2568 = vmatpush2.msra.mxu0 0.0
  %2569 = vmatprep.subr.mxu0 0.0
  %2570 = vmatpush2.msra.mxu0 0.0
  %2571 = vmatprep.subr.mxu0 0.0
  %2572 = vmatpush2.msra.mxu0 0.0
  %2573 = vmatprep.subr.mxu0 0.0
  %2574 = vmatpush2.msra.mxu0 0.0
  %2575 = vmatprep.subr.mxu0 0.0
  %2576 = vmatpush2.msra.mxu0 0.0
  %2577 = vmatprep.subr.mxu0 0.0
  %2578 = vmatpush2.msra.mxu0 0.0
  %2579 = vmatprep.subr.mxu0 0.0
  %2580 = vmatpush2.msra.mxu0 0.0
  %2581 = vmatprep.subr.mxu0 0.0
  %2582 = vmatpush2.msra.mxu0 0.0
  %2583 = vmatprep.subr.mxu0 0.0
  %2584 = vmatpush2.msra.mxu0 0.0
  %2585 = vmatprep.subr.mxu0 0.0
  %2586 = vmatpush2.msra.mxu0 0.0
  %2587 = vmatprep.mubr.f32.mxu0 0.0
  %2588 = vmatmul.mubr.f32.gmra.mxu0 %v2485
  %v2589 = vpop.f32.mrf.mxu0
  %v2590 = vadd.f32 0.0, %v2589
  %v2591 = vpop.f32.mrf.mxu0
  %2592 = vmatprep.mubr.f32.mxu0 0.0
  %2593 = vmatmul.mubr.f32.gmra.mxu0 %v2488
  %v2594 = vpop.f32.mrf.mxu0
  %v2595 = vadd.f32 0.0, %v2594
  %v2596 = vpop.f32.mrf.mxu0
  %2597 = vmatprep.mubr.f32.mxu0 0.0
  %2598 = vmatmul.mubr.f32.gmra.mxu0 %v2491
  %v2599 = vpop.f32.mrf.mxu0
  %v2600 = vadd.f32 0.0, %v2599
  %v2601 = vpop.f32.mrf.mxu0
  %2602 = vmatprep.mubr.f32.mxu0 0.0
  %2603 = vmatmul.mubr.f32.gmra.mxu0 %v2494
  %v2604 = vpop.f32.mrf.mxu0
  %v2605 = vadd.f32 0.0, %v2604
  %v2606 = vpop.f32.mrf.mxu0
  %2607 = vmatprep.mubr.f32.mxu0 0.0
  %2608 = vmatmul.mubr.f32.gmra.mxu0 %v2497
  %v2609 = vpop.f32.mrf.mxu0
  %v2610 = vadd.f32 0.0, %v2609
  %v2611 = vpop.f32.mrf.mxu0
  %2612 = vmatprep.mubr.f32.mxu0 0.0
  %2613 = vmatmul.mubr.f32.gmra.mxu0 %v2500
  %v2614 = vpop.f32.mrf.mxu0
  %v2615 = vadd.f32 0.0, %v2614
  %v2616 = vpop.f32.mrf.mxu0
  %2617 = vmatprep.mubr.f32.mxu0 0.0
  %2618 = vmatmul.mubr.f32.gmra.mxu0 %v2503
  %v2619 = vpop.f32.mrf.mxu0
  %v2620 = vadd.f32 0.0, %v2619
  %v2621 = vpop.f32.mrf.mxu0
  %2622 = vmatprep.mubr.f32.mxu0 0.0
  %2623 = vmatmul.mubr.f32.gmra.mxu0 %v2506
  %v2624 = vpop.f32.mrf.mxu0
  %v2625 = vadd.f32 0.0, %v2624
  %v2626 = vpop.f32.mrf.mxu0
  %2627 = vmatprep.mubr.f32.mxu0 0.0
  %2628 = vmatmul.mubr.f32.gmra.mxu0 %v2509
  %v2629 = vpop.f32.mrf.mxu0
  %v2630 = vadd.f32 0.0, %v2629
  %v2631 = vpop.f32.mrf.mxu0
  %2632 = vmatprep.mubr.f32.mxu0 0.0
  %2633 = vmatmul.mubr.f32.gmra.mxu0 %v2512
  %v2634 = vpop.f32.mrf.mxu0
  %v2635 = vadd.f32 0.0, %v2634
  %v2636 = vpop.f32.mrf.mxu0
  %2637 = vmatprep.mubr.f32.mxu0 0.0
  %2638 = vmatmul.mubr.f32.gmra.mxu0 %v2515
  %v2639 = vpop.f32.mrf.mxu0
  %v2640 = vadd.f32 0.0, %v2639
  %v2641 = vpop.f32.mrf.mxu0
  %2642 = vmatprep.mubr.f32.mxu0 0.0
  %2643 = vmatmul.mubr.f32.gmra.mxu0 %v2518
  %v2644 = vpop.f32.mrf.mxu0
  %v2645 = vadd.f32 0.0, %v2644
  %v2646 = vpop.f32.mrf.mxu0
  %2647 = vmatprep.mubr.f32.mxu0 0.0
  %2648 = vmatmul.mubr.f32.gmra.mxu0 %v2521
  %v2649 = vpop.f32.mrf.mxu0
  %v2650 = vadd.f32 0.0, %v2649
  %v2651 = vpop.f32.mrf.mxu0
  %2652 = vdwg.mxu0
  %v2653 = vadd.f32 %v1872, %v2590
  %v2654 = vadd.f32 %v1877, %v2595
  %v2655 = vadd.f32 %v1882, %v2600
  %v2656 = vadd.f32 %v1887, %v2605
  %v2657 = vadd.f32 %v1892, %v2610
  %v2658 = vadd.f32 %v1897, %v2615
  %v2659 = vadd.f32 %v1902, %v2620
  %v2660 = vadd.f32 %v1907, %v2625
  %v2661 = vadd.f32 %v1912, %v2630
  %v2662 = vadd.f32 %v1917, %v2635
  %v2663 = vadd.f32 %v1922, %v2640
  %v2664 = vadd.f32 %v1927, %v2645
  %v2665 = vadd.f32 %v1932, %v2650
  %v2666 = vmax.f32 %v2653, 0.0
  %v2667 = vmax.f32 %v2654, 0.0
  %v2668 = vmax.f32 %v2655, 0.0
  %v2669 = vmax.f32 %v2656, 0.0
  %v2670 = vmax.f32 %v2657, 0.0
  %v2671 = vmax.f32 %v2658, 0.0
  %v2672 = vmax.f32 %v2659, 0.0
  %v2673 = vmax.f32 %v2660, 0.0
  %v2674 = vmax.f32 %v2661, 0.0
  %v2675 = vmax.f32 %v2662, 0.0
  %v2676 = vmax.f32 %v2663, 0.0
  %v2677 = vmax.f32 %v2664, 0.0
  %v2678 = vmax.f32 %v2665, 0.0
  %vm2679 = vcmask 523264
  %v2681 = vsel %vm2679, %v2666, 0
  %v2684 = vsel %vm2679, %v2667, 0
  %v2687 = vsel %vm2679, %v2668, 0
  %v2690 = vsel %vm2679, %v2669, 0
  %v2693 = vsel %vm2679, %v2670, 0
  %v2696 = vsel %vm2679, %v2671, 0
  %v2699 = vsel %vm2679, %v2672, 0
  %v2702 = vsel %vm2679, %v2673, 0
  %v2705 = vsel %vm2679, %v2674, 0
  %v2708 = vsel %vm2679, %v2675, 0
  %v2711 = vsel %vm2679, %v2676, 0
  %v2714 = vsel %vm2679, %v2677, 0
  %v2717 = vsel %vm2679, %v2678, 0
  %2719 = vmatprep.subr.mxu0 0.0
  %2720 = vmatpush1.msra.mxu0 0.0
  %2721 = vmatprep.subr.mxu0 0.0
  %2722 = vmatpush1.msra.mxu0 0.0
  %2723 = vmatprep.subr.mxu0 0.0
  %2724 = vmatpush1.msra.mxu0 0.0
  %2725 = vmatprep.subr.mxu0 0.0
  %2726 = vmatpush1.msra.mxu0 0.0
  %2727 = vmatprep.subr.mxu0 0.0
  %2728 = vmatpush1.msra.mxu0 0.0
  %2729 = vmatprep.subr.mxu0 0.0
  %2730 = vmatpush1.msra.mxu0 0.0
  %2731 = vmatprep.subr.mxu0 0.0
  %2732 = vmatpush1.msra.mxu0 0.0
  %2733 = vmatprep.subr.mxu0 0.0
  %2734 = vmatpush1.msra.mxu0 0.0
  %2735 = vmatprep.subr.mxu0 0.0
  %2736 = vmatpush1.msra.mxu0 %v76
  %2737 = vmatprep.subr.mxu0 0.0
  %2738 = vmatpush1.msra.mxu0 %v75
  %2739 = vmatprep.subr.mxu0 0.0
  %2740 = vmatpush1.msra.mxu0 %v74
  %2741 = vmatprep.subr.mxu0 0.0
  %2742 = vmatpush1.msra.mxu0 %v73
  %2743 = vmatprep.subr.mxu0 0.0
  %2744 = vmatpush1.msra.mxu0 %v72
  %2745 = vmatprep.subr.mxu0 0.0
  %2746 = vmatpush1.msra.mxu0 %v71
  %2747 = vmatprep.subr.mxu0 0.0
  %2748 = vmatpush1.msra.mxu0 %v70
  %2749 = vmatprep.subr.mxu0 0.0
  %2750 = vmatpush1.msra.mxu0 %v69
  %2751 = vmatprep.subr.mxu0 0.0
  %2752 = vmatpush2.msra.mxu0 0.0
  %2753 = vmatprep.subr.mxu0 0.0
  %2754 = vmatpush2.msra.mxu0 0.0
  %2755 = vmatprep.subr.mxu0 0.0
  %2756 = vmatpush2.msra.mxu0 0.0
  %2757 = vmatprep.subr.mxu0 0.0
  %2758 = vmatpush2.msra.mxu0 0.0
  %2759 = vmatprep.subr.mxu0 0.0
  %2760 = vmatpush2.msra.mxu0 0.0
  %2761 = vmatprep.subr.mxu0 0.0
  %2762 = vmatpush2.msra.mxu0 0.0
  %2763 = vmatprep.subr.mxu0 0.0
  %2764 = vmatpush2.msra.mxu0 0.0
  %2765 = vmatprep.subr.mxu0 0.0
  %2766 = vmatpush2.msra.mxu0 0.0
  %2767 = vmatprep.subr.mxu0 0.0
  %2768 = vmatpush2.msra.mxu0 0.0
  %2769 = vmatprep.subr.mxu0 0.0
  %2770 = vmatpush2.msra.mxu0 0.0
  %2771 = vmatprep.subr.mxu0 0.0
  %2772 = vmatpush2.msra.mxu0 0.0
  %2773 = vmatprep.subr.mxu0 0.0
  %2774 = vmatpush2.msra.mxu0 0.0
  %2775 = vmatprep.subr.mxu0 0.0
  %2776 = vmatpush2.msra.mxu0 0.0
  %2777 = vmatprep.subr.mxu0 0.0
  %2778 = vmatpush2.msra.mxu0 0.0
  %2779 = vmatprep.subr.mxu0 0.0
  %2780 = vmatpush2.msra.mxu0 0.0
  %2781 = vmatprep.subr.mxu0 0.0
  %2782 = vmatpush2.msra.mxu0 0.0
  %2783 = vmatprep.mubr.f32.mxu0 0.0
  %2784 = vmatmul.mubr.f32.gmra.mxu0 %v2681
  %v2785 = vpop.f32.mrf.mxu0
  %v2786 = vadd.f32 0.0, %v2785
  %v2787 = vpop.f32.mrf.mxu0
  %2788 = vmatprep.mubr.f32.mxu0 0.0
  %2789 = vmatmul.mubr.f32.gmra.mxu0 %v2684
  %v2790 = vpop.f32.mrf.mxu0
  %v2791 = vadd.f32 0.0, %v2790
  %v2792 = vpop.f32.mrf.mxu0
  %2793 = vmatprep.mubr.f32.mxu0 0.0
  %2794 = vmatmul.mubr.f32.gmra.mxu0 %v2687
  %v2795 = vpop.f32.mrf.mxu0
  %v2796 = vadd.f32 0.0, %v2795
  %v2797 = vpop.f32.mrf.mxu0
  %2798 = vmatprep.mubr.f32.mxu0 0.0
  %2799 = vmatmul.mubr.f32.gmra.mxu0 %v2690
  %v2800 = vpop.f32.mrf.mxu0
  %v2801 = vadd.f32 0.0, %v2800
  %v2802 = vpop.f32.mrf.mxu0
  %2803 = vmatprep.mubr.f32.mxu0 0.0
  %2804 = vmatmul.mubr.f32.gmra.mxu0 %v2693
  %v2805 = vpop.f32.mrf.mxu0
  %v2806 = vadd.f32 0.0, %v2805
  %v2807 = vpop.f32.mrf.mxu0
  %2808 = vmatprep.mubr.f32.mxu0 0.0
  %2809 = vmatmul.mubr.f32.gmra.mxu0 %v2696
  %v2810 = vpop.f32.mrf.mxu0
  %v2811 = vadd.f32 0.0, %v2810
  %v2812 = vpop.f32.mrf.mxu0
  %2813 = vmatprep.mubr.f32.mxu0 0.0
  %2814 = vmatmul.mubr.f32.gmra.mxu0 %v2699
  %v2815 = vpop.f32.mrf.mxu0
  %v2816 = vadd.f32 0.0, %v2815
  %v2817 = vpop.f32.mrf.mxu0
  %2818 = vmatprep.mubr.f32.mxu0 0.0
  %2819 = vmatmul.mubr.f32.gmra.mxu0 %v2702
  %v2820 = vpop.f32.mrf.mxu0
  %v2821 = vadd.f32 0.0, %v2820
  %v2822 = vpop.f32.mrf.mxu0
  %2823 = vmatprep.mubr.f32.mxu0 0.0
  %2824 = vmatmul.mubr.f32.gmra.mxu0 %v2705
  %v2825 = vpop.f32.mrf.mxu0
  %v2826 = vadd.f32 0.0, %v2825
  %v2827 = vpop.f32.mrf.mxu0
  %2828 = vmatprep.mubr.f32.mxu0 0.0
  %2829 = vmatmul.mubr.f32.gmra.mxu0 %v2708
  %v2830 = vpop.f32.mrf.mxu0
  %v2831 = vadd.f32 0.0, %v2830
  %v2832 = vpop.f32.mrf.mxu0
  %2833 = vmatprep.mubr.f32.mxu0 0.0
  %2834 = vmatmul.mubr.f32.gmra.mxu0 %v2711
  %v2835 = vpop.f32.mrf.mxu0
  %v2836 = vadd.f32 0.0, %v2835
  %v2837 = vpop.f32.mrf.mxu0
  %2838 = vmatprep.mubr.f32.mxu0 0.0
  %2839 = vmatmul.mubr.f32.gmra.mxu0 %v2714
  %v2840 = vpop.f32.mrf.mxu0
  %v2841 = vadd.f32 0.0, %v2840
  %v2842 = vpop.f32.mrf.mxu0
  %2843 = vmatprep.mubr.f32.mxu0 0.0
  %2844 = vmatmul.mubr.f32.gmra.mxu0 %v2717
  %v2845 = vpop.f32.mrf.mxu0
  %v2846 = vadd.f32 0.0, %v2845
  %v2847 = vpop.f32.mrf.mxu0
  %2848 = vdwg.mxu0
  %v2849 = vmax.f32 %v2786, 0.0
  %v2850 = vmax.f32 %v2791, 0.0
  %v2851 = vmax.f32 %v2796, 0.0
  %v2852 = vmax.f32 %v2801, 0.0
  %v2853 = vmax.f32 %v2806, 0.0
  %v2854 = vmax.f32 %v2811, 0.0
  %v2855 = vmax.f32 %v2816, 0.0
  %v2856 = vmax.f32 %v2821, 0.0
  %v2857 = vmax.f32 %v2826, 0.0
  %v2858 = vmax.f32 %v2831, 0.0
  %v2859 = vmax.f32 %v2836, 0.0
  %v2860 = vmax.f32 %v2841, 0.0
  %v2861 = vmax.f32 %v2846, 0.0
  %v2863 = vsel %vm2679, %v2849, 0
  %v2866 = vsel %vm2679, %v2850, 0
  %v2869 = vsel %vm2679, %v2851, 0
  %v2872 = vsel %vm2679, %v2852, 0
  %v2875 = vsel %vm2679, %v2853, 0
  %v2878 = vsel %vm2679, %v2854, 0
  %v2881 = vsel %vm2679, %v2855, 0
  %v2884 = vsel %vm2679, %v2856, 0
  %v2887 = vsel %vm2679, %v2857, 0
  %v2890 = vsel %vm2679, %v2858, 0
  %v2893 = vsel %vm2679, %v2859, 0
  %v2896 = vsel %vm2679, %v2860, 0
  %v2899 = vsel %vm2679, %v2861, 0
  %2901 = vmatprep.subr.mxu0 0.0
  %2902 = vmatpush1.msra.mxu0 0.0
  %2903 = vmatprep.subr.mxu0 0.0
  %2904 = vmatpush1.msra.mxu0 0.0
  %2905 = vmatprep.subr.mxu0 0.0
  %2906 = vmatpush1.msra.mxu0 0.0
  %2907 = vmatprep.subr.mxu0 0.0
  %2908 = vmatpush1.msra.mxu0 0.0
  %2909 = vmatprep.subr.mxu0 0.0
  %2910 = vmatpush1.msra.mxu0 0.0
  %2911 = vmatprep.subr.mxu0 0.0
  %2912 = vmatpush1.msra.mxu0 0.0
  %2913 = vmatprep.subr.mxu0 0.0
  %2914 = vmatpush1.msra.mxu0 0.0
  %2915 = vmatprep.subr.mxu0 0.0
  %2916 = vmatpush1.msra.mxu0 0.0
  %2917 = vmatprep.subr.mxu0 0.0
  %2918 = vmatpush1.msra.mxu0 %v84
  %2919 = vmatprep.subr.mxu0 0.0
  %2920 = vmatpush1.msra.mxu0 %v83
  %2921 = vmatprep.subr.mxu0 0.0
  %2922 = vmatpush1.msra.mxu0 %v82
  %2923 = vmatprep.subr.mxu0 0.0
  %2924 = vmatpush1.msra.mxu0 %v81
  %2925 = vmatprep.subr.mxu0 0.0
  %2926 = vmatpush1.msra.mxu0 %v80
  %2927 = vmatprep.subr.mxu0 0.0
  %2928 = vmatpush1.msra.mxu0 %v79
  %2929 = vmatprep.subr.mxu0 0.0
  %2930 = vmatpush1.msra.mxu0 %v78
  %2931 = vmatprep.subr.mxu0 0.0
  %2932 = vmatpush1.msra.mxu0 %v77
  %2933 = vmatprep.subr.mxu0 0.0
  %2934 = vmatpush2.msra.mxu0 0.0
  %2935 = vmatprep.subr.mxu0 0.0
  %2936 = vmatpush2.msra.mxu0 0.0
  %2937 = vmatprep.subr.mxu0 0.0
  %2938 = vmatpush2.msra.mxu0 0.0
  %2939 = vmatprep.subr.mxu0 0.0
  %2940 = vmatpush2.msra.mxu0 0.0
  %2941 = vmatprep.subr.mxu0 0.0
  %2942 = vmatpush2.msra.mxu0 0.0
  %2943 = vmatprep.subr.mxu0 0.0
  %2944 = vmatpush2.msra.mxu0 0.0
  %2945 = vmatprep.subr.mxu0 0.0
  %2946 = vmatpush2.msra.mxu0 0.0
  %2947 = vmatprep.subr.mxu0 0.0
  %2948 = vmatpush2.msra.mxu0 0.0
  %2949 = vmatprep.subr.mxu0 0.0
  %2950 = vmatpush2.msra.mxu0 0.0
  %2951 = vmatprep.subr.mxu0 0.0
  %2952 = vmatpush2.msra.mxu0 0.0
  %2953 = vmatprep.subr.mxu0 0.0
  %2954 = vmatpush2.msra.mxu0 0.0
  %2955 = vmatprep.subr.mxu0 0.0
  %2956 = vmatpush2.msra.mxu0 0.0
  %2957 = vmatprep.subr.mxu0 0.0
  %2958 = vmatpush2.msra.mxu0 0.0
  %2959 = vmatprep.subr.mxu0 0.0
  %2960 = vmatpush2.msra.mxu0 0.0
  %2961 = vmatprep.subr.mxu0 0.0
  %2962 = vmatpush2.msra.mxu0 0.0
  %2963 = vmatprep.subr.mxu0 0.0
  %2964 = vmatpush2.msra.mxu0 0.0
  %2965 = vmatprep.mubr.f32.mxu0 0.0
  %2966 = vmatmul.mubr.f32.gmra.mxu0 %v2863
  %v2967 = vpop.f32.mrf.mxu0
  %v2968 = vadd.f32 %v29, %v2967
  %v2969 = vpop.f32.mrf.mxu0
  %2970 = vmatprep.mubr.f32.mxu0 0.0
  %2971 = vmatmul.mubr.f32.gmra.mxu0 %v2866
  %v2972 = vpop.f32.mrf.mxu0
  %v2973 = vadd.f32 %v30, %v2972
  %v2974 = vpop.f32.mrf.mxu0
  %2975 = vmatprep.mubr.f32.mxu0 0.0
  %2976 = vmatmul.mubr.f32.gmra.mxu0 %v2869
  %v2977 = vpop.f32.mrf.mxu0
  %v2978 = vadd.f32 %v31, %v2977
  %v2979 = vpop.f32.mrf.mxu0
  %2980 = vmatprep.mubr.f32.mxu0 0.0
  %2981 = vmatmul.mubr.f32.gmra.mxu0 %v2872
  %v2982 = vpop.f32.mrf.mxu0
  %v2983 = vadd.f32 %v32, %v2982
  %v2984 = vpop.f32.mrf.mxu0
  %2985 = vmatprep.mubr.f32.mxu0 0.0
  %2986 = vmatmul.mubr.f32.gmra.mxu0 %v2875
  %v2987 = vpop.f32.mrf.mxu0
  %v2988 = vadd.f32 %v33, %v2987
  %v2989 = vpop.f32.mrf.mxu0
  %2990 = vmatprep.mubr.f32.mxu0 0.0
  %2991 = vmatmul.mubr.f32.gmra.mxu0 %v2878
  %v2992 = vpop.f32.mrf.mxu0
  %v2993 = vadd.f32 %v34, %v2992
  %v2994 = vpop.f32.mrf.mxu0
  %2995 = vmatprep.mubr.f32.mxu0 0.0
  %2996 = vmatmul.mubr.f32.gmra.mxu0 %v2881
  %v2997 = vpop.f32.mrf.mxu0
  %v2998 = vadd.f32 %v35, %v2997
  %v2999 = vpop.f32.mrf.mxu0
  %3000 = vmatprep.mubr.f32.mxu0 0.0
  %3001 = vmatmul.mubr.f32.gmra.mxu0 %v2884
  %v3002 = vpop.f32.mrf.mxu0
  %v3003 = vadd.f32 %v36, %v3002
  %v3004 = vpop.f32.mrf.mxu0
  %3005 = vmatprep.mubr.f32.mxu0 0.0
  %3006 = vmatmul.mubr.f32.gmra.mxu0 %v2887
  %v3007 = vpop.f32.mrf.mxu0
  %v3008 = vadd.f32 %v37, %v3007
  %v3009 = vpop.f32.mrf.mxu0
  %3010 = vmatprep.mubr.f32.mxu0 0.0
  %3011 = vmatmul.mubr.f32.gmra.mxu0 %v2890
  %v3012 = vpop.f32.mrf.mxu0
  %v3013 = vadd.f32 %v38, %v3012
  %v3014 = vpop.f32.mrf.mxu0
  %3015 = vmatprep.mubr.f32.mxu0 0.0
  %3016 = vmatmul.mubr.f32.gmra.mxu0 %v2893
  %v3017 = vpop.f32.mrf.mxu0
  %v3018 = vadd.f32 %v39, %v3017
  %v3019 = vpop.f32.mrf.mxu0
  %3020 = vmatprep.mubr.f32.mxu0 0.0
  %3021 = vmatmul.mubr.f32.gmra.mxu0 %v2896
  %v3022 = vpop.f32.mrf.mxu0
  %v3023 = vadd.f32 %v40, %v3022
  %v3024 = vpop.f32.mrf.mxu0
  %3025 = vmatprep.mubr.f32.mxu0 0.0
  %3026 = vmatmul.mubr.f32.gmra.mxu0 %v2899
  %v3027 = vpop.f32.mrf.mxu0
  %v3028 = vadd.f32 %v41, %v3027
  %v3029 = vpop.f32.mrf.mxu0
  %3030 = vdwg.mxu0
  %v3032 = vsel %vm669, %v85, 0
  %v3035 = vsel %vm669, %v86, 0
  %v3038 = vsel %vm669, %v87, 0
  %v3041 = vsel %vm669, %v88, 0
  %v3044 = vsel %vm669, %v89, 0
  %v3047 = vsel %vm669, %v90, 0
  %v3050 = vsel %vm669, %v91, 0
  %v3053 = vsel %vm669, %v92, 0
  %v3056 = vsel %vm669, %v93, 0
  %v3059 = vsel %vm669, %v94, 0
  %v3062 = vsel %vm669, %v95, 0
  %v3065 = vsel %vm669, %v96, 0
  %v3068 = vsel %vm669, %v97, 0
  %v3071 = vsel %vm904, %v3028, 0
  %3073 = vmatprep.subr.mxu0 0.0
  %3074 = vmatpush1.msra.mxu0 0.0
  %3075 = vmatprep.subr.mxu0 0.0
  %3076 = vmatpush1.msra.mxu0 0.0
  %3077 = vmatprep.subr.mxu0 0.0
  %3078 = vmatpush1.msra.mxu0 0.0
  %3079 = vmatprep.subr.mxu0 0.0
  %3080 = vmatpush1.msra.mxu0 %v3071
  %3081 = vmatprep.subr.mxu0 0.0
  %3082 = vmatpush1.msra.mxu0 %v3023
  %3083 = vmatprep.subr.mxu0 0.0
  %3084 = vmatpush1.msra.mxu0 %v3018
  %3085 = vmatprep.subr.mxu0 0.0
  %3086 = vmatpush1.msra.mxu0 %v3013
  %3087 = vmatprep.subr.mxu0 0.0
  %3088 = vmatpush1.msra.mxu0 %v3008
  %3089 = vmatprep.subr.mxu0 0.0
  %3090 = vmatpush1.msra.mxu0 %v3003
  %3091 = vmatprep.subr.mxu0 0.0
  %3092 = vmatpush1.msra.mxu0 %v2998
  %3093 = vmatprep.subr.mxu0 0.0
  %3094 = vmatpush1.msra.mxu0 %v2993
  %3095 = vmatprep.subr.mxu0 0.0
  %3096 = vmatpush1.msra.mxu0 %v2988
  %3097 = vmatprep.subr.mxu0 0.0
  %3098 = vmatpush1.msra.mxu0 %v2983
  %3099 = vmatprep.subr.mxu0 0.0
  %3100 = vmatpush1.msra.mxu0 %v2978
  %3101 = vmatprep.subr.mxu0 0.0
  %3102 = vmatpush1.msra.mxu0 %v2973
  %3103 = vmatprep.subr.mxu0 0.0
  %3104 = vmatpush1.msra.mxu0 %v2968
  %3105 = vmatprep.subr.mxu0 0.0
  %3106 = vmatpush2.msra.mxu0 0.0
  %3107 = vmatprep.subr.mxu0 0.0
  %3108 = vmatpush2.msra.mxu0 0.0
  %3109 = vmatprep.subr.mxu0 0.0
  %3110 = vmatpush2.msra.mxu0 0.0
  %3111 = vmatprep.subr.mxu0 0.0
  %3112 = vmatpush2.msra.mxu0 0.0
  %3113 = vmatprep.subr.mxu0 0.0
  %3114 = vmatpush2.msra.mxu0 0.0
  %3115 = vmatprep.subr.mxu0 0.0
  %3116 = vmatpush2.msra.mxu0 0.0
  %3117 = vmatprep.subr.mxu0 0.0
  %3118 = vmatpush2.msra.mxu0 0.0
  %3119 = vmatprep.subr.mxu0 0.0
  %3120 = vmatpush2.msra.mxu0 0.0
  %3121 = vmatprep.subr.mxu0 0.0
  %3122 = vmatpush2.msra.mxu0 0.0
  %3123 = vmatprep.subr.mxu0 0.0
  %3124 = vmatpush2.msra.mxu0 0.0
  %3125 = vmatprep.subr.mxu0 0.0
  %3126 = vmatpush2.msra.mxu0 0.0
  %3127 = vmatprep.subr.mxu0 0.0
  %3128 = vmatpush2.msra.mxu0 0.0
  %3129 = vmatprep.subr.mxu0 0.0
  %3130 = vmatpush2.msra.mxu0 0.0
  %3131 = vmatprep.subr.mxu0 0.0
  %3132 = vmatpush2.msra.mxu0 0.0
  %3133 = vmatprep.subr.mxu0 0.0
  %3134 = vmatpush2.msra.mxu0 0.0
  %3135 = vmatprep.subr.mxu0 0.0
  %3136 = vmatpush2.msra.mxu0 0.0
  %3137 = vmatprep.mubr.f32.mxu0 0.0
  %3138 = vmatmul.mubr.f32.gmra.mxu0 %v3032
  %v3139 = vpop.f32.mrf.mxu0
  %v3140 = vadd.f32 0.0, %v3139
  %v3141 = vpop.f32.mrf.mxu0
  %3142 = vmatprep.mubr.f32.mxu0 0.0
  %3143 = vmatmul.mubr.f32.gmra.mxu0 %v3035
  %v3144 = vpop.f32.mrf.mxu0
  %v3145 = vadd.f32 0.0, %v3144
  %v3146 = vpop.f32.mrf.mxu0
  %3147 = vmatprep.mubr.f32.mxu0 0.0
  %3148 = vmatmul.mubr.f32.gmra.mxu0 %v3038
  %v3149 = vpop.f32.mrf.mxu0
  %v3150 = vadd.f32 0.0, %v3149
  %v3151 = vpop.f32.mrf.mxu0
  %3152 = vmatprep.mubr.f32.mxu0 0.0
  %3153 = vmatmul.mubr.f32.gmra.mxu0 %v3041
  %v3154 = vpop.f32.mrf.mxu0
  %v3155 = vadd.f32 0.0, %v3154
  %v3156 = vpop.f32.mrf.mxu0
  %3157 = vmatprep.mubr.f32.mxu0 0.0
  %3158 = vmatmul.mubr.f32.gmra.mxu0 %v3044
  %v3159 = vpop.f32.mrf.mxu0
  %v3160 = vadd.f32 0.0, %v3159
  %v3161 = vpop.f32.mrf.mxu0
  %3162 = vmatprep.mubr.f32.mxu0 0.0
  %3163 = vmatmul.mubr.f32.gmra.mxu0 %v3047
  %v3164 = vpop.f32.mrf.mxu0
  %v3165 = vadd.f32 0.0, %v3164
  %v3166 = vpop.f32.mrf.mxu0
  %3167 = vmatprep.mubr.f32.mxu0 0.0
  %3168 = vmatmul.mubr.f32.gmra.mxu0 %v3050
  %v3169 = vpop.f32.mrf.mxu0
  %v3170 = vadd.f32 0.0, %v3169
  %v3171 = vpop.f32.mrf.mxu0
  %3172 = vmatprep.mubr.f32.mxu0 0.0
  %3173 = vmatmul.mubr.f32.gmra.mxu0 %v3053
  %v3174 = vpop.f32.mrf.mxu0
  %v3175 = vadd.f32 0.0, %v3174
  %v3176 = vpop.f32.mrf.mxu0
  %3177 = vmatprep.mubr.f32.mxu0 0.0
  %3178 = vmatmul.mubr.f32.gmra.mxu0 %v3056
  %v3179 = vpop.f32.mrf.mxu0
  %v3180 = vadd.f32 0.0, %v3179
  %v3181 = vpop.f32.mrf.mxu0
  %3182 = vmatprep.mubr.f32.mxu0 0.0
  %3183 = vmatmul.mubr.f32.gmra.mxu0 %v3059
  %v3184 = vpop.f32.mrf.mxu0
  %v3185 = vadd.f32 0.0, %v3184
  %v3186 = vpop.f32.mrf.mxu0
  %3187 = vmatprep.mubr.f32.mxu0 0.0
  %3188 = vmatmul.mubr.f32.gmra.mxu0 %v3062
  %v3189 = vpop.f32.mrf.mxu0
  %v3190 = vadd.f32 0.0, %v3189
  %v3191 = vpop.f32.mrf.mxu0
  %3192 = vmatprep.mubr.f32.mxu0 0.0
  %3193 = vmatmul.mubr.f32.gmra.mxu0 %v3065
  %v3194 = vpop.f32.mrf.mxu0
  %v3195 = vadd.f32 0.0, %v3194
  %v3196 = vpop.f32.mrf.mxu0
  %3197 = vmatprep.mubr.f32.mxu0 0.0
  %3198 = vmatmul.mubr.f32.gmra.mxu0 %v3068
  %v3199 = vpop.f32.mrf.mxu0
  %v3200 = vadd.f32 0.0, %v3199
  %v3201 = vpop.f32.mrf.mxu0
  %3202 = vdwg.mxu0
  %v3203 = vsub.f32 %v2968, %v3140
  %v3204 = vsub.f32 %v2973, %v3145
  %v3205 = vsub.f32 %v2978, %v3150
  %v3206 = vsub.f32 %v2983, %v3155
  %v3207 = vsub.f32 %v2988, %v3160
  %v3208 = vsub.f32 %v2993, %v3165
  %v3209 = vsub.f32 %v2998, %v3170
  %v3210 = vsub.f32 %v3003, %v3175
  %v3211 = vsub.f32 %v3008, %v3180
  %v3212 = vsub.f32 %v3013, %v3185
  %v3213 = vsub.f32 %v3018, %v3190
  %v3214 = vsub.f32 %v3023, %v3195
  %v3215 = vsub.f32 %v3028, %v3200
  %v3216 = vmul.f32 %v3203, %v3203
  %v3217 = vmul.f32 %v3204, %v3204
  %v3218 = vmul.f32 %v3205, %v3205
  %v3219 = vmul.f32 %v3206, %v3206
  %v3220 = vmul.f32 %v3207, %v3207
  %v3221 = vmul.f32 %v3208, %v3208
  %v3222 = vmul.f32 %v3209, %v3209
  %v3223 = vmul.f32 %v3210, %v3210
  %v3224 = vmul.f32 %v3211, %v3211
  %v3225 = vmul.f32 %v3212, %v3212
  %v3226 = vmul.f32 %v3213, %v3213
  %v3227 = vmul.f32 %v3214, %v3214
  %v3228 = vmul.f32 %v3215, %v3215
  %v3230 = vsel %vm904, %v3228, 0
  %3232 = vmatprep.subr.mxu0 0.0
  %3233 = vmatpush1.msra.mxu0 0.0
  %3234 = vmatprep.subr.mxu0 0.0
  %3235 = vmatpush1.msra.mxu0 0.0
  %3236 = vmatprep.subr.mxu0 0.0
  %3237 = vmatpush1.msra.mxu0 0.0
  %3238 = vmatprep.subr.mxu0 0.0
  %3239 = vmatpush1.msra.mxu0 %v3230
  %3240 = vmatprep.subr.mxu0 0.0
  %3241 = vmatpush1.msra.mxu0 %v3227
  %3242 = vmatprep.subr.mxu0 0.0
  %3243 = vmatpush1.msra.mxu0 %v3226
  %3244 = vmatprep.subr.mxu0 0.0
  %3245 = vmatpush1.msra.mxu0 %v3225
  %3246 = vmatprep.subr.mxu0 0.0
  %3247 = vmatpush1.msra.mxu0 %v3224
  %3248 = vmatprep.subr.mxu0 0.0
  %3249 = vmatpush1.msra.mxu0 %v3223
  %3250 = vmatprep.subr.mxu0 0.0
  %3251 = vmatpush1.msra.mxu0 %v3222
  %3252 = vmatprep.subr.mxu0 0.0
  %3253 = vmatpush1.msra.mxu0 %v3221
  %3254 = vmatprep.subr.mxu0 0.0
  %3255 = vmatpush1.msra.mxu0 %v3220
  %3256 = vmatprep.subr.mxu0 0.0
  %3257 = vmatpush1.msra.mxu0 %v3219
  %3258 = vmatprep.subr.mxu0 0.0
  %3259 = vmatpush1.msra.mxu0 %v3218
  %3260 = vmatprep.subr.mxu0 0.0
  %3261 = vmatpush1.msra.mxu0 %v3217
  %3262 = vmatprep.subr.mxu0 0.0
  %3263 = vmatpush1.msra.mxu0 %v3216
  %3264 = vmatprep.subr.mxu0 0.0
  %3265 = vmatpush2.msra.mxu0 0.0
  %3266 = vmatprep.subr.mxu0 0.0
  %3267 = vmatpush2.msra.mxu0 0.0
  %3268 = vmatprep.subr.mxu0 0.0
  %3269 = vmatpush2.msra.mxu0 0.0
  %3270 = vmatprep.subr.mxu0 0.0
  %3271 = vmatpush2.msra.mxu0 0.0
  %3272 = vmatprep.subr.mxu0 0.0
  %3273 = vmatpush2.msra.mxu0 0.0
  %3274 = vmatprep.subr.mxu0 0.0
  %3275 = vmatpush2.msra.mxu0 0.0
  %3276 = vmatprep.subr.mxu0 0.0
  %3277 = vmatpush2.msra.mxu0 0.0
  %3278 = vmatprep.subr.mxu0 0.0
  %3279 = vmatpush2.msra.mxu0 0.0
  %3280 = vmatprep.subr.mxu0 0.0
  %3281 = vmatpush2.msra.mxu0 0.0
  %3282 = vmatprep.subr.mxu0 0.0
  %3283 = vmatpush2.msra.mxu0 0.0
  %3284 = vmatprep.subr.mxu0 0.0
  %3285 = vmatpush2.msra.mxu0 0.0
  %3286 = vmatprep.subr.mxu0 0.0
  %3287 = vmatpush2.msra.mxu0 0.0
  %3288 = vmatprep.subr.mxu0 0.0
  %3289 = vmatpush2.msra.mxu0 0.0
  %3290 = vmatprep.subr.mxu0 0.0
  %3291 = vmatpush2.msra.mxu0 0.0
  %3292 = vmatprep.subr.mxu0 0.0
  %3293 = vmatpush2.msra.mxu0 0.0
  %3294 = vmatprep.subr.mxu0 0.0
  %3295 = vmatpush2.msra.mxu0 0.0
  %3296 = vmatprep.mubr.f32.mxu0 0.0
  %3297 = vmatmul.mubr.f32.gmra.mxu0 %v3032
  %v3298 = vpop.f32.mrf.mxu0
  %v3299 = vadd.f32 1e-05, %v3298
  %v3300 = vpop.f32.mrf.mxu0
  %3301 = vmatprep.mubr.f32.mxu0 0.0
  %3302 = vmatmul.mubr.f32.gmra.mxu0 %v3035
  %v3303 = vpop.f32.mrf.mxu0
  %v3304 = vadd.f32 1e-05, %v3303
  %v3305 = vpop.f32.mrf.mxu0
  %3306 = vmatprep.mubr.f32.mxu0 0.0
  %3307 = vmatmul.mubr.f32.gmra.mxu0 %v3038
  %v3308 = vpop.f32.mrf.mxu0
  %v3309 = vadd.f32 1e-05, %v3308
  %v3310 = vpop.f32.mrf.mxu0
  %3311 = vmatprep.mubr.f32.mxu0 0.0
  %3312 = vmatmul.mubr.f32.gmra.mxu0 %v3041
  %v3313 = vpop.f32.mrf.mxu0
  %v3314 = vadd.f32 1e-05, %v3313
  %v3315 = vpop.f32.mrf.mxu0
  %3316 = vmatprep.mubr.f32.mxu0 0.0
  %3317 = vmatmul.mubr.f32.gmra.mxu0 %v3044
  %v3318 = vpop.f32.mrf.mxu0
  %v3319 = vadd.f32 1e-05, %v3318
  %v3320 = vpop.f32.mrf.mxu0
  %3321 = vmatprep.mubr.f32.mxu0 0.0
  %3322 = vmatmul.mubr.f32.gmra.mxu0 %v3047
  %v3323 = vpop.f32.mrf.mxu0
  %v3324 = vadd.f32 1e-05, %v3323
  %v3325 = vpop.f32.mrf.mxu0
  %3326 = vmatprep.mubr.f32.mxu0 0.0
  %3327 = vmatmul.mubr.f32.gmra.mxu0 %v3050
  %v3328 = vpop.f32.mrf.mxu0
  %v3329 = vadd.f32 1e-05, %v3328
  %v3330 = vpop.f32.mrf.mxu0
  %3331 = vmatprep.mubr.f32.mxu0 0.0
  %3332 = vmatmul.mubr.f32.gmra.mxu0 %v3053
  %v3333 = vpop.f32.mrf.mxu0
  %v3334 = vadd.f32 1e-05, %v3333
  %v3335 = vpop.f32.mrf.mxu0
  %3336 = vmatprep.mubr.f32.mxu0 0.0
  %3337 = vmatmul.mubr.f32.gmra.mxu0 %v3056
  %v3338 = vpop.f32.mrf.mxu0
  %v3339 = vadd.f32 1e-05, %v3338
  %v3340 = vpop.f32.mrf.mxu0
  %3341 = vmatprep.mubr.f32.mxu0 0.0
  %3342 = vmatmul.mubr.f32.gmra.mxu0 %v3059
  %v3343 = vpop.f32.mrf.mxu0
  %v3344 = vadd.f32 1e-05, %v3343
  %v3345 = vpop.f32.mrf.mxu0
  %3346 = vmatprep.mubr.f32.mxu0 0.0
  %3347 = vmatmul.mubr.f32.gmra.mxu0 %v3062
  %v3348 = vpop.f32.mrf.mxu0
  %v3349 = vadd.f32 1e-05, %v3348
  %v3350 = vpop.f32.mrf.mxu0
  %3351 = vmatprep.mubr.f32.mxu0 0.0
  %3352 = vmatmul.mubr.f32.gmra.mxu0 %v3065
  %v3353 = vpop.f32.mrf.mxu0
  %v3354 = vadd.f32 1e-05, %v3353
  %v3355 = vpop.f32.mrf.mxu0
  %3356 = vmatprep.mubr.f32.mxu0 0.0
  %3357 = vmatmul.mubr.f32.gmra.mxu0 %v3068
  %v3358 = vpop.f32.mrf.mxu0
  %v3359 = vadd.f32 1e-05, %v3358
  %v3360 = vpop.f32.mrf.mxu0
  %3361 = vdwg.mxu0
  %v3362 = vrsqrt.pop %v3299
  %v3363 = vrsqrt.pop %v3304
  %v3364 = vrsqrt.pop %v3309
  %v3365 = vrsqrt.pop %v3314
  %v3366 = vrsqrt.pop %v3319
  %v3367 = vrsqrt.pop %v3324
  %v3368 = vrsqrt.pop %v3329
  %v3369 = vrsqrt.pop %v3334
  %v3370 = vrsqrt.pop %v3339
  %v3371 = vrsqrt.pop %v3344
  %v3372 = vrsqrt.pop %v3349
  %v3373 = vrsqrt.pop %v3354
  %v3374 = vrsqrt.pop %v3359
  %v3375 = vmul.f32 %v3203, %v3362
  %v3376 = vmul.f32 %v3204, %v3363
  %v3377 = vmul.f32 %v3205, %v3364
  %v3378 = vmul.f32 %v3206, %v3365
  %v3379 = vmul.f32 %v3207, %v3366
  %v3380 = vmul.f32 %v3208, %v3367
  %v3381 = vmul.f32 %v3209, %v3368
  %v3382 = vmul.f32 %v3210, %v3369
  %v3383 = vmul.f32 %v3211, %v3370
  %v3384 = vmul.f32 %v3212, %v3371
  %v3385 = vmul.f32 %v3213, %v3372
  %v3386 = vmul.f32 %v3214, %v3373
  %v3387 = vmul.f32 %v3215, %v3374
  %3389 = vset.pattern.permute.xlu0 0
  %3390 = vperm.xlu0 %3389, %v98
  %v3391 = vpop.permute.xlu0 %3390
  %3394 = vset.pattern.permute.xlu0 0
  %3395 = vperm.xlu0 %3394, %v99
  %v3396 = vpop.permute.xlu0 %3395
  %3399 = vset.pattern.permute.xlu0 0
  %3400 = vperm.xlu0 %3399, %v100
  %v3401 = vpop.permute.xlu0 %3400
  %3404 = vset.pattern.permute.xlu0 0
  %3405 = vperm.xlu0 %3404, %v101
  %v3406 = vpop.permute.xlu0 %3405
  %3409 = vset.pattern.permute.xlu0 0
  %3410 = vperm.xlu0 %3409, %v102
  %v3411 = vpop.permute.xlu0 %3410
  %3414 = vset.pattern.permute.xlu0 0
  %3415 = vperm.xlu0 %3414, %v103
  %v3416 = vpop.permute.xlu0 %3415
  %3419 = vset.pattern.permute.xlu0 0
  %3420 = vperm.xlu0 %3419, %v104
  %v3421 = vpop.permute.xlu0 %3420
  %3424 = vset.pattern.permute.xlu0 0
  %3425 = vperm.xlu0 %3424, %v105
  %v3426 = vpop.permute.xlu0 %3425
  %3429 = vset.pattern.permute.xlu0 0
  %3430 = vperm.xlu0 %3429, %v106
  %v3431 = vpop.permute.xlu0 %3430
  %3434 = vset.pattern.permute.xlu0 0
  %3435 = vperm.xlu0 %3434, %v107
  %v3436 = vpop.permute.xlu0 %3435
  %3439 = vset.pattern.permute.xlu0 0
  %3440 = vperm.xlu0 %3439, %v108
  %v3441 = vpop.permute.xlu0 %3440
  %3444 = vset.pattern.permute.xlu0 0
  %3445 = vperm.xlu0 %3444, %v109
  %v3446 = vpop.permute.xlu0 %3445
  %3449 = vset.pattern.permute.xlu0 0
  %3450 = vperm.xlu0 %3449, %v110
  %v3451 = vpop.permute.xlu0 %3450
  %v3453 = vmul.f32 %v3375, %v3391
  %v3454 = vmul.f32 %v3376, %v3396
  %v3455 = vmul.f32 %v3377, %v3401
  %v3456 = vmul.f32 %v3378, %v3406
  %v3457 = vmul.f32 %v3379, %v3411
  %v3458 = vmul.f32 %v3380, %v3416
  %v3459 = vmul.f32 %v3381, %v3421
  %v3460 = vmul.f32 %v3382, %v3426
  %v3461 = vmul.f32 %v3383, %v3431
  %v3462 = vmul.f32 %v3384, %v3436
  %v3463 = vmul.f32 %v3385, %v3441
  %v3464 = vmul.f32 %v3386, %v3446
  %v3465 = vmul.f32 %v3387, %v3451
  %3467 = vset.pattern.permute.xlu0 0
  %3468 = vperm.xlu0 %3467, %v111
  %v3469 = vpop.permute.xlu0 %3468
  %3472 = vset.pattern.permute.xlu0 0
  %3473 = vperm.xlu0 %3472, %v112
  %v3474 = vpop.permute.xlu0 %3473
  %3477 = vset.pattern.permute.xlu0 0
  %3478 = vperm.xlu0 %3477, %v113
  %v3479 = vpop.permute.xlu0 %3478
  %3482 = vset.pattern.permute.xlu0 0
  %3483 = vperm.xlu0 %3482, %v114
  %v3484 = vpop.permute.xlu0 %3483
  %3487 = vset.pattern.permute.xlu0 0
  %3488 = vperm.xlu0 %3487, %v115
  %v3489 = vpop.permute.xlu0 %3488
  %3492 = vset.pattern.permute.xlu0 0
  %3493 = vperm.xlu0 %3492, %v116
  %v3494 = vpop.permute.xlu0 %3493
  %3497 = vset.pattern.permute.xlu0 0
  %3498 = vperm.xlu0 %3497, %v117
  %v3499 = vpop.permute.xlu0 %3498
  %3502 = vset.pattern.permute.xlu0 0
  %3503 = vperm.xlu0 %3502, %v118
  %v3504 = vpop.permute.xlu0 %3503
  %3507 = vset.pattern.permute.xlu0 0
  %3508 = vperm.xlu0 %3507, %v119
  %v3509 = vpop.permute.xlu0 %3508
  %3512 = vset.pattern.permute.xlu0 0
  %3513 = vperm.xlu0 %3512, %v120
  %v3514 = vpop.permute.xlu0 %3513
  %3517 = vset.pattern.permute.xlu0 0
  %3518 = vperm.xlu0 %3517, %v121
  %v3519 = vpop.permute.xlu0 %3518
  %3522 = vset.pattern.permute.xlu0 0
  %3523 = vperm.xlu0 %3522, %v122
  %v3524 = vpop.permute.xlu0 %3523
  %3527 = vset.pattern.permute.xlu0 0
  %3528 = vperm.xlu0 %3527, %v123
  %v3529 = vpop.permute.xlu0 %3528
  %v3531 = vadd.f32 %v3453, %v3469
  %v3532 = vadd.f32 %v3454, %v3474
  %v3533 = vadd.f32 %v3455, %v3479
  %v3534 = vadd.f32 %v3456, %v3484
  %v3535 = vadd.f32 %v3457, %v3489
  %v3536 = vadd.f32 %v3458, %v3494
  %v3537 = vadd.f32 %v3459, %v3499
  %v3538 = vadd.f32 %v3460, %v3504
  %v3539 = vadd.f32 %v3461, %v3509
  %v3540 = vadd.f32 %v3462, %v3514
  %v3541 = vadd.f32 %v3463, %v3519
  %v3542 = vadd.f32 %v3464, %v3524
  %v3543 = vadd.f32 %v3465, %v3529
  %3544 = vst.msk [vmem:[%s8] sm:$0xff] %vm124, %v3531
  %3545 = vst.msk [vmem:[%s8 + $0x8] sm:$0xff] %vm124, %v3532
  %3546 = vst.msk [vmem:[%s8 + $0x10] sm:$0xff] %vm124, %v3533
  %3547 = vst.msk [vmem:[%s8 + $0x18] sm:$0xff] %vm124, %v3534
  %3548 = vst.msk [vmem:[%s8 + $0x20] sm:$0xff] %vm124, %v3535
  %3549 = vst.msk [vmem:[%s8 + $0x28] sm:$0xff] %vm124, %v3536
  %3550 = vst.msk [vmem:[%s8 + $0x30] sm:$0xff] %vm124, %v3537
  %3551 = vst.msk [vmem:[%s8 + $0x38] sm:$0xff] %vm124, %v3538
  %3552 = vst.msk [vmem:[%s8 + $0x40] sm:$0xff] %vm124, %v3539
  %3553 = vst.msk [vmem:[%s8 + $0x48] sm:$0xff] %vm124, %v3540
  %3554 = vst.msk [vmem:[%s8 + $0x50] sm:$0xff] %vm124, %v3541
  %3555 = vst.msk [vmem:[%s8 + $0x58] sm:$0xff] %vm124, %v3542
  %vm3556 = vcmask 295936
  %3557 = vst.msk [vmem:[%s8 + $0x60] sm:$0x3] %vm3556, %v3543
  // Predicated region
  $region34: #{mhdpa_relation_network_forward.2} parent=0 // pred_check
    _
  $region35: #{mhdpa_relation_network_forward.2} parent=0 // pred_check_branch
    %3559 = sbr.rel (0) target = $region37
  $region36: #{mhdpa_relation_network_forward.2} parent=0 // pred_region
    _
  $region37: #{mhdpa_relation_network_forward.2} parent=0 // pred_fallthru
    _
  // Predicated region
  $region38: #{mhdpa_relation_network_forward.2} parent=0 // pred_check
    _
  $region39: #{mhdpa_relation_network_forward.2} parent=0 // pred_check_branch
    %3561 = sbr.rel (0) target = $region41
  $region40: #{mhdpa_relation_network_forward.2} parent=0 // pred_region
    _
  $region41: #{mhdpa_relation_network_forward.2} parent=0 // pred_fallthru
    _

</llo_original>
